<compile_context>
chip_gen: v5e
topology: v5e:2x2
jax: 0.10.0
libtpu: 0.0.40
codegen_flags: <defaults>
</compile_context>

<pallas_src>
import functools

import jax
import jax.numpy as jnp
from jax.experimental import pallas as pl
from jax.experimental.pallas import tpu as pltpu


# ------------------------------ fused kernel ------------------------------- #
def _fused_forward_kernel(x_ref, a_ref, w1_ref, b1_ref, w2_ref, b2_ref,
                          pn_ref, wt1_ref, bt1_ref, wt2_ref, bt2_ref,
                          pw_ref, pb_ref, o_ref, s1_ref, s2_ref,
                          *, t_len, d1, d2):
    """One grid step == `block_batch` batch elements, batch-in-columns layout.

    Every layer is one 2-D MXU matmul against a block-diagonal (kron) weight
    prepared on the host; the whole forward is ~9 matmuls + VPU bias/ReLU.
    """
    bf16 = jnp.bfloat16
    f32 = jnp.float32
    c_a = w1_ref.shape[1]       # Bb * gcn_out   (TCN layer-1 tap width)
    c_b = wt1_ref.shape[1]      # Bb * tcn_ch[0] (TCN layer-2 tap width)

    # ---- STGCNBlock: GCNConv = lin -> aggregate(kron(I_T, A_hat)) -> bias ->
    # ReLU, twice.  Aggregation is one (T*V, T*V) @ (T*V, Bb*C) matmul.
    x = x_ref[0].astype(bf16)                                           # (T*V, Bb*Cin_pad)
    h = jnp.dot(x, w1_ref[...], preferred_element_type=f32)             # (T*V, Bb*C1)
    h = jnp.dot(a_ref[...], h.astype(bf16), preferred_element_type=f32)
    h = jnp.maximum(h + b1_ref[...], 0.0)

    h = jnp.dot(h.astype(bf16), w2_ref[...], preferred_element_type=f32)
    h = jnp.dot(a_ref[...], h.astype(bf16), preferred_element_type=f32)
    h = jnp.maximum(h + b2_ref[...], 0.0)                               # (T*V, Bb*C1)

    # ---- mean over the V nodes of each frame: MXU matmul against a constant
    # kron(I_T, ones(1, V)/V) pooling matrix (no cross-sublane reductions).
    seq = jnp.dot(pn_ref[...], h.astype(bf16), preferred_element_type=f32)   # (T, Bb*C1)

    # ---- TCN layer 1: Conv1d(k=2, dilation=d1, padding=d1) + ReLU.  Taps are
    # written into a zeroed VMEM scratch at static offsets (tap0 shifted by
    # d1 rows), then one matmul with the tap-stacked block-diagonal weight.
    s1_ref[...] = jnp.zeros_like(s1_ref)
    s1_ref[pl.ds(d1, t_len), pl.ds(0, c_a)] = seq                       # tap k = 0
    s1_ref[pl.ds(0, t_len), pl.ds(c_a, c_a)] = seq                      # tap k = 1
    h1 = jnp.dot(s1_ref[...].astype(bf16), wt1_ref[...], preferred_element_type=f32)
    h1 = jnp.maximum(h1 + bt1_ref[...], 0.0)                            # (T+d1, Bb*Ct1)
    # TODO(synk): nn.Dropout(0.2) applied as identity (inference semantics).

    # ---- TCN layer 2: same trick, dilation d2, input length T+d1.
    l1 = t_len + d1
    s2_ref[...] = jnp.zeros_like(s2_ref)
    s2_ref[pl.ds(d2, l1), pl.ds(0, c_b)] = h1                           # tap k = 0
    s2_ref[pl.ds(0, l1), pl.ds(c_b, c_b)] = h1                          # tap k = 1
    h2 = jnp.dot(s2_ref[...].astype(bf16), wt2_ref[...], preferred_element_type=f32)
    h2 = jnp.maximum(h2 + bt2_ref[...], 0.0)                            # (T+d1+d2, Bb*Ct2)

    # ---- AdaptiveAvgPool1d(1) over time + Linear(final_dim, 64), fused.
    pooled = jnp.mean(h2, axis=0, keepdims=True)                        # (1, Bb*Ct2) f32
    y = jnp.dot(pooled.astype(bf16), pw_ref[...], preferred_element_type=f32) + pb_ref[...]
    o_ref[0] = y                                                        # lane-dense (1, Bb*64)


# ------------------------------ host helpers ------------------------------- #
def build_norm_adj(edge_index, num_nodes):
    """PyG-GCN normalized adjacency on the V landmark nodes:
    D^-1/2 (A + I) D^-1/2 (add_self_loops + symmetric normalization)."""
    src, dst = edge_index
    a = jnp.zeros((num_nodes, num_nodes), jnp.float32)
    a = a.at[dst, src].add(1.0)                               # message src -> dst
    a = a + jnp.eye(num_nodes, dtype=jnp.float32)             # add_self_loops
    deg = jnp.sum(a, axis=1)
    d_inv_sqrt = jnp.where(deg > 0, jax.lax.rsqrt(deg), 0.0)
    return d_inv_sqrt[:, None] * a * d_inv_sqrt[None, :]


def make_edge_index(num_nodes):
    # Undirected ring over the V facial landmarks (per-frame graph).
    edges = []
    for v in range(num_nodes):
        w = (v + 1) % num_nodes
        edges.append((v, w))
        edges.append((w, v))
    return jnp.asarray(edges, dtype=jnp.int32).T              # (2, E)


def _const_spec(shape):
    nd = len(shape)
    return pl.BlockSpec(shape, lambda g, _nd=nd: (0,) * _nd)


def init_params(key, in_channels=3, gcn_out=64, tcn_channels=(64, 128),
                proj_out=64, kernel_size=2):
    keys = jax.random.split(key, 8)
    s = 0.1
    params = {
        "gcn_w1": jax.random.normal(keys[0], (in_channels, gcn_out), jnp.float32) * s,
        "gcn_b1": jax.random.normal(keys[1], (1, gcn_out), jnp.float32) * s,
        "gcn_w2": jax.random.normal(keys[2], (gcn_out, gcn_out), jnp.float32) * s,
        "gcn_b2": jax.random.normal(keys[3], (1, gcn_out), jnp.float32) * s,
        "proj_w": jax.random.normal(keys[6], (tcn_channels[-1], proj_out), jnp.float32) * s,
        "proj_b": jax.random.normal(keys[7], (1, proj_out), jnp.float32) * s,
    }
    tcn = []
    in_ch = gcn_out
    kt = jax.random.split(keys[4], 2 * len(tcn_channels))
    for i, out_ch in enumerate(tcn_channels):
        w = jax.random.normal(kt[2 * i], (kernel_size, in_ch, out_ch), jnp.float32) * s
        b = jax.random.normal(kt[2 * i + 1], (1, out_ch), jnp.float32) * s
        tcn.append((w, b))
        in_ch = out_ch
    params["tcn"] = tcn
    return params


def face_stgcn_forward(params, x, edge_index, *, block_batch=4):
    """x: (B, T, V, Cin); edge_index: (2, E) per-frame landmark graph (V nodes),
    applied block-diagonally over frames exactly like the flattened PyTorch model.
    `block_batch`: batch elements per grid step (4 fills v6e/v7x MXU width,
    2 is enough on v5e)."""
    batch, t_len, num_nodes, in_ch = x.shape
    tcn = params["tcn"]
    assert len(tcn) == 2, "kernel is specialized to the 2 default TCN layers"
    f32, bf16 = jnp.float32, jnp.bfloat16

    gcn_out = params["gcn_w1"].shape[1]
    tcn0 = tcn[0][0].shape[-1]
    tcn1 = tcn[1][0].shape[-1]
    proj_out = params["proj_w"].shape[1]
    d1, d2 = 2 ** 0, 2 ** 1                      # TCN dilations

    # ---- batch blocking: Bb elements per grid step (pad batch to multiple).
    bb = max(1, min(block_batch, batch))
    n_blk = -(-batch // bb)
    b_pad = n_blk * bb

    # ---- input layout: (n_blk, T*V, Bb*Cin_pad)  (batch-in-columns per block)
    cin_pad = max(in_ch, 8)
    xp = x.astype(f32)
    if cin_pad > in_ch:
        xp = jnp.pad(xp, ((0, 0), (0, 0), (0, 0), (0, cin_pad - in_ch)))
    if b_pad > batch:
        xp = jnp.pad(xp, ((0, b_pad - batch), (0, 0), (0, 0), (0, 0)))
    xp = xp.reshape(n_blk, bb, t_len, num_nodes, cin_pad)
    xp = xp.transpose(0, 2, 3, 1, 4).reshape(n_blk, t_len * num_nodes, bb * cin_pad)

    # ---- host-side constants: block-diagonal adjacency / node-pooling matrix
    # and kron-over-batch weights (so each in-kernel layer is ONE 2-D matmul).
    eye_b = jnp.eye(bb, dtype=f32)
    a_bd = jnp.kron(jnp.eye(t_len, dtype=f32),
                    build_norm_adj(edge_index, num_nodes)).astype(bf16)      # (T*V, T*V)
    pool_n = jnp.kron(jnp.eye(t_len, dtype=f32),
                      jnp.full((1, num_nodes), 1.0 / num_nodes, f32)).astype(bf16)  # (T, T*V)

    w1p = jnp.zeros((cin_pad, gcn_out), f32).at[:in_ch].set(params["gcn_w1"])
    w1bd = jnp.kron(eye_b, w1p).astype(bf16)                                 # (Bb*8,  Bb*C1)
    w2bd = jnp.kron(eye_b, params["gcn_w2"]).astype(bf16)                    # (Bb*C1, Bb*C1)
    b1t = jnp.tile(params["gcn_b1"].reshape(1, -1), (1, bb)).astype(f32)
    b2t = jnp.tile(params["gcn_b2"].reshape(1, -1), (1, bb)).astype(f32)

    (wt1, bt1), (wt2, bt2) = tcn
    wt1s = jnp.concatenate([jnp.kron(eye_b, wt1[0]),
                            jnp.kron(eye_b, wt1[1])], axis=0).astype(bf16)   # (2*Bb*C1,  Bb*Ct1)
    wt2s = jnp.concatenate([jnp.kron(eye_b, wt2[0]),
                            jnp.kron(eye_b, wt2[1])], axis=0).astype(bf16)   # (2*Bb*Ct1, Bb*Ct2)
    bt1t = jnp.tile(bt1.reshape(1, -1), (1, bb)).astype(f32)
    bt2t = jnp.tile(bt2.reshape(1, -1), (1, bb)).astype(f32)

    wpbd = jnp.kron(eye_b, params["proj_w"]).astype(bf16)                    # (Bb*Ct2, Bb*64)
    pbt = jnp.tile(params["proj_b"].reshape(1, -1), (1, bb)).astype(f32)

    tv = t_len * num_nodes
    kern = functools.partial(_fused_forward_kernel, t_len=t_len, d1=d1, d2=d2)

    flops = 2 * b_pad * (tv * cin_pad * gcn_out
                         + 2 * t_len * num_nodes * num_nodes * gcn_out
                         + tv * gcn_out * gcn_out
                         + t_len * num_nodes * gcn_out
                         + (t_len + d1) * 2 * gcn_out * tcn0
                         + (t_len + d1 + d2) * 2 * tcn0 * tcn1
                         + tcn1 * proj_out)
    bytes_accessed = (xp.size * 4 + b_pad * proj_out * 4
                      + 2 * (a_bd.size + pool_n.size + w1bd.size + w2bd.size
                             + wt1s.size + wt2s.size + wpbd.size)
                      + 4 * (b1t.size + b2t.size + bt1t.size + bt2t.size + pbt.size))

    out = pl.pallas_call(
        kern,
        out_shape=jax.ShapeDtypeStruct((n_blk, 1, bb * proj_out), f32),
        grid=(n_blk,),
        in_specs=[
            pl.BlockSpec((1, tv, bb * cin_pad), lambda g: (g, 0, 0)),
            _const_spec(a_bd.shape),
            _const_spec(w1bd.shape), _const_spec(b1t.shape),
            _const_spec(w2bd.shape), _const_spec(b2t.shape),
            _const_spec(pool_n.shape),
            _const_spec(wt1s.shape), _const_spec(bt1t.shape),
            _const_spec(wt2s.shape), _const_spec(bt2t.shape),
            _const_spec(wpbd.shape), _const_spec(pbt.shape),
        ],
        out_specs=pl.BlockSpec((1, 1, bb * proj_out), lambda g: (g, 0, 0)),
        scratch_shapes=[
            pltpu.VMEM((t_len + d1, 2 * bb * gcn_out), f32),      # TCN-1 tap scratch
            pltpu.VMEM((t_len + d1 + d2, 2 * bb * tcn0), f32),    # TCN-2 tap scratch
        ],
        compiler_params=pltpu.CompilerParams(
            dimension_semantics=("parallel",),       # megacore sharding on v7x
            vmem_limit_bytes=32 * 1024 * 1024),
        cost_estimate=pl.CostEstimate(flops=int(flops), transcendentals=0,
                                      bytes_accessed=int(bytes_accessed)),
    )(xp, a_bd, w1bd, b1t, w2bd, b2t, pool_n, wt1s, bt1t, wt2s, bt2t, wpbd, pbt)
    return out.reshape(b_pad, proj_out)[:batch]


def face_stgcn_reference(params, x, edge_index):
    """Pure-JAX f32 reference with the same semantics as the PyTorch model."""
    batch, t_len, num_nodes, in_ch = x.shape
    a = build_norm_adj(edge_index, num_nodes)
    h = x.reshape(batch * t_len, num_nodes, in_ch)
    h = jnp.einsum("vw,fwc->fvc", a, h @ params["gcn_w1"]) + params["gcn_b1"]
    h = jax.nn.relu(h)
    h = jnp.einsum("vw,fwc->fvc", a, h @ params["gcn_w2"]) + params["gcn_b2"]
    h = jax.nn.relu(h)
    seq = h.reshape(batch, t_len, num_nodes, -1).mean(axis=2)        # (B, T, C1)
    for i, (w, b) in enumerate(params["tcn"]):
        d = 2 ** i
        xp_ = jnp.pad(seq, ((0, 0), (d, d), (0, 0)))
        seq = jax.nn.relu(xp_[:, :xp_.shape[1] - d] @ w[0] + xp_[:, d:] @ w[1] + b)
    pooled = seq.mean(axis=1)                                         # (B, C2)
    return pooled @ params["proj_w"] + params["proj_b"]


if __name__ == "__main__":
    batch, t_len, num_nodes, in_ch = 8, 8, 16, 3
    key = jax.random.PRNGKey(0)
    kx, kp = jax.random.split(key)

    x = jax.random.normal(kx, (batch, t_len, num_nodes, in_ch), jnp.float32)
    edge_index = make_edge_index(num_nodes)
    params = init_params(kp, in_channels=in_ch, gcn_out=64,
                         tcn_channels=(64, 128), proj_out=64)

    # block_batch=4 per grid step -> 2 grid steps (keeps both v7x TCs busy).
    out = jax.jit(face_stgcn_forward)(params, x, edge_index)
    out = jax.block_until_ready(out)
    assert out.shape == (batch, 64) and out.dtype == jnp.float32
    assert bool(jnp.all(jnp.isfinite(out)))

    ref = jax.jit(face_stgcn_reference)(params, x, edge_index)
    assert bool(jnp.allclose(out, ref, rtol=5e-2, atol=5e-2)), (
        "kernel deviates from f32 reference beyond bf16 tolerance")
    print("KERNEL_OK")
</pallas_src>

<mosaic_0001>
module attributes {stable_mosaic.version = 11 : i64} {
  func.func @_fused_forward_kernel(%arg0: i32, %arg1: memref<1x128x32xf32, #tpu.memory_space<vmem>>, %arg2: memref<128x128xbf16, #tpu.memory_space<vmem>>, %arg3: memref<32x256xbf16, #tpu.memory_space<vmem>>, %arg4: memref<1x256xf32, #tpu.memory_space<vmem>>, %arg5: memref<256x256xbf16, #tpu.memory_space<vmem>>, %arg6: memref<1x256xf32, #tpu.memory_space<vmem>>, %arg7: memref<8x128xbf16, #tpu.memory_space<vmem>>, %arg8: memref<512x256xbf16, #tpu.memory_space<vmem>>, %arg9: memref<1x256xf32, #tpu.memory_space<vmem>>, %arg10: memref<512x512xbf16, #tpu.memory_space<vmem>>, %arg11: memref<1x512xf32, #tpu.memory_space<vmem>>, %arg12: memref<512x256xbf16, #tpu.memory_space<vmem>>, %arg13: memref<1x256xf32, #tpu.memory_space<vmem>>, %arg14: memref<1x1x256xf32, #tpu.memory_space<vmem>>, %arg15: memref<9x512xf32, #tpu.memory_space<vmem>>, %arg16: memref<11x512xf32, #tpu.memory_space<vmem>>) attributes {dimension_semantics = [#tpu.dimension_semantics<parallel>], iteration_bounds = array<i64: 2>, scalar_prefetch = 0 : i64, scratch_operands = 2 : i64, tpu.core_type = #tpu.core_type<tc>, window_params = [{transform_indices = @transform_0, window_bounds = array<i64: 1, 128, 32>}, {pipeline_mode = #tpu.pipeline_mode<synchronous>, transform_indices = @transform_1, window_bounds = array<i64: 128, 128>}, {pipeline_mode = #tpu.pipeline_mode<synchronous>, transform_indices = @transform_2, window_bounds = array<i64: 32, 256>}, {pipeline_mode = #tpu.pipeline_mode<synchronous>, transform_indices = @transform_3, window_bounds = array<i64: 1, 256>}, {pipeline_mode = #tpu.pipeline_mode<synchronous>, transform_indices = @transform_4, window_bounds = array<i64: 256, 256>}, {pipeline_mode = #tpu.pipeline_mode<synchronous>, transform_indices = @transform_5, window_bounds = array<i64: 1, 256>}, {pipeline_mode = #tpu.pipeline_mode<synchronous>, transform_indices = @transform_6, window_bounds = array<i64: 8, 128>}, {pipeline_mode = #tpu.pipeline_mode<synchronous>, transform_indices = @transform_7, window_bounds = array<i64: 512, 256>}, {pipeline_mode = #tpu.pipeline_mode<synchronous>, transform_indices = @transform_8, window_bounds = array<i64: 1, 256>}, {pipeline_mode = #tpu.pipeline_mode<synchronous>, transform_indices = @transform_9, window_bounds = array<i64: 512, 512>}, {pipeline_mode = #tpu.pipeline_mode<synchronous>, transform_indices = @transform_10, window_bounds = array<i64: 1, 512>}, {pipeline_mode = #tpu.pipeline_mode<synchronous>, transform_indices = @transform_11, window_bounds = array<i64: 512, 256>}, {pipeline_mode = #tpu.pipeline_mode<synchronous>, transform_indices = @transform_12, window_bounds = array<i64: 1, 256>}, {transform_indices = @transform_13, window_bounds = array<i64: 1, 1, 256>}]} {
    %c0 = arith.constant 0 : index
    %c0_0 = arith.constant 0 : index
    %c0_1 = arith.constant 0 : index
    %0 = vector.load %arg1[%c0, %c0_0, %c0_1] : memref<1x128x32xf32, #tpu.memory_space<vmem>>, vector<1x128x32xf32>
    %1 = vector.shape_cast %0 : vector<1x128x32xf32> to vector<128x32xf32>
    %2 = arith.truncf %1 : vector<128x32xf32> to vector<128x32xbf16>
    %c0_2 = arith.constant 0 : index
    %c0_3 = arith.constant 0 : index
    %3 = vector.load %arg3[%c0_2, %c0_3] : memref<32x256xbf16, #tpu.memory_space<vmem>>, vector<32x256xbf16>
    %cst = arith.constant dense<0.000000e+00> : vector<128x256xf32>
    %4 = tpu.matmul %2, %3, %cst {dimension_numbers = #tpu.dot_dimension_numbers<[1], [0], [0], [1], [0, 0, 1, 1], [], []>} : vector<128x32xbf16>, vector<32x256xbf16>, vector<128x256xf32> -> vector<128x256xf32>
    %c0_4 = arith.constant 0 : index
    %c0_5 = arith.constant 0 : index
    %5 = vector.load %arg2[%c0_4, %c0_5] : memref<128x128xbf16, #tpu.memory_space<vmem>>, vector<128x128xbf16>
    %6 = arith.truncf %4 : vector<128x256xf32> to vector<128x256xbf16>
    %cst_6 = arith.constant dense<0.000000e+00> : vector<128x256xf32>
    %7 = tpu.matmul %5, %6, %cst_6 {dimension_numbers = #tpu.dot_dimension_numbers<[1], [0], [0], [1], [0, 0, 1, 1], [], []>} : vector<128x128xbf16>, vector<128x256xbf16>, vector<128x256xf32> -> vector<128x256xf32>
    %c0_7 = arith.constant 0 : index
    %c0_8 = arith.constant 0 : index
    %8 = vector.load %arg4[%c0_7, %c0_8] : memref<1x256xf32, #tpu.memory_space<vmem>>, vector<1x256xf32>
    %9 = vector.broadcast %8 : vector<1x256xf32> to vector<128x256xf32>
    %10 = arith.addf %7, %9 : vector<128x256xf32>
    %cst_9 = arith.constant 0.000000e+00 : f32
    %11 = vector.broadcast %cst_9 : f32 to vector<128x256xf32>
    %12 = arith.maximumf %10, %11 : vector<128x256xf32>
    %13 = arith.truncf %12 : vector<128x256xf32> to vector<128x256xbf16>
    %c0_10 = arith.constant 0 : index
    %c0_11 = arith.constant 0 : index
    %14 = vector.load %arg5[%c0_10, %c0_11] : memref<256x256xbf16, #tpu.memory_space<vmem>>, vector<256x256xbf16>
    %cst_12 = arith.constant dense<0.000000e+00> : vector<128x256xf32>
    %15 = tpu.matmul %13, %14, %cst_12 {dimension_numbers = #tpu.dot_dimension_numbers<[1], [0], [0], [1], [0, 0, 1, 1], [], []>} : vector<128x256xbf16>, vector<256x256xbf16>, vector<128x256xf32> -> vector<128x256xf32>
    %c0_13 = arith.constant 0 : index
    %c0_14 = arith.constant 0 : index
    %16 = vector.load %arg2[%c0_13, %c0_14] : memref<128x128xbf16, #tpu.memory_space<vmem>>, vector<128x128xbf16>
    %17 = arith.truncf %15 : vector<128x256xf32> to vector<128x256xbf16>
    %cst_15 = arith.constant dense<0.000000e+00> : vector<128x256xf32>
    %18 = tpu.matmul %16, %17, %cst_15 {dimension_numbers = #tpu.dot_dimension_numbers<[1], [0], [0], [1], [0, 0, 1, 1], [], []>} : vector<128x128xbf16>, vector<128x256xbf16>, vector<128x256xf32> -> vector<128x256xf32>
    %c0_16 = arith.constant 0 : index
    %c0_17 = arith.constant 0 : index
    %19 = vector.load %arg6[%c0_16, %c0_17] : memref<1x256xf32, #tpu.memory_space<vmem>>, vector<1x256xf32>
    %20 = vector.broadcast %19 : vector<1x256xf32> to vector<128x256xf32>
    %21 = arith.addf %18, %20 : vector<128x256xf32>
    %cst_18 = arith.constant 0.000000e+00 : f32
    %22 = vector.broadcast %cst_18 : f32 to vector<128x256xf32>
    %23 = arith.maximumf %21, %22 : vector<128x256xf32>
    %c0_19 = arith.constant 0 : index
    %c0_20 = arith.constant 0 : index
    %24 = vector.load %arg7[%c0_19, %c0_20] : memref<8x128xbf16, #tpu.memory_space<vmem>>, vector<8x128xbf16>
    %25 = arith.truncf %23 : vector<128x256xf32> to vector<128x256xbf16>
    %cst_21 = arith.constant dense<0.000000e+00> : vector<8x256xf32>
    %26 = tpu.matmul %24, %25, %cst_21 {dimension_numbers = #tpu.dot_dimension_numbers<[1], [0], [0], [1], [0, 0, 1, 1], [], []>} : vector<8x128xbf16>, vector<128x256xbf16>, vector<8x256xf32> -> vector<8x256xf32>
    %cst_22 = arith.constant 0.000000e+00 : f32
    %27 = vector.broadcast %cst_22 : f32 to vector<9x512xf32>
    %c0_23 = arith.constant 0 : index
    %c0_24 = arith.constant 0 : index
    %28 = vector.load %arg15[%c0_23, %c0_24] : memref<9x512xf32, #tpu.memory_space<vmem>>, vector<9x512xf32>
    tpu.vector_store %arg15[%c0_23, %c0_24], %27 {strides = array<i32>} : memref<9x512xf32, #tpu.memory_space<vmem>>, vector<9x512xf32>,
    %c1 = arith.constant 1 : index
    %c0_25 = arith.constant 0 : index
    %29 = vector.load %arg15[%c1, %c0_25] : memref<9x512xf32, #tpu.memory_space<vmem>>, vector<8x256xf32>
    tpu.vector_store %arg15[%c1, %c0_25], %26 {strides = array<i32>} : memref<9x512xf32, #tpu.memory_space<vmem>>, vector<8x256xf32>,
    %c0_26 = arith.constant 0 : index
    %c256 = arith.constant 256 : index
    %30 = vector.load %arg15[%c0_26, %c256] : memref<9x512xf32, #tpu.memory_space<vmem>>, vector<8x256xf32>
    tpu.vector_store %arg15[%c0_26, %c256], %26 {strides = array<i32>} : memref<9x512xf32, #tpu.memory_space<vmem>>, vector<8x256xf32>,
    %c0_27 = arith.constant 0 : index
    %c0_28 = arith.constant 0 : index
    %31 = vector.load %arg15[%c0_27, %c0_28] : memref<9x512xf32, #tpu.memory_space<vmem>>, vector<9x512xf32>
    %32 = arith.truncf %31 : vector<9x512xf32> to vector<9x512xbf16>
    %c0_29 = arith.constant 0 : index
    %c0_30 = arith.constant 0 : index
    %33 = vector.load %arg8[%c0_29, %c0_30] : memref<512x256xbf16, #tpu.memory_space<vmem>>, vector<512x256xbf16>
    %cst_31 = arith.constant dense<0.000000e+00> : vector<9x256xf32>
    %34 = tpu.matmul %32, %33, %cst_31 {dimension_numbers = #tpu.dot_dimension_numbers<[1], [0], [0], [1], [0, 0, 1, 1], [], []>} : vector<9x512xbf16>, vector<512x256xbf16>, vector<9x256xf32> -> vector<9x256xf32>
    %c0_32 = arith.constant 0 : index
    %c0_33 = arith.constant 0 : index
    %35 = vector.load %arg9[%c0_32, %c0_33] : memref<1x256xf32, #tpu.memory_space<vmem>>, vector<1x256xf32>
    %36 = vector.broadcast %35 : vector<1x256xf32> to vector<9x256xf32>
    %37 = arith.addf %34, %36 : vector<9x256xf32>
    %cst_34 = arith.constant 0.000000e+00 : f32
    %38 = vector.broadcast %cst_34 : f32 to vector<9x256xf32>
    %39 = arith.maximumf %37, %38 : vector<9x256xf32>
    %cst_35 = arith.constant 0.000000e+00 : f32
    %40 = vector.broadcast %cst_35 : f32 to vector<11x512xf32>
    %c0_36 = arith.constant 0 : index
    %c0_37 = arith.constant 0 : index
    %41 = vector.load %arg16[%c0_36, %c0_37] : memref<11x512xf32, #tpu.memory_space<vmem>>, vector<11x512xf32>
    tpu.vector_store %arg16[%c0_36, %c0_37], %40 {strides = array<i32>} : memref<11x512xf32, #tpu.memory_space<vmem>>, vector<11x512xf32>,
    %c2 = arith.constant 2 : index
    %c0_38 = arith.constant 0 : index
    %42 = vector.load %arg16[%c2, %c0_38] : memref<11x512xf32, #tpu.memory_space<vmem>>, vector<9x256xf32>
    tpu.vector_store %arg16[%c2, %c0_38], %39 {strides = array<i32>} : memref<11x512xf32, #tpu.memory_space<vmem>>, vector<9x256xf32>,
    %c0_39 = arith.constant 0 : index
    %c256_40 = arith.constant 256 : index
    %43 = vector.load %arg16[%c0_39, %c256_40] : memref<11x512xf32, #tpu.memory_space<vmem>>, vector<9x256xf32>
    tpu.vector_store %arg16[%c0_39, %c256_40], %39 {strides = array<i32>} : memref<11x512xf32, #tpu.memory_space<vmem>>, vector<9x256xf32>,
    %c0_41 = arith.constant 0 : index
    %c0_42 = arith.constant 0 : index
    %44 = vector.load %arg16[%c0_41, %c0_42] : memref<11x512xf32, #tpu.memory_space<vmem>>, vector<11x512xf32>
    %45 = arith.truncf %44 : vector<11x512xf32> to vector<11x512xbf16>
    %c0_43 = arith.constant 0 : index
    %c0_44 = arith.constant 0 : index
    %46 = vector.load %arg10[%c0_43, %c0_44] : memref<512x512xbf16, #tpu.memory_space<vmem>>, vector<512x512xbf16>
    %cst_45 = arith.constant dense<0.000000e+00> : vector<11x512xf32>
    %47 = tpu.matmul %45, %46, %cst_45 {dimension_numbers = #tpu.dot_dimension_numbers<[1], [0], [0], [1], [0, 0, 1, 1], [], []>} : vector<11x512xbf16>, vector<512x512xbf16>, vector<11x512xf32> -> vector<11x512xf32>
    %c0_46 = arith.constant 0 : index
    %c0_47 = arith.constant 0 : index
    %48 = vector.load %arg11[%c0_46, %c0_47] : memref<1x512xf32, #tpu.memory_space<vmem>>, vector<1x512xf32>
    %49 = vector.broadcast %48 : vector<1x512xf32> to vector<11x512xf32>
    %50 = arith.addf %47, %49 : vector<11x512xf32>
    %cst_48 = arith.constant 0.000000e+00 : f32
    %51 = vector.broadcast %cst_48 : f32 to vector<11x512xf32>
    %52 = arith.maximumf %50, %51 : vector<11x512xf32>
    %cst_49 = arith.constant dense<0.000000e+00> : vector<512xf32>
    %53 = vector.multi_reduction <add>, %52, %cst_49 [0] : vector<11x512xf32> to vector<512xf32>
    %54 = vector.shape_cast %53 : vector<512xf32> to vector<1x512xf32>
    %cst_50 = arith.constant 1.100000e+01 : f32
    %55 = vector.broadcast %cst_50 : f32 to vector<1x512xf32>
    %56 = arith.divf %54, %55 : vector<1x512xf32>
    %57 = arith.truncf %56 : vector<1x512xf32> to vector<1x512xbf16>
    %c0_51 = arith.constant 0 : index
    %c0_52 = arith.constant 0 : index
    %58 = vector.load %arg12[%c0_51, %c0_52] : memref<512x256xbf16, #tpu.memory_space<vmem>>, vector<512x256xbf16>
    %cst_53 = arith.constant dense<0.000000e+00> : vector<1x256xf32>
    %59 = tpu.matmul %57, %58, %cst_53 {dimension_numbers = #tpu.dot_dimension_numbers<[1], [0], [0], [1], [0, 0, 1, 1], [], []>} : vector<1x512xbf16>, vector<512x256xbf16>, vector<1x256xf32> -> vector<1x256xf32>
    %c0_54 = arith.constant 0 : index
    %c0_55 = arith.constant 0 : index
    %60 = vector.load %arg13[%c0_54, %c0_55] : memref<1x256xf32, #tpu.memory_space<vmem>>, vector<1x256xf32>
    %61 = arith.addf %59, %60 : vector<1x256xf32>
    %c0_56 = arith.constant 0 : index
    %c0_57 = arith.constant 0 : index
    %c0_58 = arith.constant 0 : index
    %62 = vector.load %arg14[%c0_56, %c0_57, %c0_58] : memref<1x1x256xf32, #tpu.memory_space<vmem>>, vector<1x1x256xf32>
    %63 = vector.shape_cast %62 : vector<1x1x256xf32> to vector<1x256xf32>
    %64 = vector.shape_cast %61 : vector<1x256xf32> to vector<1x1x256xf32>
    tpu.vector_store %arg14[%c0_56, %c0_57, %c0_58], %64 {strides = array<i32>} : memref<1x1x256xf32, #tpu.memory_space<vmem>>, vector<1x1x256xf32>,
    return
  }
  func.func @transform_0(%arg0: i32) -> (i32, i32, i32) {
    %c0_i32 = arith.constant 0 : i32
    %c0_i32_0 = arith.constant 0 : i32
    %c0_i32_1 = arith.constant 0 : i32
    return %arg0, %c0_i32, %c0_i32_0 : i32, i32, i32
  }
  func.func @transform_1(%arg0: i32) -> (i32, i32) {
    %c0_i32 = arith.constant 0 : i32
    %c0_i32_0 = arith.constant 0 : i32
    %c0_i32_1 = arith.constant 0 : i32
    return %c0_i32, %c0_i32_0 : i32, i32
  }
  func.func @transform_2(%arg0: i32) -> (i32, i32) {
    %c0_i32 = arith.constant 0 : i32
    %c0_i32_0 = arith.constant 0 : i32
    %c0_i32_1 = arith.constant 0 : i32
    return %c0_i32, %c0_i32_0 : i32, i32
  }
  func.func @transform_3(%arg0: i32) -> (i32, i32) {
    %c0_i32 = arith.constant 0 : i32
    %c0_i32_0 = arith.constant 0 : i32
    %c0_i32_1 = arith.constant 0 : i32
    return %c0_i32, %c0_i32_0 : i32, i32
  }
  func.func @transform_4(%arg0: i32) -> (i32, i32) {
    %c0_i32 = arith.constant 0 : i32
    %c0_i32_0 = arith.constant 0 : i32
    %c0_i32_1 = arith.constant 0 : i32
    return %c0_i32, %c0_i32_0 : i32, i32
  }
  func.func @transform_5(%arg0: i32) -> (i32, i32) {
    %c0_i32 = arith.constant 0 : i32
    %c0_i32_0 = arith.constant 0 : i32
    %c0_i32_1 = arith.constant 0 : i32
    return %c0_i32, %c0_i32_0 : i32, i32
  }
  func.func @transform_6(%arg0: i32) -> (i32, i32) {
    %c0_i32 = arith.constant 0 : i32
    %c0_i32_0 = arith.constant 0 : i32
    %c0_i32_1 = arith.constant 0 : i32
    return %c0_i32, %c0_i32_0 : i32, i32
  }
  func.func @transform_7(%arg0: i32) -> (i32, i32) {
    %c0_i32 = arith.constant 0 : i32
    %c0_i32_0 = arith.constant 0 : i32
    %c0_i32_1 = arith.constant 0 : i32
    return %c0_i32, %c0_i32_0 : i32, i32
  }
  func.func @transform_8(%arg0: i32) -> (i32, i32) {
    %c0_i32 = arith.constant 0 : i32
    %c0_i32_0 = arith.constant 0 : i32
    %c0_i32_1 = arith.constant 0 : i32
    return %c0_i32, %c0_i32_0 : i32, i32
  }
  func.func @transform_9(%arg0: i32) -> (i32, i32) {
    %c0_i32 = arith.constant 0 : i32
    %c0_i32_0 = arith.constant 0 : i32
    %c0_i32_1 = arith.constant 0 : i32
    return %c0_i32, %c0_i32_0 : i32, i32
  }
  func.func @transform_10(%arg0: i32) -> (i32, i32) {
    %c0_i32 = arith.constant 0 : i32
    %c0_i32_0 = arith.constant 0 : i32
    %c0_i32_1 = arith.constant 0 : i32
    return %c0_i32, %c0_i32_0 : i32, i32
  }
  func.func @transform_11(%arg0: i32) -> (i32, i32) {
    %c0_i32 = arith.constant 0 : i32
    %c0_i32_0 = arith.constant 0 : i32
    %c0_i32_1 = arith.constant 0 : i32
    return %c0_i32, %c0_i32_0 : i32, i32
  }
  func.func @transform_12(%arg0: i32) -> (i32, i32) {
    %c0_i32 = arith.constant 0 : i32
    %c0_i32_0 = arith.constant 0 : i32
    %c0_i32_1 = arith.constant 0 : i32
    return %c0_i32, %c0_i32_0 : i32, i32
  }
  func.func @transform_13(%arg0: i32) -> (i32, i32, i32) {
    %c0_i32 = arith.constant 0 : i32
    %c0_i32_0 = arith.constant 0 : i32
    %c0_i32_1 = arith.constant 0 : i32
    return %arg0, %c0_i32, %c0_i32_0 : i32, i32, i32
  }
}

</mosaic_0001>

<llo_original>
// kernel: face_stgcn_forward.1
$region0: #{face_stgcn_forward.1}
  #allocation0 [shape = 'u32[]', space=smem, size = 0x4, offset = 0x4, fixed_abs, tag = 'smem constant byte address 0x4 - core index']
  #allocation1 [shape = 'u32[72,128]{1,0:T(1,128)}', space=vmem, size = 0x9000, scoped, tag = 'internal scratch']
  #allocation2 [shape = 'f32[9,512]{1,0:T(8,128)}', space=vmem, size = 0x8000, scoped, tag = 'scratch operand']
  #allocation3 [shape = 'f32[11,512]{1,0:T(8,128)}', space=vmem, size = 0x8000, scoped, tag = 'scratch operand']
  %s0 = inlined_call_operand.vmem [shape: f32[2,128,32], index: 0, kind: input, shape index: {}]
  %s1 = inlined_call_operand.vmem [shape: bf16[128,128], index: 1, kind: input, shape index: {}]
  %s2 = inlined_call_operand.vmem [shape: bf16[32,256], index: 2, kind: input, shape index: {}]
  %s3 = inlined_call_operand.vmem [shape: f32[1,256], index: 3, kind: input, shape index: {}]
  %s4 = inlined_call_operand.vmem [shape: bf16[256,256], index: 4, kind: input, shape index: {}]
  %s5 = inlined_call_operand.vmem [shape: f32[1,256], index: 5, kind: input, shape index: {}]
  %s6 = inlined_call_operand.vmem [shape: bf16[8,128], index: 6, kind: input, shape index: {}]
  %s7 = inlined_call_operand.vmem [shape: bf16[512,256], index: 7, kind: input, shape index: {}]
  %s8 = inlined_call_operand.vmem [shape: f32[1,256], index: 8, kind: input, shape index: {}]
  %s9 = inlined_call_operand.vmem [shape: bf16[512,512], index: 9, kind: input, shape index: {}]
  %s10 = inlined_call_operand.vmem [shape: f32[1,512], index: 10, kind: input, shape index: {}]
  %s11 = inlined_call_operand.vmem [shape: bf16[512,256], index: 11, kind: input, shape index: {}]
  %s12 = inlined_call_operand.vmem [shape: f32[1,256], index: 12, kind: input, shape index: {}]
  %s13 = inlined_call_operand.vmem [shape: f32[2,1,256], index: 13, kind: output, shape index: {}]
  %s14 = sld [smem:[#allocation0]]
  $region85: #{face_stgcn_forward.1} parent=0
    _
  %s16 = ssub.s32 1, %s14
  %s17 = scalar_select 0, %s16, %s14
  loop: start=0, step=1, limit=4
  $region2: #{face_stgcn_forward.1} parent=0 // loop_pre_header
    _
  $region3: #{face_stgcn_forward.1} parent=0 // loop_header
    %s19 = sphi 0, %s23
    %p20 = scmp.ge.s32.totalorder %s19, 4
    %s29 = sphi 0, %s31
    %s32 = sphi 0, %s29
    %s33 = sphi 0, %s32
    %s49 = sphi 0, %s33
    %s53 = sphi 0, %s53
    %s55 = sphi 0, %s53
    %s56 = sphi 0, %s55
    %s70 = sphi 0, %s56
    %s74 = sphi 0, %s74
    %s76 = sphi 0, %s74
    %s77 = sphi 0, %s76
    %s91 = sphi 0, %s77
    %s95 = sphi 0, %s95
    %s97 = sphi 0, %s95
    %s98 = sphi 0, %s97
    %s112 = sphi 0, %s98
    %s116 = sphi 0, %s116
    %s118 = sphi 0, %s116
    %s119 = sphi 0, %s118
    %s133 = sphi 0, %s119
    %s137 = sphi 0, %s137
    %s139 = sphi 0, %s137
    %s140 = sphi 0, %s139
    %s154 = sphi 0, %s140
    %s158 = sphi 0, %s158
    %s160 = sphi 0, %s158
    %s161 = sphi 0, %s160
    %s175 = sphi 0, %s161
    %s179 = sphi 0, %s179
    %s181 = sphi 0, %s179
    %s182 = sphi 0, %s181
    %s196 = sphi 0, %s182
    %s200 = sphi 0, %s200
    %s202 = sphi 0, %s200
    %s203 = sphi 0, %s202
    %s217 = sphi 0, %s203
    %s221 = sphi 0, %s221
    %s223 = sphi 0, %s221
    %s224 = sphi 0, %s223
    %s238 = sphi 0, %s224
    %s242 = sphi 0, %s242
    %s244 = sphi 0, %s242
    %s245 = sphi 0, %s244
    %s259 = sphi 0, %s245
    %s263 = sphi 0, %s263
    %s265 = sphi 0, %s263
    %s266 = sphi 0, %s265
    %s280 = sphi 0, %s266
    %s284 = sphi 0, %s284
    %s286 = sphi 0, %s284
    %s287 = sphi 0, %s286
    %s301 = sphi 0, %s287
    %s307 = sphi 0, %s309
    %s310 = sphi 0, %s307
    %s311 = sphi 0, %s310
    %s327 = sphi 0, %s311
  $region4: #{face_stgcn_forward.1} parent=0 // loop_header_branch
    %22 = sbr.rel (%p20) target = $region8
  $region5: #{face_stgcn_forward.1} parent=0 // loop_body
    %s24 = ssub.s32 %s19, 1
    %s25 = ssub.s32 %s19, 2
    %s26 = sadd.s32 %s19, 1
    %s27 = ssub.s32 %s19, %s26
    %p28 = scmp.eq.s32.totalorder %s27, 0
    %s30 = sadd.s32 %s29, 1
    %s31 = scalar_select %p28, %s29, %s30
    %p34 = pneg %p28
    %p35 = scmp.eq.s32.totalorder %s19, 1
    %p36 = por %p34, %p35
    %p37 = scmp.ne.s32.totalorder %s29, %s32
    %p38 = scmp.eq.s32.totalorder %s19, 0
    %p39 = por %p37, %p38
    %p40 = scmp.ne.s32.totalorder %s29, %s32
    %p41 = scmp.eq.s32.totalorder %s24, 1
    %p42 = por %p40, %p41
    %p43 = scmp.ne.s32.totalorder %s32, %s33
    %p44 = scmp.eq.s32.totalorder %s24, 0
    %p45 = por %p43, %p44
    %p46 = scmp.ne.s32.totalorder %s32, %s33
    %p47 = scmp.eq.s32.totalorder %s25, 1
    %p48 = por %p46, %p47
    %p50 = scmp.ne.s32.totalorder %s33, %s49
    %p51 = scmp.eq.s32.totalorder %s25, 0
    %p52 = por %p50, %p51
    %s54 = sadd.s32 %s53, 1
    %p57 = scmp.eq.s32.totalorder %s19, 1
    %p58 = scmp.ne.s32.totalorder %s53, %s55
    %p59 = scmp.eq.s32.totalorder %s19, 0
    %p60 = por %p58, %p59
    %p61 = scmp.ne.s32.totalorder %s53, %s55
    %p62 = scmp.eq.s32.totalorder %s24, 1
    %p63 = por %p61, %p62
    %p64 = scmp.ne.s32.totalorder %s55, %s56
    %p65 = scmp.eq.s32.totalorder %s24, 0
    %p66 = por %p64, %p65
    %p67 = scmp.ne.s32.totalorder %s55, %s56
    %p68 = scmp.eq.s32.totalorder %s25, 1
    %p69 = por %p67, %p68
    %p71 = scmp.ne.s32.totalorder %s56, %s70
    %p72 = scmp.eq.s32.totalorder %s25, 0
    %p73 = por %p71, %p72
    %s75 = sadd.s32 %s74, 1
    %p78 = scmp.eq.s32.totalorder %s19, 1
    %p79 = scmp.ne.s32.totalorder %s74, %s76
    %p80 = scmp.eq.s32.totalorder %s19, 0
    %p81 = por %p79, %p80
    %p82 = scmp.ne.s32.totalorder %s74, %s76
    %p83 = scmp.eq.s32.totalorder %s24, 1
    %p84 = por %p82, %p83
    %p85 = scmp.ne.s32.totalorder %s76, %s77
    %p86 = scmp.eq.s32.totalorder %s24, 0
    %p87 = por %p85, %p86
    %p88 = scmp.ne.s32.totalorder %s76, %s77
    %p89 = scmp.eq.s32.totalorder %s25, 1
    %p90 = por %p88, %p89
    %p92 = scmp.ne.s32.totalorder %s77, %s91
    %p93 = scmp.eq.s32.totalorder %s25, 0
    %p94 = por %p92, %p93
    %s96 = sadd.s32 %s95, 1
    %p99 = scmp.eq.s32.totalorder %s19, 1
    %p100 = scmp.ne.s32.totalorder %s95, %s97
    %p101 = scmp.eq.s32.totalorder %s19, 0
    %p102 = por %p100, %p101
    %p103 = scmp.ne.s32.totalorder %s95, %s97
    %p104 = scmp.eq.s32.totalorder %s24, 1
    %p105 = por %p103, %p104
    %p106 = scmp.ne.s32.totalorder %s97, %s98
    %p107 = scmp.eq.s32.totalorder %s24, 0
    %p108 = por %p106, %p107
    %p109 = scmp.ne.s32.totalorder %s97, %s98
    %p110 = scmp.eq.s32.totalorder %s25, 1
    %p111 = por %p109, %p110
    %p113 = scmp.ne.s32.totalorder %s98, %s112
    %p114 = scmp.eq.s32.totalorder %s25, 0
    %p115 = por %p113, %p114
    %s117 = sadd.s32 %s116, 1
    %p120 = scmp.eq.s32.totalorder %s19, 1
    %p121 = scmp.ne.s32.totalorder %s116, %s118
    %p122 = scmp.eq.s32.totalorder %s19, 0
    %p123 = por %p121, %p122
    %p124 = scmp.ne.s32.totalorder %s116, %s118
    %p125 = scmp.eq.s32.totalorder %s24, 1
    %p126 = por %p124, %p125
    %p127 = scmp.ne.s32.totalorder %s118, %s119
    %p128 = scmp.eq.s32.totalorder %s24, 0
    %p129 = por %p127, %p128
    %p130 = scmp.ne.s32.totalorder %s118, %s119
    %p131 = scmp.eq.s32.totalorder %s25, 1
    %p132 = por %p130, %p131
    %p134 = scmp.ne.s32.totalorder %s119, %s133
    %p135 = scmp.eq.s32.totalorder %s25, 0
    %p136 = por %p134, %p135
    %s138 = sadd.s32 %s137, 1
    %p141 = scmp.eq.s32.totalorder %s19, 1
    %p142 = scmp.ne.s32.totalorder %s137, %s139
    %p143 = scmp.eq.s32.totalorder %s19, 0
    %p144 = por %p142, %p143
    %p145 = scmp.ne.s32.totalorder %s137, %s139
    %p146 = scmp.eq.s32.totalorder %s24, 1
    %p147 = por %p145, %p146
    %p148 = scmp.ne.s32.totalorder %s139, %s140
    %p149 = scmp.eq.s32.totalorder %s24, 0
    %p150 = por %p148, %p149
    %p151 = scmp.ne.s32.totalorder %s139, %s140
    %p152 = scmp.eq.s32.totalorder %s25, 1
    %p153 = por %p151, %p152
    %p155 = scmp.ne.s32.totalorder %s140, %s154
    %p156 = scmp.eq.s32.totalorder %s25, 0
    %p157 = por %p155, %p156
    %s159 = sadd.s32 %s158, 1
    %p162 = scmp.eq.s32.totalorder %s19, 1
    %p163 = scmp.ne.s32.totalorder %s158, %s160
    %p164 = scmp.eq.s32.totalorder %s19, 0
    %p165 = por %p163, %p164
    %p166 = scmp.ne.s32.totalorder %s158, %s160
    %p167 = scmp.eq.s32.totalorder %s24, 1
    %p168 = por %p166, %p167
    %p169 = scmp.ne.s32.totalorder %s160, %s161
    %p170 = scmp.eq.s32.totalorder %s24, 0
    %p171 = por %p169, %p170
    %p172 = scmp.ne.s32.totalorder %s160, %s161
    %p173 = scmp.eq.s32.totalorder %s25, 1
    %p174 = por %p172, %p173
    %p176 = scmp.ne.s32.totalorder %s161, %s175
    %p177 = scmp.eq.s32.totalorder %s25, 0
    %p178 = por %p176, %p177
    %s180 = sadd.s32 %s179, 1
    %p183 = scmp.eq.s32.totalorder %s19, 1
    %p184 = scmp.ne.s32.totalorder %s179, %s181
    %p185 = scmp.eq.s32.totalorder %s19, 0
    %p186 = por %p184, %p185
    %p187 = scmp.ne.s32.totalorder %s179, %s181
    %p188 = scmp.eq.s32.totalorder %s24, 1
    %p189 = por %p187, %p188
    %p190 = scmp.ne.s32.totalorder %s181, %s182
    %p191 = scmp.eq.s32.totalorder %s24, 0
    %p192 = por %p190, %p191
    %p193 = scmp.ne.s32.totalorder %s181, %s182
    %p194 = scmp.eq.s32.totalorder %s25, 1
    %p195 = por %p193, %p194
    %p197 = scmp.ne.s32.totalorder %s182, %s196
    %p198 = scmp.eq.s32.totalorder %s25, 0
    %p199 = por %p197, %p198
    %s201 = sadd.s32 %s200, 1
    %p204 = scmp.eq.s32.totalorder %s19, 1
    %p205 = scmp.ne.s32.totalorder %s200, %s202
    %p206 = scmp.eq.s32.totalorder %s19, 0
    %p207 = por %p205, %p206
    %p208 = scmp.ne.s32.totalorder %s200, %s202
    %p209 = scmp.eq.s32.totalorder %s24, 1
    %p210 = por %p208, %p209
    %p211 = scmp.ne.s32.totalorder %s202, %s203
    %p212 = scmp.eq.s32.totalorder %s24, 0
    %p213 = por %p211, %p212
    %p214 = scmp.ne.s32.totalorder %s202, %s203
    %p215 = scmp.eq.s32.totalorder %s25, 1
    %p216 = por %p214, %p215
    %p218 = scmp.ne.s32.totalorder %s203, %s217
    %p219 = scmp.eq.s32.totalorder %s25, 0
    %p220 = por %p218, %p219
    %s222 = sadd.s32 %s221, 1
    %p225 = scmp.eq.s32.totalorder %s19, 1
    %p226 = scmp.ne.s32.totalorder %s221, %s223
    %p227 = scmp.eq.s32.totalorder %s19, 0
    %p228 = por %p226, %p227
    %p229 = scmp.ne.s32.totalorder %s221, %s223
    %p230 = scmp.eq.s32.totalorder %s24, 1
    %p231 = por %p229, %p230
    %p232 = scmp.ne.s32.totalorder %s223, %s224
    %p233 = scmp.eq.s32.totalorder %s24, 0
    %p234 = por %p232, %p233
    %p235 = scmp.ne.s32.totalorder %s223, %s224
    %p236 = scmp.eq.s32.totalorder %s25, 1
    %p237 = por %p235, %p236
    %p239 = scmp.ne.s32.totalorder %s224, %s238
    %p240 = scmp.eq.s32.totalorder %s25, 0
    %p241 = por %p239, %p240
    %s243 = sadd.s32 %s242, 1
    %p246 = scmp.eq.s32.totalorder %s19, 1
    %p247 = scmp.ne.s32.totalorder %s242, %s244
    %p248 = scmp.eq.s32.totalorder %s19, 0
    %p249 = por %p247, %p248
    %p250 = scmp.ne.s32.totalorder %s242, %s244
    %p251 = scmp.eq.s32.totalorder %s24, 1
    %p252 = por %p250, %p251
    %p253 = scmp.ne.s32.totalorder %s244, %s245
    %p254 = scmp.eq.s32.totalorder %s24, 0
    %p255 = por %p253, %p254
    %p256 = scmp.ne.s32.totalorder %s244, %s245
    %p257 = scmp.eq.s32.totalorder %s25, 1
    %p258 = por %p256, %p257
    %p260 = scmp.ne.s32.totalorder %s245, %s259
    %p261 = scmp.eq.s32.totalorder %s25, 0
    %p262 = por %p260, %p261
    %s264 = sadd.s32 %s263, 1
    %p267 = scmp.eq.s32.totalorder %s19, 1
    %p268 = scmp.ne.s32.totalorder %s263, %s265
    %p269 = scmp.eq.s32.totalorder %s19, 0
    %p270 = por %p268, %p269
    %p271 = scmp.ne.s32.totalorder %s263, %s265
    %p272 = scmp.eq.s32.totalorder %s24, 1
    %p273 = por %p271, %p272
    %p274 = scmp.ne.s32.totalorder %s265, %s266
    %p275 = scmp.eq.s32.totalorder %s24, 0
    %p276 = por %p274, %p275
    %p277 = scmp.ne.s32.totalorder %s265, %s266
    %p278 = scmp.eq.s32.totalorder %s25, 1
    %p279 = por %p277, %p278
    %p281 = scmp.ne.s32.totalorder %s266, %s280
    %p282 = scmp.eq.s32.totalorder %s25, 0
    %p283 = por %p281, %p282
    %s285 = sadd.s32 %s284, 1
    %p288 = scmp.eq.s32.totalorder %s19, 1
    %p289 = scmp.ne.s32.totalorder %s284, %s286
    %p290 = scmp.eq.s32.totalorder %s19, 0
    %p291 = por %p289, %p290
    %p292 = scmp.ne.s32.totalorder %s284, %s286
    %p293 = scmp.eq.s32.totalorder %s24, 1
    %p294 = por %p292, %p293
    %p295 = scmp.ne.s32.totalorder %s286, %s287
    %p296 = scmp.eq.s32.totalorder %s24, 0
    %p297 = por %p295, %p296
    %p298 = scmp.ne.s32.totalorder %s286, %s287
    %p299 = scmp.eq.s32.totalorder %s25, 1
    %p300 = por %p298, %p299
    %p302 = scmp.ne.s32.totalorder %s287, %s301
    %p303 = scmp.eq.s32.totalorder %s25, 0
    %p304 = por %p302, %p303
    %s305 = ssub.s32 %s19, %s26
    %p306 = scmp.eq.s32.totalorder %s305, 0
    %s308 = sadd.s32 %s307, 1
    %s309 = scalar_select %p306, %s307, %s308
    %p312 = pneg %p306
    %p313 = scmp.eq.s32.totalorder %s19, 1
    %p314 = por %p312, %p313
    %p315 = scmp.ne.s32.totalorder %s307, %s310
    %p316 = scmp.eq.s32.totalorder %s19, 0
    %p317 = por %p315, %p316
    %p318 = scmp.ne.s32.totalorder %s307, %s310
    %p319 = scmp.eq.s32.totalorder %s24, 1
    %p320 = por %p318, %p319
    %p321 = scmp.ne.s32.totalorder %s310, %s311
    %p322 = scmp.eq.s32.totalorder %s24, 0
    %p323 = por %p321, %p322
    %p324 = scmp.ne.s32.totalorder %s310, %s311
    %p325 = scmp.eq.s32.totalorder %s25, 1
    %p326 = por %p324, %p325
    %p328 = scmp.ne.s32.totalorder %s311, %s327
    %p329 = scmp.eq.s32.totalorder %s25, 0
    %p330 = por %p328, %p329
    %p331 = scmp.le.s32.totalorder 1, %s19
    %p332 = scmp.lt.s32.totalorder %s19, 3
    %p333 = pnand %p331, %p332
    %p334 = pneg %p333
    // Predicated region
    $region9: #{face_stgcn_forward.1} parent=5 // pred_check
      _
    $region10: #{face_stgcn_forward.1} parent=5 // pred_check_branch
      %336 = sbr.rel (%p333) target = $region12
    $region11: #{face_stgcn_forward.1} parent=5 // pred_region
      %s337 = ssub.s32 %s19, 1
      // Predicated region
      $region13: #{face_stgcn_forward.1} parent=11 // pred_check
        %p338 = pneg %p66
      $region14: #{face_stgcn_forward.1} parent=11 // pred_check_branch
        %340 = sbr.rel (%p338) target = $region16
      $region15: #{face_stgcn_forward.1} parent=11 // pred_region
        _
      $region16: #{face_stgcn_forward.1} parent=11 // pred_fallthru
        _
      // Predicated region
      $region17: #{face_stgcn_forward.1} parent=11 // pred_check
        %p341 = pneg %p87
      $region18: #{face_stgcn_forward.1} parent=11 // pred_check_branch
        %343 = sbr.rel (%p341) target = $region20
      $region19: #{face_stgcn_forward.1} parent=11 // pred_region
        _
      $region20: #{face_stgcn_forward.1} parent=11 // pred_fallthru
        _
      // Predicated region
      $region21: #{face_stgcn_forward.1} parent=11 // pred_check
        %p344 = pneg %p108
      $region22: #{face_stgcn_forward.1} parent=11 // pred_check_branch
        %346 = sbr.rel (%p344) target = $region24
      $region23: #{face_stgcn_forward.1} parent=11 // pred_region
        _
      $region24: #{face_stgcn_forward.1} parent=11 // pred_fallthru
        _
      // Predicated region
      $region25: #{face_stgcn_forward.1} parent=11 // pred_check
        %p347 = pneg %p129
      $region26: #{face_stgcn_forward.1} parent=11 // pred_check_branch
        %349 = sbr.rel (%p347) target = $region28
      $region27: #{face_stgcn_forward.1} parent=11 // pred_region
        _
      $region28: #{face_stgcn_forward.1} parent=11 // pred_fallthru
        _
      // Predicated region
      $region29: #{face_stgcn_forward.1} parent=11 // pred_check
        %p350 = pneg %p150
      $region30: #{face_stgcn_forward.1} parent=11 // pred_check_branch
        %352 = sbr.rel (%p350) target = $region32
      $region31: #{face_stgcn_forward.1} parent=11 // pred_region
        _
      $region32: #{face_stgcn_forward.1} parent=11 // pred_fallthru
        _
      // Predicated region
      $region33: #{face_stgcn_forward.1} parent=11 // pred_check
        %p353 = pneg %p171
      $region34: #{face_stgcn_forward.1} parent=11 // pred_check_branch
        %355 = sbr.rel (%p353) target = $region36
      $region35: #{face_stgcn_forward.1} parent=11 // pred_region
        _
      $region36: #{face_stgcn_forward.1} parent=11 // pred_fallthru
        _
      // Predicated region
      $region37: #{face_stgcn_forward.1} parent=11 // pred_check
        %p356 = pneg %p192
      $region38: #{face_stgcn_forward.1} parent=11 // pred_check_branch
        %358 = sbr.rel (%p356) target = $region40
      $region39: #{face_stgcn_forward.1} parent=11 // pred_region
        _
      $region40: #{face_stgcn_forward.1} parent=11 // pred_fallthru
        _
      // Predicated region
      $region41: #{face_stgcn_forward.1} parent=11 // pred_check
        %p359 = pneg %p213
      $region42: #{face_stgcn_forward.1} parent=11 // pred_check_branch
        %361 = sbr.rel (%p359) target = $region44
      $region43: #{face_stgcn_forward.1} parent=11 // pred_region
        _
      $region44: #{face_stgcn_forward.1} parent=11 // pred_fallthru
        _
      // Predicated region
      $region45: #{face_stgcn_forward.1} parent=11 // pred_check
        %p362 = pneg %p234
      $region46: #{face_stgcn_forward.1} parent=11 // pred_check_branch
        %364 = sbr.rel (%p362) target = $region48
      $region47: #{face_stgcn_forward.1} parent=11 // pred_region
        _
      $region48: #{face_stgcn_forward.1} parent=11 // pred_fallthru
        _
      // Predicated region
      $region49: #{face_stgcn_forward.1} parent=11 // pred_check
        %p365 = pneg %p255
      $region50: #{face_stgcn_forward.1} parent=11 // pred_check_branch
        %367 = sbr.rel (%p365) target = $region52
      $region51: #{face_stgcn_forward.1} parent=11 // pred_region
        _
      $region52: #{face_stgcn_forward.1} parent=11 // pred_fallthru
        _
      // Predicated region
      $region53: #{face_stgcn_forward.1} parent=11 // pred_check
        %p368 = pneg %p276
      $region54: #{face_stgcn_forward.1} parent=11 // pred_check_branch
        %370 = sbr.rel (%p368) target = $region56
      $region55: #{face_stgcn_forward.1} parent=11 // pred_region
        _
      $region56: #{face_stgcn_forward.1} parent=11 // pred_fallthru
        _
      // Predicated region
      $region57: #{face_stgcn_forward.1} parent=11 // pred_check
        %p371 = pneg %p297
      $region58: #{face_stgcn_forward.1} parent=11 // pred_check_branch
        %373 = sbr.rel (%p371) target = $region60
      $region59: #{face_stgcn_forward.1} parent=11 // pred_region
        _
      $region60: #{face_stgcn_forward.1} parent=11 // pred_fallthru
        _
    $region12: #{face_stgcn_forward.1} parent=5 // pred_fallthru
      _
    %p374 = scmp.lt.s32.totalorder %s19, 2
    // Predicated region
    $region61: #{face_stgcn_forward.1} parent=5 // pred_check
      %p375 = pneg %p374
    $region62: #{face_stgcn_forward.1} parent=5 // pred_check_branch
      %377 = sbr.rel (%p375) target = $region64
    $region63: #{face_stgcn_forward.1} parent=5 // pred_region
      // Predicated region
      $region65: #{face_stgcn_forward.1} parent=63 // pred_check
        %p378 = pneg %p39
      $region66: #{face_stgcn_forward.1} parent=63 // pred_check_branch
        %380 = sbr.rel (%p378) target = $region68
      $region67: #{face_stgcn_forward.1} parent=63 // pred_region
        %p381 = scmp.lt.s32.totalorder %s19, 1
        %s382 = scalar_select %p381, %s19, 1
        %s383 = smul.addr %s382, 16
        %s384 = smul.addr %s383, 8
        %s385 = scalar_lea.vmem %s0, %s384
      $region68: #{face_stgcn_forward.1} parent=63 // pred_fallthru
        _
    $region64: #{face_stgcn_forward.1} parent=5 // pred_fallthru
      _
    %p386 = scmp.le.s32.totalorder 1, %s19
    %p387 = scmp.lt.s32.totalorder %s19, 3
    %p388 = pnand %p386, %p387
    %p389 = pneg %p388
    // Predicated region
    $region69: #{face_stgcn_forward.1} parent=5 // pred_check
      _
    $region70: #{face_stgcn_forward.1} parent=5 // pred_check_branch
      %391 = sbr.rel (%p388) target = $region72
    $region71: #{face_stgcn_forward.1} parent=5 // pred_region
      %s392 = ssub.s32 %s19, 1
      %p393 = scmp.lt.s32.totalorder %s24, 1
      %s394 = scalar_select %p393, %s24, 1
      %s395 = smul.addr %s394, 16
      %s396 = smul.addr %s395, 8
      %s397 = scalar_lea.vmem %s0, %s396
      %p398 = pneg %p45
      %p399 = pneg %p42
      %p400 = pneg %p66
      %p401 = pneg %p63
      %p402 = pneg %p87
      %p403 = pneg %p84
      %p404 = pneg %p108
      %p405 = pneg %p105
      %p406 = pneg %p129
      %p407 = pneg %p126
      %p408 = pneg %p150
      %p409 = pneg %p147
      %p410 = pneg %p171
      %p411 = pneg %p168
      %p412 = pneg %p192
      %p413 = pneg %p189
      %p414 = pneg %p213
      %p415 = pneg %p210
      %p416 = pneg %p234
      %p417 = pneg %p231
      %p418 = pneg %p255
      %p419 = pneg %p252
      %p420 = pneg %p276
      %p421 = pneg %p273
      %p422 = pneg %p297
      %p423 = pneg %p294
      %p424 = pneg %p323
      %p425 = pneg %p320
      %p426 = scmp.lt.s32.totalorder %s24, 1
      %s427 = scalar_select %p426, %s24, 1
      %s428 = smul.addr %s427, 2
      %s429 = scalar_lea.vmem %s13, %s428
      %p430 = scmp.lt.s32.totalorder %s24, 1
      %s431 = scalar_select %p430, %s24, 1
      %s432 = smul.addr %s431, 16
      %s433 = smul.addr %s432, 8
      %s434 = scalar_lea.vmem %s0, %s433
      %p435 = scmp.lt.s32.totalorder %s24, 1
      %s436 = scalar_select %p435, %s24, 1
      %s437 = smul.addr %s436, 2
      %s438 = scalar_lea.vmem %s13, %s437
      %v440 = vld [vmem:[%s434] sm:$0xff]
      %v441 = vld [vmem:[%s434 + $0x8] sm:$0xff]
      %v442 = vld [vmem:[%s434 + $0x10] sm:$0xff]
      %v443 = vld [vmem:[%s434 + $0x18] sm:$0xff]
      %v444 = vld [vmem:[%s434 + $0x20] sm:$0xff]
      %v445 = vld [vmem:[%s434 + $0x28] sm:$0xff]
      %v446 = vld [vmem:[%s434 + $0x30] sm:$0xff]
      %v447 = vld [vmem:[%s434 + $0x38] sm:$0xff]
      %v448 = vld [vmem:[%s434 + $0x40] sm:$0xff]
      %v449 = vld [vmem:[%s434 + $0x48] sm:$0xff]
      %v450 = vld [vmem:[%s434 + $0x50] sm:$0xff]
      %v451 = vld [vmem:[%s434 + $0x58] sm:$0xff]
      %v452 = vld [vmem:[%s434 + $0x60] sm:$0xff]
      %v453 = vld [vmem:[%s434 + $0x68] sm:$0xff]
      %v454 = vld [vmem:[%s434 + $0x70] sm:$0xff]
      %v455 = vld [vmem:[%s434 + $0x78] sm:$0xff]
      %v456 = vpack.c.bf16 %v441, %v440
      %v457 = vpack.c.bf16 %v443, %v442
      %v458 = vpack.c.bf16 %v445, %v444
      %v459 = vpack.c.bf16 %v447, %v446
      %v460 = vpack.c.bf16 %v449, %v448
      %v461 = vpack.c.bf16 %v451, %v450
      %v462 = vpack.c.bf16 %v453, %v452
      %v463 = vpack.c.bf16 %v455, %v454
      %v464 = vld [vmem:[%s2] sm:$0xff]
      %v465 = vld [vmem:[%s2 + $0x8] sm:$0xff]
      %v466 = vld [vmem:[%s2 + $0x10] sm:$0xff]
      %v467 = vld [vmem:[%s2 + $0x18] sm:$0xff]
      %v472 = vunpack.c.l.b16 %v464
      %v473 = vunpack.c.h.b16 %v464
      %v474 = vunpack.c.l.b16 %v465
      %v475 = vunpack.c.h.b16 %v465
      %v476 = vunpack.c.l.b16 %v466
      %v477 = vunpack.c.h.b16 %v466
      %v478 = vunpack.c.l.b16 %v467
      %v479 = vunpack.c.h.b16 %v467
      %v480 = vpack.c.b16 %v474, %v472
      %v481 = vpack.c.b16 %v475, %v473
      %v482 = vpack.c.b16 %v478, %v476
      %v483 = vpack.c.b16 %v479, %v477
      %vm488 = vcmask 261120
      %v490 = vsel %vm488, %v456, 0
      %v493 = vsel %vm488, %v457, 0
      %v496 = vsel %vm488, %v458, 0
      %v499 = vsel %vm488, %v459, 0
      %v502 = vsel %vm488, %v460, 0
      %v505 = vsel %vm488, %v461, 0
      %v508 = vsel %vm488, %v462, 0
      %v511 = vsel %vm488, %v463, 0
      %513 = vmatpush.bf16.msra.mxu0 0
      %514 = vmatpush.bf16.msra.mxu0 0
      %515 = vmatpush.bf16.msra.mxu0 0
      %516 = vmatpush.bf16.msra.mxu0 0
      %517 = vmatpush.bf16.msra.mxu0 0
      %518 = vmatpush.bf16.msra.mxu0 0
      %519 = vmatpush.bf16.msra.mxu0 %v482
      %520 = vmatpush.bf16.msra.mxu0 %v480
      %521 = vmatmul.bf16.gmra.mxu0 %v490
      %v522 = vpop.f32.mrf.mxu0
      %v523 = vadd.f32 0.0, %v522
      %v524 = vpop.f32.mrf.mxu0
      %v525 = vadd.f32 0.0, %v524
      %526 = vmatmul.bf16.gmra.mxu0 %v493
      %v527 = vpop.f32.mrf.mxu0
      %v528 = vadd.f32 0.0, %v527
      %v529 = vpop.f32.mrf.mxu0
      %v530 = vadd.f32 0.0, %v529
      %531 = vmatmul.bf16.gmra.mxu0 %v496
      %v532 = vpop.f32.mrf.mxu0
      %v533 = vadd.f32 0.0, %v532
      %v534 = vpop.f32.mrf.mxu0
      %v535 = vadd.f32 0.0, %v534
      %536 = vmatmul.bf16.gmra.mxu0 %v499
      %v537 = vpop.f32.mrf.mxu0
      %v538 = vadd.f32 0.0, %v537
      %v539 = vpop.f32.mrf.mxu0
      %v540 = vadd.f32 0.0, %v539
      %541 = vmatmul.bf16.gmra.mxu0 %v502
      %v542 = vpop.f32.mrf.mxu0
      %v543 = vadd.f32 0.0, %v542
      %v544 = vpop.f32.mrf.mxu0
      %v545 = vadd.f32 0.0, %v544
      %546 = vmatmul.bf16.gmra.mxu0 %v505
      %v547 = vpop.f32.mrf.mxu0
      %v548 = vadd.f32 0.0, %v547
      %v549 = vpop.f32.mrf.mxu0
      %v550 = vadd.f32 0.0, %v549
      %551 = vmatmul.bf16.gmra.mxu0 %v508
      %v552 = vpop.f32.mrf.mxu0
      %v553 = vadd.f32 0.0, %v552
      %v554 = vpop.f32.mrf.mxu0
      %v555 = vadd.f32 0.0, %v554
      %556 = vmatmul.bf16.gmra.mxu0 %v511
      %v557 = vpop.f32.mrf.mxu0
      %v558 = vadd.f32 0.0, %v557
      %v559 = vpop.f32.mrf.mxu0
      %v560 = vadd.f32 0.0, %v559
      %561 = vdwg.mxu0
      %562 = vmatpush.bf16.msra.mxu0 0
      %563 = vmatpush.bf16.msra.mxu0 0
      %564 = vmatpush.bf16.msra.mxu0 0
      %565 = vmatpush.bf16.msra.mxu0 0
      %566 = vmatpush.bf16.msra.mxu0 0
      %567 = vmatpush.bf16.msra.mxu0 0
      %568 = vmatpush.bf16.msra.mxu0 %v483
      %569 = vmatpush.bf16.msra.mxu0 %v481
      %570 = vmatmul.bf16.gmra.mxu0 %v490
      %v571 = vpop.f32.mrf.mxu0
      %v572 = vadd.f32 0.0, %v571
      %v573 = vpop.f32.mrf.mxu0
      %v574 = vadd.f32 0.0, %v573
      %575 = vmatmul.bf16.gmra.mxu0 %v493
      %v576 = vpop.f32.mrf.mxu0
      %v577 = vadd.f32 0.0, %v576
      %v578 = vpop.f32.mrf.mxu0
      %v579 = vadd.f32 0.0, %v578
      %580 = vmatmul.bf16.gmra.mxu0 %v496
      %v581 = vpop.f32.mrf.mxu0
      %v582 = vadd.f32 0.0, %v581
      %v583 = vpop.f32.mrf.mxu0
      %v584 = vadd.f32 0.0, %v583
      %585 = vmatmul.bf16.gmra.mxu0 %v499
      %v586 = vpop.f32.mrf.mxu0
      %v587 = vadd.f32 0.0, %v586
      %v588 = vpop.f32.mrf.mxu0
      %v589 = vadd.f32 0.0, %v588
      %590 = vmatmul.bf16.gmra.mxu0 %v502
      %v591 = vpop.f32.mrf.mxu0
      %v592 = vadd.f32 0.0, %v591
      %v593 = vpop.f32.mrf.mxu0
      %v594 = vadd.f32 0.0, %v593
      %595 = vmatmul.bf16.gmra.mxu0 %v505
      %v596 = vpop.f32.mrf.mxu0
      %v597 = vadd.f32 0.0, %v596
      %v598 = vpop.f32.mrf.mxu0
      %v599 = vadd.f32 0.0, %v598
      %600 = vmatmul.bf16.gmra.mxu0 %v508
      %v601 = vpop.f32.mrf.mxu0
      %v602 = vadd.f32 0.0, %v601
      %v603 = vpop.f32.mrf.mxu0
      %v604 = vadd.f32 0.0, %v603
      %605 = vmatmul.bf16.gmra.mxu0 %v511
      %v606 = vpop.f32.mrf.mxu0
      %v607 = vadd.f32 0.0, %v606
      %v608 = vpop.f32.mrf.mxu0
      %v609 = vadd.f32 0.0, %v608
      %610 = vdwg.mxu0
      %v611 = vld [vmem:[%s1] sm:$0xf]
      %v612 = vld [vmem:[%s1 + $0x4] sm:$0xf]
      %v613 = vld [vmem:[%s1 + $0x8] sm:$0xf]
      %v614 = vld [vmem:[%s1 + $0xc] sm:$0xf]
      %v615 = vld [vmem:[%s1 + $0x10] sm:$0xf]
      %v616 = vld [vmem:[%s1 + $0x14] sm:$0xf]
      %v617 = vld [vmem:[%s1 + $0x18] sm:$0xf]
      %v618 = vld [vmem:[%s1 + $0x1c] sm:$0xf]
      %v619 = vld [vmem:[%s1 + $0x20] sm:$0xf]
      %v620 = vld [vmem:[%s1 + $0x24] sm:$0xf]
      %v621 = vld [vmem:[%s1 + $0x28] sm:$0xf]
      %v622 = vld [vmem:[%s1 + $0x2c] sm:$0xf]
      %v623 = vld [vmem:[%s1 + $0x30] sm:$0xf]
      %v624 = vld [vmem:[%s1 + $0x34] sm:$0xf]
      %v625 = vld [vmem:[%s1 + $0x38] sm:$0xf]
      %v626 = vld [vmem:[%s1 + $0x3c] sm:$0xf]
      %v627 = vpack.c.bf16 %v525, %v523
      %v628 = vpack.c.bf16 %v574, %v572
      %v629 = vpack.c.bf16 %v530, %v528
      %v630 = vpack.c.bf16 %v579, %v577
      %v631 = vpack.c.bf16 %v535, %v533
      %v632 = vpack.c.bf16 %v584, %v582
      %v633 = vpack.c.bf16 %v540, %v538
      %v634 = vpack.c.bf16 %v589, %v587
      %v635 = vpack.c.bf16 %v545, %v543
      %v636 = vpack.c.bf16 %v594, %v592
      %v637 = vpack.c.bf16 %v550, %v548
      %v638 = vpack.c.bf16 %v599, %v597
      %v639 = vpack.c.bf16 %v555, %v553
      %v640 = vpack.c.bf16 %v604, %v602
      %v641 = vpack.c.bf16 %v560, %v558
      %v642 = vpack.c.bf16 %v609, %v607
      %v643 = vld [vmem:[%s3] sm:$0x3]
      %v645 = vperm.slane %v643, 0
      %v646 = vperm.slane %v643, 1
      %v665 = vunpack.c.l.b16 %v611
      %v666 = vunpack.c.l.b16 %v612
      %v667 = vunpack.c.l.b16 %v613
      %v668 = vunpack.c.l.b16 %v614
      %v669 = vunpack.c.l.b16 %v615
      %v670 = vunpack.c.l.b16 %v616
      %v671 = vunpack.c.l.b16 %v617
      %v672 = vunpack.c.l.b16 %v618
      %v673 = vunpack.c.l.b16 %v619
      %v674 = vunpack.c.l.b16 %v620
      %v675 = vunpack.c.l.b16 %v621
      %v676 = vunpack.c.l.b16 %v622
      %v677 = vunpack.c.l.b16 %v623
      %v678 = vunpack.c.l.b16 %v624
      %v679 = vunpack.c.l.b16 %v625
      %v680 = vunpack.c.l.b16 %v626
      %v681 = vpack.c.b16 %v666, %v665
      %v682 = vpack.c.b16 %v668, %v667
      %v683 = vpack.c.b16 %v670, %v669
      %v684 = vpack.c.b16 %v672, %v671
      %v685 = vpack.c.b16 %v674, %v673
      %v686 = vpack.c.b16 %v676, %v675
      %v687 = vpack.c.b16 %v678, %v677
      %v688 = vpack.c.b16 %v680, %v679
      %697 = vmatpush.bf16.msra.mxu0 %v641
      %698 = vmatpush.bf16.msra.mxu0 %v639
      %699 = vmatpush.bf16.msra.mxu0 %v637
      %700 = vmatpush.bf16.msra.mxu0 %v635
      %701 = vmatpush.bf16.msra.mxu0 %v633
      %702 = vmatpush.bf16.msra.mxu0 %v631
      %703 = vmatpush.bf16.msra.mxu0 %v629
      %704 = vmatpush.bf16.msra.mxu0 %v627
      %705 = vmatmul.bf16.gmra.mxu0 %v681
      %v706 = vpop.f32.mrf.mxu0
      %v707 = vadd.f32 %v645, %v706
      %v708 = vpop.f32.mrf.mxu0
      %v709 = vadd.f32 %v645, %v708
      %710 = vmatmul.bf16.gmra.mxu0 %v682
      %v711 = vpop.f32.mrf.mxu0
      %v712 = vadd.f32 %v645, %v711
      %v713 = vpop.f32.mrf.mxu0
      %v714 = vadd.f32 %v645, %v713
      %715 = vmatmul.bf16.gmra.mxu0 %v683
      %v716 = vpop.f32.mrf.mxu0
      %v717 = vadd.f32 %v645, %v716
      %v718 = vpop.f32.mrf.mxu0
      %v719 = vadd.f32 %v645, %v718
      %720 = vmatmul.bf16.gmra.mxu0 %v684
      %v721 = vpop.f32.mrf.mxu0
      %v722 = vadd.f32 %v645, %v721
      %v723 = vpop.f32.mrf.mxu0
      %v724 = vadd.f32 %v645, %v723
      %725 = vmatmul.bf16.gmra.mxu0 %v685
      %v726 = vpop.f32.mrf.mxu0
      %v727 = vadd.f32 %v645, %v726
      %v728 = vpop.f32.mrf.mxu0
      %v729 = vadd.f32 %v645, %v728
      %730 = vmatmul.bf16.gmra.mxu0 %v686
      %v731 = vpop.f32.mrf.mxu0
      %v732 = vadd.f32 %v645, %v731
      %v733 = vpop.f32.mrf.mxu0
      %v734 = vadd.f32 %v645, %v733
      %735 = vmatmul.bf16.gmra.mxu0 %v687
      %v736 = vpop.f32.mrf.mxu0
      %v737 = vadd.f32 %v645, %v736
      %v738 = vpop.f32.mrf.mxu0
      %v739 = vadd.f32 %v645, %v738
      %740 = vmatmul.bf16.gmra.mxu0 %v688
      %v741 = vpop.f32.mrf.mxu0
      %v742 = vadd.f32 %v645, %v741
      %v743 = vpop.f32.mrf.mxu0
      %v744 = vadd.f32 %v645, %v743
      %745 = vdwg.mxu0
      %746 = vmatpush.bf16.msra.mxu0 %v642
      %747 = vmatpush.bf16.msra.mxu0 %v640
      %748 = vmatpush.bf16.msra.mxu0 %v638
      %749 = vmatpush.bf16.msra.mxu0 %v636
      %750 = vmatpush.bf16.msra.mxu0 %v634
      %751 = vmatpush.bf16.msra.mxu0 %v632
      %752 = vmatpush.bf16.msra.mxu0 %v630
      %753 = vmatpush.bf16.msra.mxu0 %v628
      %754 = vmatmul.bf16.gmra.mxu0 %v681
      %v755 = vpop.f32.mrf.mxu0
      %v756 = vadd.f32 %v646, %v755
      %v757 = vpop.f32.mrf.mxu0
      %v758 = vadd.f32 %v646, %v757
      %759 = vmatmul.bf16.gmra.mxu0 %v682
      %v760 = vpop.f32.mrf.mxu0
      %v761 = vadd.f32 %v646, %v760
      %v762 = vpop.f32.mrf.mxu0
      %v763 = vadd.f32 %v646, %v762
      %764 = vmatmul.bf16.gmra.mxu0 %v683
      %v765 = vpop.f32.mrf.mxu0
      %v766 = vadd.f32 %v646, %v765
      %v767 = vpop.f32.mrf.mxu0
      %v768 = vadd.f32 %v646, %v767
      %769 = vmatmul.bf16.gmra.mxu0 %v684
      %v770 = vpop.f32.mrf.mxu0
      %v771 = vadd.f32 %v646, %v770
      %v772 = vpop.f32.mrf.mxu0
      %v773 = vadd.f32 %v646, %v772
      %774 = vmatmul.bf16.gmra.mxu0 %v685
      %v775 = vpop.f32.mrf.mxu0
      %v776 = vadd.f32 %v646, %v775
      %v777 = vpop.f32.mrf.mxu0
      %v778 = vadd.f32 %v646, %v777
      %779 = vmatmul.bf16.gmra.mxu0 %v686
      %v780 = vpop.f32.mrf.mxu0
      %v781 = vadd.f32 %v646, %v780
      %v782 = vpop.f32.mrf.mxu0
      %v783 = vadd.f32 %v646, %v782
      %784 = vmatmul.bf16.gmra.mxu0 %v687
      %v785 = vpop.f32.mrf.mxu0
      %v786 = vadd.f32 %v646, %v785
      %v787 = vpop.f32.mrf.mxu0
      %v788 = vadd.f32 %v646, %v787
      %789 = vmatmul.bf16.gmra.mxu0 %v688
      %v790 = vpop.f32.mrf.mxu0
      %v791 = vadd.f32 %v646, %v790
      %v792 = vpop.f32.mrf.mxu0
      %v793 = vadd.f32 %v646, %v792
      %794 = vdwg.mxu0
      %v795 = vmax.f32 %v707, 0.0
      %v796 = vmax.f32 %v756, 0.0
      %v797 = vmax.f32 %v709, 0.0
      %v798 = vmax.f32 %v758, 0.0
      %v799 = vmax.f32 %v712, 0.0
      %v800 = vmax.f32 %v761, 0.0
      %v801 = vmax.f32 %v714, 0.0
      %v802 = vmax.f32 %v763, 0.0
      %v803 = vmax.f32 %v717, 0.0
      %v804 = vmax.f32 %v766, 0.0
      %v805 = vmax.f32 %v719, 0.0
      %v806 = vmax.f32 %v768, 0.0
      %v807 = vmax.f32 %v722, 0.0
      %v808 = vmax.f32 %v771, 0.0
      %v809 = vmax.f32 %v724, 0.0
      %v810 = vmax.f32 %v773, 0.0
      %v811 = vmax.f32 %v727, 0.0
      %v812 = vmax.f32 %v776, 0.0
      %v813 = vmax.f32 %v729, 0.0
      %v814 = vmax.f32 %v778, 0.0
      %v815 = vmax.f32 %v732, 0.0
      %v816 = vmax.f32 %v781, 0.0
      %v817 = vmax.f32 %v734, 0.0
      %v818 = vmax.f32 %v783, 0.0
      %v819 = vmax.f32 %v737, 0.0
      %v820 = vmax.f32 %v786, 0.0
      %v821 = vmax.f32 %v739, 0.0
      %v822 = vmax.f32 %v788, 0.0
      %v823 = vmax.f32 %v742, 0.0
      %v824 = vmax.f32 %v791, 0.0
      %v825 = vmax.f32 %v744, 0.0
      %v826 = vmax.f32 %v793, 0.0
      %v827 = vpack.c.bf16 %v797, %v795
      %v828 = vpack.c.bf16 %v798, %v796
      %v829 = vpack.c.bf16 %v801, %v799
      %v830 = vpack.c.bf16 %v802, %v800
      %v831 = vpack.c.bf16 %v805, %v803
      %v832 = vpack.c.bf16 %v806, %v804
      %v833 = vpack.c.bf16 %v809, %v807
      %v834 = vpack.c.bf16 %v810, %v808
      %v835 = vpack.c.bf16 %v813, %v811
      %v836 = vpack.c.bf16 %v814, %v812
      %v837 = vpack.c.bf16 %v817, %v815
      %v838 = vpack.c.bf16 %v818, %v816
      %v839 = vpack.c.bf16 %v821, %v819
      %v840 = vpack.c.bf16 %v822, %v820
      %v841 = vpack.c.bf16 %v825, %v823
      %v842 = vpack.c.bf16 %v826, %v824
      %v843 = vld [vmem:[%s4] sm:$0xff]
      %v844 = vld [vmem:[%s4 + $0x8] sm:$0xff]
      %v845 = vld [vmem:[%s4 + $0x10] sm:$0xff]
      %v846 = vld [vmem:[%s4 + $0x18] sm:$0xff]
      %v847 = vld [vmem:[%s4 + $0x20] sm:$0xff]
      %v848 = vld [vmem:[%s4 + $0x28] sm:$0xff]
      %v849 = vld [vmem:[%s4 + $0x30] sm:$0xff]
      %v850 = vld [vmem:[%s4 + $0x38] sm:$0xff]
      %v851 = vld [vmem:[%s4 + $0x40] sm:$0xff]
      %v852 = vld [vmem:[%s4 + $0x48] sm:$0xff]
      %v853 = vld [vmem:[%s4 + $0x50] sm:$0xff]
      %v854 = vld [vmem:[%s4 + $0x58] sm:$0xff]
      %v855 = vld [vmem:[%s4 + $0x60] sm:$0xff]
      %v856 = vld [vmem:[%s4 + $0x68] sm:$0xff]
      %v857 = vld [vmem:[%s4 + $0x70] sm:$0xff]
      %v858 = vld [vmem:[%s4 + $0x78] sm:$0xff]
      %v859 = vld [vmem:[%s4 + $0x80] sm:$0xff]
      %v860 = vld [vmem:[%s4 + $0x88] sm:$0xff]
      %v861 = vld [vmem:[%s4 + $0x90] sm:$0xff]
      %v862 = vld [vmem:[%s4 + $0x98] sm:$0xff]
      %v863 = vld [vmem:[%s4 + $0xa0] sm:$0xff]
      %v864 = vld [vmem:[%s4 + $0xa8] sm:$0xff]
      %v865 = vld [vmem:[%s4 + $0xb0] sm:$0xff]
      %v866 = vld [vmem:[%s4 + $0xb8] sm:$0xff]
      %v867 = vld [vmem:[%s4 + $0xc0] sm:$0xff]
      %v868 = vld [vmem:[%s4 + $0xc8] sm:$0xff]
      %v869 = vld [vmem:[%s4 + $0xd0] sm:$0xff]
      %v870 = vld [vmem:[%s4 + $0xd8] sm:$0xff]
      %v871 = vld [vmem:[%s4 + $0xe0] sm:$0xff]
      %v872 = vld [vmem:[%s4 + $0xe8] sm:$0xff]
      %v873 = vld [vmem:[%s4 + $0xf0] sm:$0xff]
      %v874 = vld [vmem:[%s4 + $0xf8] sm:$0xff]
      %v907 = vunpack.c.l.b16 %v843
      %v908 = vunpack.c.h.b16 %v843
      %v909 = vunpack.c.l.b16 %v844
      %v910 = vunpack.c.h.b16 %v844
      %v911 = vunpack.c.l.b16 %v845
      %v912 = vunpack.c.h.b16 %v845
      %v913 = vunpack.c.l.b16 %v846
      %v914 = vunpack.c.h.b16 %v846
      %v915 = vunpack.c.l.b16 %v847
      %v916 = vunpack.c.h.b16 %v847
      %v917 = vunpack.c.l.b16 %v848
      %v918 = vunpack.c.h.b16 %v848
      %v919 = vunpack.c.l.b16 %v849
      %v920 = vunpack.c.h.b16 %v849
      %v921 = vunpack.c.l.b16 %v850
      %v922 = vunpack.c.h.b16 %v850
      %v923 = vunpack.c.l.b16 %v851
      %v924 = vunpack.c.h.b16 %v851
      %v925 = vunpack.c.l.b16 %v852
      %v926 = vunpack.c.h.b16 %v852
      %v927 = vunpack.c.l.b16 %v853
      %v928 = vunpack.c.h.b16 %v853
      %v929 = vunpack.c.l.b16 %v854
      %v930 = vunpack.c.h.b16 %v854
      %v931 = vunpack.c.l.b16 %v855
      %v932 = vunpack.c.h.b16 %v855
      %v933 = vunpack.c.l.b16 %v856
      %v934 = vunpack.c.h.b16 %v856
      %v935 = vunpack.c.l.b16 %v857
      %v936 = vunpack.c.h.b16 %v857
      %v937 = vunpack.c.l.b16 %v858
      %v938 = vunpack.c.h.b16 %v858
      %v939 = vunpack.c.l.b16 %v859
      %v940 = vunpack.c.h.b16 %v859
      %v941 = vunpack.c.l.b16 %v860
      %v942 = vunpack.c.h.b16 %v860
      %v943 = vunpack.c.l.b16 %v861
      %v944 = vunpack.c.h.b16 %v861
      %v945 = vunpack.c.l.b16 %v862
      %v946 = vunpack.c.h.b16 %v862
      %v947 = vunpack.c.l.b16 %v863
      %v948 = vunpack.c.h.b16 %v863
      %v949 = vunpack.c.l.b16 %v864
      %v950 = vunpack.c.h.b16 %v864
      %v951 = vunpack.c.l.b16 %v865
      %v952 = vunpack.c.h.b16 %v865
      %v953 = vunpack.c.l.b16 %v866
      %v954 = vunpack.c.h.b16 %v866
      %v955 = vunpack.c.l.b16 %v867
      %v956 = vunpack.c.h.b16 %v867
      %v957 = vunpack.c.l.b16 %v868
      %v958 = vunpack.c.h.b16 %v868
      %v959 = vunpack.c.l.b16 %v869
      %v960 = vunpack.c.h.b16 %v869
      %v961 = vunpack.c.l.b16 %v870
      %v962 = vunpack.c.h.b16 %v870
      %v963 = vunpack.c.l.b16 %v871
      %v964 = vunpack.c.h.b16 %v871
      %v965 = vunpack.c.l.b16 %v872
      %v966 = vunpack.c.h.b16 %v872
      %v967 = vunpack.c.l.b16 %v873
      %v968 = vunpack.c.h.b16 %v873
      %v969 = vunpack.c.l.b16 %v874
      %v970 = vunpack.c.h.b16 %v874
      %v971 = vpack.c.b16 %v909, %v907
      %v972 = vpack.c.b16 %v910, %v908
      %v973 = vpack.c.b16 %v913, %v911
      %v974 = vpack.c.b16 %v914, %v912
      %v975 = vpack.c.b16 %v917, %v915
      %v976 = vpack.c.b16 %v918, %v916
      %v977 = vpack.c.b16 %v921, %v919
      %v978 = vpack.c.b16 %v922, %v920
      %v979 = vpack.c.b16 %v925, %v923
      %v980 = vpack.c.b16 %v926, %v924
      %v981 = vpack.c.b16 %v929, %v927
      %v982 = vpack.c.b16 %v930, %v928
      %v983 = vpack.c.b16 %v933, %v931
      %v984 = vpack.c.b16 %v934, %v932
      %v985 = vpack.c.b16 %v937, %v935
      %v986 = vpack.c.b16 %v938, %v936
      %v987 = vpack.c.b16 %v941, %v939
      %v988 = vpack.c.b16 %v942, %v940
      %v989 = vpack.c.b16 %v945, %v943
      %v990 = vpack.c.b16 %v946, %v944
      %v991 = vpack.c.b16 %v949, %v947
      %v992 = vpack.c.b16 %v950, %v948
      %v993 = vpack.c.b16 %v953, %v951
      %v994 = vpack.c.b16 %v954, %v952
      %v995 = vpack.c.b16 %v957, %v955
      %v996 = vpack.c.b16 %v958, %v956
      %v997 = vpack.c.b16 %v961, %v959
      %v998 = vpack.c.b16 %v962, %v960
      %v999 = vpack.c.b16 %v965, %v963
      %v1000 = vpack.c.b16 %v966, %v964
      %v1001 = vpack.c.b16 %v969, %v967
      %v1002 = vpack.c.b16 %v970, %v968
      %1035 = vmatpush.bf16.msra.mxu0 %v985
      %1036 = vmatpush.bf16.msra.mxu0 %v983
      %1037 = vmatpush.bf16.msra.mxu0 %v981
      %1038 = vmatpush.bf16.msra.mxu0 %v979
      %1039 = vmatpush.bf16.msra.mxu0 %v977
      %1040 = vmatpush.bf16.msra.mxu0 %v975
      %1041 = vmatpush.bf16.msra.mxu0 %v973
      %1042 = vmatpush.bf16.msra.mxu0 %v971
      %1043 = vmatmul.bf16.gmra.mxu0 %v827
      %v1044 = vpop.f32.mrf.mxu0
      %v1045 = vadd.f32 0.0, %v1044
      %v1046 = vpop.f32.mrf.mxu0
      %v1047 = vadd.f32 0.0, %v1046
      %1048 = vmatmul.bf16.gmra.mxu0 %v829
      %v1049 = vpop.f32.mrf.mxu0
      %v1050 = vadd.f32 0.0, %v1049
      %v1051 = vpop.f32.mrf.mxu0
      %v1052 = vadd.f32 0.0, %v1051
      %1053 = vmatmul.bf16.gmra.mxu0 %v831
      %v1054 = vpop.f32.mrf.mxu0
      %v1055 = vadd.f32 0.0, %v1054
      %v1056 = vpop.f32.mrf.mxu0
      %v1057 = vadd.f32 0.0, %v1056
      %1058 = vmatmul.bf16.gmra.mxu0 %v833
      %v1059 = vpop.f32.mrf.mxu0
      %v1060 = vadd.f32 0.0, %v1059
      %v1061 = vpop.f32.mrf.mxu0
      %v1062 = vadd.f32 0.0, %v1061
      %1063 = vmatmul.bf16.gmra.mxu0 %v835
      %v1064 = vpop.f32.mrf.mxu0
      %v1065 = vadd.f32 0.0, %v1064
      %v1066 = vpop.f32.mrf.mxu0
      %v1067 = vadd.f32 0.0, %v1066
      %1068 = vmatmul.bf16.gmra.mxu0 %v837
      %v1069 = vpop.f32.mrf.mxu0
      %v1070 = vadd.f32 0.0, %v1069
      %v1071 = vpop.f32.mrf.mxu0
      %v1072 = vadd.f32 0.0, %v1071
      %1073 = vmatmul.bf16.gmra.mxu0 %v839
      %v1074 = vpop.f32.mrf.mxu0
      %v1075 = vadd.f32 0.0, %v1074
      %v1076 = vpop.f32.mrf.mxu0
      %v1077 = vadd.f32 0.0, %v1076
      %1078 = vmatmul.bf16.gmra.mxu0 %v841
      %v1079 = vpop.f32.mrf.mxu0
      %v1080 = vadd.f32 0.0, %v1079
      %v1081 = vpop.f32.mrf.mxu0
      %v1082 = vadd.f32 0.0, %v1081
      %1083 = vdwg.mxu0
      %1084 = vmatpush.bf16.msra.mxu0 %v1001
      %1085 = vmatpush.bf16.msra.mxu0 %v999
      %1086 = vmatpush.bf16.msra.mxu0 %v997
      %1087 = vmatpush.bf16.msra.mxu0 %v995
      %1088 = vmatpush.bf16.msra.mxu0 %v993
      %1089 = vmatpush.bf16.msra.mxu0 %v991
      %1090 = vmatpush.bf16.msra.mxu0 %v989
      %1091 = vmatpush.bf16.msra.mxu0 %v987
      %1092 = vmatmul.bf16.gmra.mxu0 %v828
      %v1093 = vpop.f32.mrf.mxu0
      %v1094 = vadd.f32 %v1045, %v1093
      %v1095 = vpop.f32.mrf.mxu0
      %v1096 = vadd.f32 %v1047, %v1095
      %1097 = vmatmul.bf16.gmra.mxu0 %v830
      %v1098 = vpop.f32.mrf.mxu0
      %v1099 = vadd.f32 %v1050, %v1098
      %v1100 = vpop.f32.mrf.mxu0
      %v1101 = vadd.f32 %v1052, %v1100
      %1102 = vmatmul.bf16.gmra.mxu0 %v832
      %v1103 = vpop.f32.mrf.mxu0
      %v1104 = vadd.f32 %v1055, %v1103
      %v1105 = vpop.f32.mrf.mxu0
      %v1106 = vadd.f32 %v1057, %v1105
      %1107 = vmatmul.bf16.gmra.mxu0 %v834
      %v1108 = vpop.f32.mrf.mxu0
      %v1109 = vadd.f32 %v1060, %v1108
      %v1110 = vpop.f32.mrf.mxu0
      %v1111 = vadd.f32 %v1062, %v1110
      %1112 = vmatmul.bf16.gmra.mxu0 %v836
      %v1113 = vpop.f32.mrf.mxu0
      %v1114 = vadd.f32 %v1065, %v1113
      %v1115 = vpop.f32.mrf.mxu0
      %v1116 = vadd.f32 %v1067, %v1115
      %1117 = vmatmul.bf16.gmra.mxu0 %v838
      %v1118 = vpop.f32.mrf.mxu0
      %v1119 = vadd.f32 %v1070, %v1118
      %v1120 = vpop.f32.mrf.mxu0
      %v1121 = vadd.f32 %v1072, %v1120
      %1122 = vmatmul.bf16.gmra.mxu0 %v840
      %v1123 = vpop.f32.mrf.mxu0
      %v1124 = vadd.f32 %v1075, %v1123
      %v1125 = vpop.f32.mrf.mxu0
      %v1126 = vadd.f32 %v1077, %v1125
      %1127 = vmatmul.bf16.gmra.mxu0 %v842
      %v1128 = vpop.f32.mrf.mxu0
      %v1129 = vadd.f32 %v1080, %v1128
      %v1130 = vpop.f32.mrf.mxu0
      %v1131 = vadd.f32 %v1082, %v1130
      %1132 = vdwg.mxu0
      %1133 = vmatpush.bf16.msra.mxu0 %v986
      %1134 = vmatpush.bf16.msra.mxu0 %v984
      %1135 = vmatpush.bf16.msra.mxu0 %v982
      %1136 = vmatpush.bf16.msra.mxu0 %v980
      %1137 = vmatpush.bf16.msra.mxu0 %v978
      %1138 = vmatpush.bf16.msra.mxu0 %v976
      %1139 = vmatpush.bf16.msra.mxu0 %v974
      %1140 = vmatpush.bf16.msra.mxu0 %v972
      %1141 = vmatmul.bf16.gmra.mxu0 %v827
      %v1142 = vpop.f32.mrf.mxu0
      %v1143 = vadd.f32 0.0, %v1142
      %v1144 = vpop.f32.mrf.mxu0
      %v1145 = vadd.f32 0.0, %v1144
      %1146 = vmatmul.bf16.gmra.mxu0 %v829
      %v1147 = vpop.f32.mrf.mxu0
      %v1148 = vadd.f32 0.0, %v1147
      %v1149 = vpop.f32.mrf.mxu0
      %v1150 = vadd.f32 0.0, %v1149
      %1151 = vmatmul.bf16.gmra.mxu0 %v831
      %v1152 = vpop.f32.mrf.mxu0
      %v1153 = vadd.f32 0.0, %v1152
      %v1154 = vpop.f32.mrf.mxu0
      %v1155 = vadd.f32 0.0, %v1154
      %1156 = vmatmul.bf16.gmra.mxu0 %v833
      %v1157 = vpop.f32.mrf.mxu0
      %v1158 = vadd.f32 0.0, %v1157
      %v1159 = vpop.f32.mrf.mxu0
      %v1160 = vadd.f32 0.0, %v1159
      %1161 = vmatmul.bf16.gmra.mxu0 %v835
      %v1162 = vpop.f32.mrf.mxu0
      %v1163 = vadd.f32 0.0, %v1162
      %v1164 = vpop.f32.mrf.mxu0
      %v1165 = vadd.f32 0.0, %v1164
      %1166 = vmatmul.bf16.gmra.mxu0 %v837
      %v1167 = vpop.f32.mrf.mxu0
      %v1168 = vadd.f32 0.0, %v1167
      %v1169 = vpop.f32.mrf.mxu0
      %v1170 = vadd.f32 0.0, %v1169
      %1171 = vmatmul.bf16.gmra.mxu0 %v839
      %v1172 = vpop.f32.mrf.mxu0
      %v1173 = vadd.f32 0.0, %v1172
      %v1174 = vpop.f32.mrf.mxu0
      %v1175 = vadd.f32 0.0, %v1174
      %1176 = vmatmul.bf16.gmra.mxu0 %v841
      %v1177 = vpop.f32.mrf.mxu0
      %v1178 = vadd.f32 0.0, %v1177
      %v1179 = vpop.f32.mrf.mxu0
      %v1180 = vadd.f32 0.0, %v1179
      %1181 = vdwg.mxu0
      %1182 = vmatpush.bf16.msra.mxu0 %v1002
      %1183 = vmatpush.bf16.msra.mxu0 %v1000
      %1184 = vmatpush.bf16.msra.mxu0 %v998
      %1185 = vmatpush.bf16.msra.mxu0 %v996
      %1186 = vmatpush.bf16.msra.mxu0 %v994
      %1187 = vmatpush.bf16.msra.mxu0 %v992
      %1188 = vmatpush.bf16.msra.mxu0 %v990
      %1189 = vmatpush.bf16.msra.mxu0 %v988
      %1190 = vmatmul.bf16.gmra.mxu0 %v828
      %v1191 = vpop.f32.mrf.mxu0
      %v1192 = vadd.f32 %v1143, %v1191
      %v1193 = vpop.f32.mrf.mxu0
      %v1194 = vadd.f32 %v1145, %v1193
      %1195 = vmatmul.bf16.gmra.mxu0 %v830
      %v1196 = vpop.f32.mrf.mxu0
      %v1197 = vadd.f32 %v1148, %v1196
      %v1198 = vpop.f32.mrf.mxu0
      %v1199 = vadd.f32 %v1150, %v1198
      %1200 = vmatmul.bf16.gmra.mxu0 %v832
      %v1201 = vpop.f32.mrf.mxu0
      %v1202 = vadd.f32 %v1153, %v1201
      %v1203 = vpop.f32.mrf.mxu0
      %v1204 = vadd.f32 %v1155, %v1203
      %1205 = vmatmul.bf16.gmra.mxu0 %v834
      %v1206 = vpop.f32.mrf.mxu0
      %v1207 = vadd.f32 %v1158, %v1206
      %v1208 = vpop.f32.mrf.mxu0
      %v1209 = vadd.f32 %v1160, %v1208
      %1210 = vmatmul.bf16.gmra.mxu0 %v836
      %v1211 = vpop.f32.mrf.mxu0
      %v1212 = vadd.f32 %v1163, %v1211
      %v1213 = vpop.f32.mrf.mxu0
      %v1214 = vadd.f32 %v1165, %v1213
      %1215 = vmatmul.bf16.gmra.mxu0 %v838
      %v1216 = vpop.f32.mrf.mxu0
      %v1217 = vadd.f32 %v1168, %v1216
      %v1218 = vpop.f32.mrf.mxu0
      %v1219 = vadd.f32 %v1170, %v1218
      %1220 = vmatmul.bf16.gmra.mxu0 %v840
      %v1221 = vpop.f32.mrf.mxu0
      %v1222 = vadd.f32 %v1173, %v1221
      %v1223 = vpop.f32.mrf.mxu0
      %v1224 = vadd.f32 %v1175, %v1223
      %1225 = vmatmul.bf16.gmra.mxu0 %v842
      %v1226 = vpop.f32.mrf.mxu0
      %v1227 = vadd.f32 %v1178, %v1226
      %v1228 = vpop.f32.mrf.mxu0
      %v1229 = vadd.f32 %v1180, %v1228
      %1230 = vdwg.mxu0
      %v1231 = vpack.c.bf16 %v1096, %v1094
      %v1232 = vpack.c.bf16 %v1194, %v1192
      %v1233 = vpack.c.bf16 %v1101, %v1099
      %v1234 = vpack.c.bf16 %v1199, %v1197
      %v1235 = vpack.c.bf16 %v1106, %v1104
      %v1236 = vpack.c.bf16 %v1204, %v1202
      %v1237 = vpack.c.bf16 %v1111, %v1109
      %v1238 = vpack.c.bf16 %v1209, %v1207
      %v1239 = vpack.c.bf16 %v1116, %v1114
      %v1240 = vpack.c.bf16 %v1214, %v1212
      %v1241 = vpack.c.bf16 %v1121, %v1119
      %v1242 = vpack.c.bf16 %v1219, %v1217
      %v1243 = vpack.c.bf16 %v1126, %v1124
      %v1244 = vpack.c.bf16 %v1224, %v1222
      %v1245 = vpack.c.bf16 %v1131, %v1129
      %v1246 = vpack.c.bf16 %v1229, %v1227
      %v1247 = vld [vmem:[%s5] sm:$0x3]
      %v1249 = vperm.slane %v1247, 0
      %v1250 = vperm.slane %v1247, 1
      %1253 = vmatpush.bf16.msra.mxu0 %v1245
      %1254 = vmatpush.bf16.msra.mxu0 %v1243
      %1255 = vmatpush.bf16.msra.mxu0 %v1241
      %1256 = vmatpush.bf16.msra.mxu0 %v1239
      %1257 = vmatpush.bf16.msra.mxu0 %v1237
      %1258 = vmatpush.bf16.msra.mxu0 %v1235
      %1259 = vmatpush.bf16.msra.mxu0 %v1233
      %1260 = vmatpush.bf16.msra.mxu0 %v1231
      %1261 = vmatmul.bf16.gmra.mxu0 %v681
      %v1262 = vpop.f32.mrf.mxu0
      %v1263 = vadd.f32 %v1249, %v1262
      %v1264 = vpop.f32.mrf.mxu0
      %v1265 = vadd.f32 %v1249, %v1264
      %1266 = vmatmul.bf16.gmra.mxu0 %v682
      %v1267 = vpop.f32.mrf.mxu0
      %v1268 = vadd.f32 %v1249, %v1267
      %v1269 = vpop.f32.mrf.mxu0
      %v1270 = vadd.f32 %v1249, %v1269
      %1271 = vmatmul.bf16.gmra.mxu0 %v683
      %v1272 = vpop.f32.mrf.mxu0
      %v1273 = vadd.f32 %v1249, %v1272
      %v1274 = vpop.f32.mrf.mxu0
      %v1275 = vadd.f32 %v1249, %v1274
      %1276 = vmatmul.bf16.gmra.mxu0 %v684
      %v1277 = vpop.f32.mrf.mxu0
      %v1278 = vadd.f32 %v1249, %v1277
      %v1279 = vpop.f32.mrf.mxu0
      %v1280 = vadd.f32 %v1249, %v1279
      %1281 = vmatmul.bf16.gmra.mxu0 %v685
      %v1282 = vpop.f32.mrf.mxu0
      %v1283 = vadd.f32 %v1249, %v1282
      %v1284 = vpop.f32.mrf.mxu0
      %v1285 = vadd.f32 %v1249, %v1284
      %1286 = vmatmul.bf16.gmra.mxu0 %v686
      %v1287 = vpop.f32.mrf.mxu0
      %v1288 = vadd.f32 %v1249, %v1287
      %v1289 = vpop.f32.mrf.mxu0
      %v1290 = vadd.f32 %v1249, %v1289
      %1291 = vmatmul.bf16.gmra.mxu0 %v687
      %v1292 = vpop.f32.mrf.mxu0
      %v1293 = vadd.f32 %v1249, %v1292
      %v1294 = vpop.f32.mrf.mxu0
      %v1295 = vadd.f32 %v1249, %v1294
      %1296 = vmatmul.bf16.gmra.mxu0 %v688
      %v1297 = vpop.f32.mrf.mxu0
      %v1298 = vadd.f32 %v1249, %v1297
      %v1299 = vpop.f32.mrf.mxu0
      %v1300 = vadd.f32 %v1249, %v1299
      %1301 = vdwg.mxu0
      %1302 = vmatpush.bf16.msra.mxu0 %v1246
      %1303 = vmatpush.bf16.msra.mxu0 %v1244
      %1304 = vmatpush.bf16.msra.mxu0 %v1242
      %1305 = vmatpush.bf16.msra.mxu0 %v1240
      %1306 = vmatpush.bf16.msra.mxu0 %v1238
      %1307 = vmatpush.bf16.msra.mxu0 %v1236
      %1308 = vmatpush.bf16.msra.mxu0 %v1234
      %1309 = vmatpush.bf16.msra.mxu0 %v1232
      %1310 = vmatmul.bf16.gmra.mxu0 %v681
      %v1311 = vpop.f32.mrf.mxu0
      %v1312 = vadd.f32 %v1250, %v1311
      %v1313 = vpop.f32.mrf.mxu0
      %v1314 = vadd.f32 %v1250, %v1313
      %1315 = vmatmul.bf16.gmra.mxu0 %v682
      %v1316 = vpop.f32.mrf.mxu0
      %v1317 = vadd.f32 %v1250, %v1316
      %v1318 = vpop.f32.mrf.mxu0
      %v1319 = vadd.f32 %v1250, %v1318
      %1320 = vmatmul.bf16.gmra.mxu0 %v683
      %v1321 = vpop.f32.mrf.mxu0
      %v1322 = vadd.f32 %v1250, %v1321
      %v1323 = vpop.f32.mrf.mxu0
      %v1324 = vadd.f32 %v1250, %v1323
      %1325 = vmatmul.bf16.gmra.mxu0 %v684
      %v1326 = vpop.f32.mrf.mxu0
      %v1327 = vadd.f32 %v1250, %v1326
      %v1328 = vpop.f32.mrf.mxu0
      %v1329 = vadd.f32 %v1250, %v1328
      %1330 = vmatmul.bf16.gmra.mxu0 %v685
      %v1331 = vpop.f32.mrf.mxu0
      %v1332 = vadd.f32 %v1250, %v1331
      %v1333 = vpop.f32.mrf.mxu0
      %v1334 = vadd.f32 %v1250, %v1333
      %1335 = vmatmul.bf16.gmra.mxu0 %v686
      %v1336 = vpop.f32.mrf.mxu0
      %v1337 = vadd.f32 %v1250, %v1336
      %v1338 = vpop.f32.mrf.mxu0
      %v1339 = vadd.f32 %v1250, %v1338
      %1340 = vmatmul.bf16.gmra.mxu0 %v687
      %v1341 = vpop.f32.mrf.mxu0
      %v1342 = vadd.f32 %v1250, %v1341
      %v1343 = vpop.f32.mrf.mxu0
      %v1344 = vadd.f32 %v1250, %v1343
      %1345 = vmatmul.bf16.gmra.mxu0 %v688
      %v1346 = vpop.f32.mrf.mxu0
      %v1347 = vadd.f32 %v1250, %v1346
      %v1348 = vpop.f32.mrf.mxu0
      %v1349 = vadd.f32 %v1250, %v1348
      %1350 = vdwg.mxu0
      %v1351 = vmax.f32 %v1263, 0.0
      %v1352 = vmax.f32 %v1312, 0.0
      %v1353 = vmax.f32 %v1265, 0.0
      %v1354 = vmax.f32 %v1314, 0.0
      %v1355 = vmax.f32 %v1268, 0.0
      %v1356 = vmax.f32 %v1317, 0.0
      %v1357 = vmax.f32 %v1270, 0.0
      %v1358 = vmax.f32 %v1319, 0.0
      %v1359 = vmax.f32 %v1273, 0.0
      %v1360 = vmax.f32 %v1322, 0.0
      %v1361 = vmax.f32 %v1275, 0.0
      %v1362 = vmax.f32 %v1324, 0.0
      %v1363 = vmax.f32 %v1278, 0.0
      %v1364 = vmax.f32 %v1327, 0.0
      %v1365 = vmax.f32 %v1280, 0.0
      %v1366 = vmax.f32 %v1329, 0.0
      %v1367 = vmax.f32 %v1283, 0.0
      %v1368 = vmax.f32 %v1332, 0.0
      %v1369 = vmax.f32 %v1285, 0.0
      %v1370 = vmax.f32 %v1334, 0.0
      %v1371 = vmax.f32 %v1288, 0.0
      %v1372 = vmax.f32 %v1337, 0.0
      %v1373 = vmax.f32 %v1290, 0.0
      %v1374 = vmax.f32 %v1339, 0.0
      %v1375 = vmax.f32 %v1293, 0.0
      %v1376 = vmax.f32 %v1342, 0.0
      %v1377 = vmax.f32 %v1295, 0.0
      %v1378 = vmax.f32 %v1344, 0.0
      %v1379 = vmax.f32 %v1298, 0.0
      %v1380 = vmax.f32 %v1347, 0.0
      %v1381 = vmax.f32 %v1300, 0.0
      %v1382 = vmax.f32 %v1349, 0.0
      %v1383 = vld [vmem:[%s6] sm:$0xf]
      %v1384 = vpack.c.bf16 %v1353, %v1351
      %v1385 = vpack.c.bf16 %v1354, %v1352
      %v1386 = vpack.c.bf16 %v1357, %v1355
      %v1387 = vpack.c.bf16 %v1358, %v1356
      %v1388 = vpack.c.bf16 %v1361, %v1359
      %v1389 = vpack.c.bf16 %v1362, %v1360
      %v1390 = vpack.c.bf16 %v1365, %v1363
      %v1391 = vpack.c.bf16 %v1366, %v1364
      %v1392 = vpack.c.bf16 %v1369, %v1367
      %v1393 = vpack.c.bf16 %v1370, %v1368
      %v1394 = vpack.c.bf16 %v1373, %v1371
      %v1395 = vpack.c.bf16 %v1374, %v1372
      %v1396 = vpack.c.bf16 %v1377, %v1375
      %v1397 = vpack.c.bf16 %v1378, %v1376
      %v1398 = vpack.c.bf16 %v1381, %v1379
      %v1399 = vpack.c.bf16 %v1382, %v1380
      %1400 = vmatpush.bf16.msra.mxu0 %v1398
      %1401 = vmatpush.bf16.msra.mxu0 %v1396
      %1402 = vmatpush.bf16.msra.mxu0 %v1394
      %1403 = vmatpush.bf16.msra.mxu0 %v1392
      %1404 = vmatpush.bf16.msra.mxu0 %v1390
      %1405 = vmatpush.bf16.msra.mxu0 %v1388
      %1406 = vmatpush.bf16.msra.mxu0 %v1386
      %1407 = vmatpush.bf16.msra.mxu0 %v1384
      %1408 = vmatmul.bf16.gmra.mxu0 %v1383
      %v1409 = vpop.f32.mrf.mxu0
      %v1410 = vadd.f32 0.0, %v1409
      %v1411 = vpop.f32.mrf.mxu0
      %1412 = vdwg.mxu0
      %1413 = vmatpush.bf16.msra.mxu0 %v1399
      %1414 = vmatpush.bf16.msra.mxu0 %v1397
      %1415 = vmatpush.bf16.msra.mxu0 %v1395
      %1416 = vmatpush.bf16.msra.mxu0 %v1393
      %1417 = vmatpush.bf16.msra.mxu0 %v1391
      %1418 = vmatpush.bf16.msra.mxu0 %v1389
      %1419 = vmatpush.bf16.msra.mxu0 %v1387
      %1420 = vmatpush.bf16.msra.mxu0 %v1385
      %1421 = vmatmul.bf16.gmra.mxu0 %v1383
      %v1422 = vpop.f32.mrf.mxu0
      %v1423 = vadd.f32 0.0, %v1422
      %v1424 = vpop.f32.mrf.mxu0
      %1425 = vdwg.mxu0
      %1426 = vst [vmem:[#allocation2] sm:$0xff] 0.0
      %1427 = vst [vmem:[#allocation2 + $0x8] sm:$0xff] 0.0
      %1428 = vst [vmem:[#allocation2 + $0x10] sm:$0xff] 0.0
      %1429 = vst [vmem:[#allocation2 + $0x18] sm:$0xff] 0.0
      %1430 = vst [vmem:[#allocation2 + $0x20] sm:$0x1] 0.0
      %1431 = vst [vmem:[#allocation2 + $0x28] sm:$0x1] 0.0
      %1432 = vst [vmem:[#allocation2 + $0x30] sm:$0x1] 0.0
      %1433 = vst [vmem:[#allocation2 + $0x38] sm:$0x1] 0.0
      %v1436 = vrot.slane %v1410, 7
      %v1437 = vrot.slane %v1423, 7
      %1440 = vst [vmem:[#allocation2] sm:$0xfe] %v1436
      %1441 = vst [vmem:[#allocation2 + $0x8] sm:$0xfe] %v1437
      %1442 = vst [vmem:[#allocation2 + $0x20] sm:$0x1] %v1436
      %1443 = vst [vmem:[#allocation2 + $0x28] sm:$0x1] %v1437
      %1444 = vst [vmem:[#allocation2 + $0x10] sm:$0xff] %v1410
      %1445 = vst [vmem:[#allocation2 + $0x18] sm:$0xff] %v1423
      %v1446 = vld [vmem:[#allocation2] sm:$0xff]
      %v1447 = vld [vmem:[#allocation2 + $0x8] sm:$0xff]
      %v1448 = vld [vmem:[#allocation2 + $0x10] sm:$0xff]
      %v1449 = vld [vmem:[#allocation2 + $0x18] sm:$0xff]
      %v1450 = vld [vmem:[#allocation2 + $0x20] sm:$0x1]
      %v1451 = vld [vmem:[#allocation2 + $0x28] sm:$0x1]
      %v1452 = vld [vmem:[#allocation2 + $0x30] sm:$0x1]
      %v1453 = vld [vmem:[#allocation2 + $0x38] sm:$0x1]
      %v1454 = vpack.c.bf16 %v1450, %v1446
      %v1455 = vpack.c.bf16 %v1451, %v1447
      %v1456 = vpack.c.bf16 %v1452, %v1448
      %v1457 = vpack.c.bf16 %v1453, %v1449
      %v1458 = vld [vmem:[%s7] sm:$0xff]
      %v1459 = vld [vmem:[%s7 + $0x8] sm:$0xff]
      %v1460 = vld [vmem:[%s7 + $0x10] sm:$0xff]
      %v1461 = vld [vmem:[%s7 + $0x18] sm:$0xff]
      %v1462 = vld [vmem:[%s7 + $0x20] sm:$0xff]
      %v1463 = vld [vmem:[%s7 + $0x28] sm:$0xff]
      %v1464 = vld [vmem:[%s7 + $0x30] sm:$0xff]
      %v1465 = vld [vmem:[%s7 + $0x38] sm:$0xff]
      %v1466 = vld [vmem:[%s7 + $0x40] sm:$0xff]
      %v1467 = vld [vmem:[%s7 + $0x48] sm:$0xff]
      %v1468 = vld [vmem:[%s7 + $0x50] sm:$0xff]
      %v1469 = vld [vmem:[%s7 + $0x58] sm:$0xff]
      %v1470 = vld [vmem:[%s7 + $0x60] sm:$0xff]
      %v1471 = vld [vmem:[%s7 + $0x68] sm:$0xff]
      %v1472 = vld [vmem:[%s7 + $0x70] sm:$0xff]
      %v1473 = vld [vmem:[%s7 + $0x78] sm:$0xff]
      %v1474 = vld [vmem:[%s7 + $0x80] sm:$0xff]
      %v1475 = vld [vmem:[%s7 + $0x88] sm:$0xff]
      %v1476 = vld [vmem:[%s7 + $0x90] sm:$0xff]
      %v1477 = vld [vmem:[%s7 + $0x98] sm:$0xff]
      %v1478 = vld [vmem:[%s7 + $0xa0] sm:$0xff]
      %v1479 = vld [vmem:[%s7 + $0xa8] sm:$0xff]
      %v1480 = vld [vmem:[%s7 + $0xb0] sm:$0xff]
      %v1481 = vld [vmem:[%s7 + $0xb8] sm:$0xff]
      %v1482 = vld [vmem:[%s7 + $0xc0] sm:$0xff]
      %v1483 = vld [vmem:[%s7 + $0xc8] sm:$0xff]
      %v1484 = vld [vmem:[%s7 + $0xd0] sm:$0xff]
      %v1485 = vld [vmem:[%s7 + $0xd8] sm:$0xff]
      %v1486 = vld [vmem:[%s7 + $0xe0] sm:$0xff]
      %v1487 = vld [vmem:[%s7 + $0xe8] sm:$0xff]
      %v1488 = vld [vmem:[%s7 + $0xf0] sm:$0xff]
      %v1489 = vld [vmem:[%s7 + $0xf8] sm:$0xff]
      %v1490 = vld [vmem:[%s7 + $0x100] sm:$0xff]
      %v1491 = vld [vmem:[%s7 + $0x108] sm:$0xff]
      %v1492 = vld [vmem:[%s7 + $0x110] sm:$0xff]
      %v1493 = vld [vmem:[%s7 + $0x118] sm:$0xff]
      %v1494 = vld [vmem:[%s7 + $0x120] sm:$0xff]
      %v1495 = vld [vmem:[%s7 + $0x128] sm:$0xff]
      %v1496 = vld [vmem:[%s7 + $0x130] sm:$0xff]
      %v1497 = vld [vmem:[%s7 + $0x138] sm:$0xff]
      %v1498 = vld [vmem:[%s7 + $0x140] sm:$0xff]
      %v1499 = vld [vmem:[%s7 + $0x148] sm:$0xff]
      %v1500 = vld [vmem:[%s7 + $0x150] sm:$0xff]
      %v1501 = vld [vmem:[%s7 + $0x158] sm:$0xff]
      %v1502 = vld [vmem:[%s7 + $0x160] sm:$0xff]
      %v1503 = vld [vmem:[%s7 + $0x168] sm:$0xff]
      %v1504 = vld [vmem:[%s7 + $0x170] sm:$0xff]
      %v1505 = vld [vmem:[%s7 + $0x178] sm:$0xff]
      %v1506 = vld [vmem:[%s7 + $0x180] sm:$0xff]
      %v1507 = vld [vmem:[%s7 + $0x188] sm:$0xff]
      %v1508 = vld [vmem:[%s7 + $0x190] sm:$0xff]
      %v1509 = vld [vmem:[%s7 + $0x198] sm:$0xff]
      %v1510 = vld [vmem:[%s7 + $0x1a0] sm:$0xff]
      %v1511 = vld [vmem:[%s7 + $0x1a8] sm:$0xff]
      %v1512 = vld [vmem:[%s7 + $0x1b0] sm:$0xff]
      %v1513 = vld [vmem:[%s7 + $0x1b8] sm:$0xff]
      %v1514 = vld [vmem:[%s7 + $0x1c0] sm:$0xff]
      %v1515 = vld [vmem:[%s7 + $0x1c8] sm:$0xff]
      %v1516 = vld [vmem:[%s7 + $0x1d0] sm:$0xff]
      %v1517 = vld [vmem:[%s7 + $0x1d8] sm:$0xff]
      %v1518 = vld [vmem:[%s7 + $0x1e0] sm:$0xff]
      %v1519 = vld [vmem:[%s7 + $0x1e8] sm:$0xff]
      %v1520 = vld [vmem:[%s7 + $0x1f0] sm:$0xff]
      %v1521 = vld [vmem:[%s7 + $0x1f8] sm:$0xff]
      %v1522 = vld [vmem:[%s8] sm:$0x3]
      %v1524 = vperm.slane %v1522, 0
      %v1525 = vperm.slane %v1522, 1
      %v1592 = vunpack.c.l.b16 %v1458
      %v1593 = vunpack.c.h.b16 %v1458
      %v1594 = vunpack.c.l.b16 %v1459
      %v1595 = vunpack.c.h.b16 %v1459
      %v1596 = vunpack.c.l.b16 %v1460
      %v1597 = vunpack.c.h.b16 %v1460
      %v1598 = vunpack.c.l.b16 %v1461
      %v1599 = vunpack.c.h.b16 %v1461
      %v1600 = vunpack.c.l.b16 %v1462
      %v1601 = vunpack.c.h.b16 %v1462
      %v1602 = vunpack.c.l.b16 %v1463
      %v1603 = vunpack.c.h.b16 %v1463
      %v1604 = vunpack.c.l.b16 %v1464
      %v1605 = vunpack.c.h.b16 %v1464
      %v1606 = vunpack.c.l.b16 %v1465
      %v1607 = vunpack.c.h.b16 %v1465
      %v1608 = vunpack.c.l.b16 %v1466
      %v1609 = vunpack.c.h.b16 %v1466
      %v1610 = vunpack.c.l.b16 %v1467
      %v1611 = vunpack.c.h.b16 %v1467
      %v1612 = vunpack.c.l.b16 %v1468
      %v1613 = vunpack.c.h.b16 %v1468
      %v1614 = vunpack.c.l.b16 %v1469
      %v1615 = vunpack.c.h.b16 %v1469
      %v1616 = vunpack.c.l.b16 %v1470
      %v1617 = vunpack.c.h.b16 %v1470
      %v1618 = vunpack.c.l.b16 %v1471
      %v1619 = vunpack.c.h.b16 %v1471
      %v1620 = vunpack.c.l.b16 %v1472
      %v1621 = vunpack.c.h.b16 %v1472
      %v1622 = vunpack.c.l.b16 %v1473
      %v1623 = vunpack.c.h.b16 %v1473
      %v1624 = vunpack.c.l.b16 %v1474
      %v1625 = vunpack.c.h.b16 %v1474
      %v1626 = vunpack.c.l.b16 %v1475
      %v1627 = vunpack.c.h.b16 %v1475
      %v1628 = vunpack.c.l.b16 %v1476
      %v1629 = vunpack.c.h.b16 %v1476
      %v1630 = vunpack.c.l.b16 %v1477
      %v1631 = vunpack.c.h.b16 %v1477
      %v1632 = vunpack.c.l.b16 %v1478
      %v1633 = vunpack.c.h.b16 %v1478
      %v1634 = vunpack.c.l.b16 %v1479
      %v1635 = vunpack.c.h.b16 %v1479
      %v1636 = vunpack.c.l.b16 %v1480
      %v1637 = vunpack.c.h.b16 %v1480
      %v1638 = vunpack.c.l.b16 %v1481
      %v1639 = vunpack.c.h.b16 %v1481
      %v1640 = vunpack.c.l.b16 %v1482
      %v1641 = vunpack.c.h.b16 %v1482
      %v1642 = vunpack.c.l.b16 %v1483
      %v1643 = vunpack.c.h.b16 %v1483
      %v1644 = vunpack.c.l.b16 %v1484
      %v1645 = vunpack.c.h.b16 %v1484
      %v1646 = vunpack.c.l.b16 %v1485
      %v1647 = vunpack.c.h.b16 %v1485
      %v1648 = vunpack.c.l.b16 %v1486
      %v1649 = vunpack.c.h.b16 %v1486
      %v1650 = vunpack.c.l.b16 %v1487
      %v1651 = vunpack.c.h.b16 %v1487
      %v1652 = vunpack.c.l.b16 %v1488
      %v1653 = vunpack.c.h.b16 %v1488
      %v1654 = vunpack.c.l.b16 %v1489
      %v1655 = vunpack.c.h.b16 %v1489
      %v1656 = vunpack.c.l.b16 %v1490
      %v1657 = vunpack.c.h.b16 %v1490
      %v1658 = vunpack.c.l.b16 %v1491
      %v1659 = vunpack.c.h.b16 %v1491
      %v1660 = vunpack.c.l.b16 %v1492
      %v1661 = vunpack.c.h.b16 %v1492
      %v1662 = vunpack.c.l.b16 %v1493
      %v1663 = vunpack.c.h.b16 %v1493
      %v1664 = vunpack.c.l.b16 %v1494
      %v1665 = vunpack.c.h.b16 %v1494
      %v1666 = vunpack.c.l.b16 %v1495
      %v1667 = vunpack.c.h.b16 %v1495
      %v1668 = vunpack.c.l.b16 %v1496
      %v1669 = vunpack.c.h.b16 %v1496
      %v1670 = vunpack.c.l.b16 %v1497
      %v1671 = vunpack.c.h.b16 %v1497
      %v1672 = vunpack.c.l.b16 %v1498
      %v1673 = vunpack.c.h.b16 %v1498
      %v1674 = vunpack.c.l.b16 %v1499
      %v1675 = vunpack.c.h.b16 %v1499
      %v1676 = vunpack.c.l.b16 %v1500
      %v1677 = vunpack.c.h.b16 %v1500
      %v1678 = vunpack.c.l.b16 %v1501
      %v1679 = vunpack.c.h.b16 %v1501
      %v1680 = vunpack.c.l.b16 %v1502
      %v1681 = vunpack.c.h.b16 %v1502
      %v1682 = vunpack.c.l.b16 %v1503
      %v1683 = vunpack.c.h.b16 %v1503
      %v1684 = vunpack.c.l.b16 %v1504
      %v1685 = vunpack.c.h.b16 %v1504
      %v1686 = vunpack.c.l.b16 %v1505
      %v1687 = vunpack.c.h.b16 %v1505
      %v1688 = vunpack.c.l.b16 %v1506
      %v1689 = vunpack.c.h.b16 %v1506
      %v1690 = vunpack.c.l.b16 %v1507
      %v1691 = vunpack.c.h.b16 %v1507
      %v1692 = vunpack.c.l.b16 %v1508
      %v1693 = vunpack.c.h.b16 %v1508
      %v1694 = vunpack.c.l.b16 %v1509
      %v1695 = vunpack.c.h.b16 %v1509
      %v1696 = vunpack.c.l.b16 %v1510
      %v1697 = vunpack.c.h.b16 %v1510
      %v1698 = vunpack.c.l.b16 %v1511
      %v1699 = vunpack.c.h.b16 %v1511
      %v1700 = vunpack.c.l.b16 %v1512
      %v1701 = vunpack.c.h.b16 %v1512
      %v1702 = vunpack.c.l.b16 %v1513
      %v1703 = vunpack.c.h.b16 %v1513
      %v1704 = vunpack.c.l.b16 %v1514
      %v1705 = vunpack.c.h.b16 %v1514
      %v1706 = vunpack.c.l.b16 %v1515
      %v1707 = vunpack.c.h.b16 %v1515
      %v1708 = vunpack.c.l.b16 %v1516
      %v1709 = vunpack.c.h.b16 %v1516
      %v1710 = vunpack.c.l.b16 %v1517
      %v1711 = vunpack.c.h.b16 %v1517
      %v1712 = vunpack.c.l.b16 %v1518
      %v1713 = vunpack.c.h.b16 %v1518
      %v1714 = vunpack.c.l.b16 %v1519
      %v1715 = vunpack.c.h.b16 %v1519
      %v1716 = vunpack.c.l.b16 %v1520
      %v1717 = vunpack.c.h.b16 %v1520
      %v1718 = vunpack.c.l.b16 %v1521
      %v1719 = vunpack.c.h.b16 %v1521
      %v1720 = vpack.c.b16 %v1594, %v1592
      %v1721 = vpack.c.b16 %v1595, %v1593
      %v1722 = vpack.c.b16 %v1598, %v1596
      %v1723 = vpack.c.b16 %v1599, %v1597
      %v1724 = vpack.c.b16 %v1602, %v1600
      %v1725 = vpack.c.b16 %v1603, %v1601
      %v1726 = vpack.c.b16 %v1606, %v1604
      %v1727 = vpack.c.b16 %v1607, %v1605
      %v1728 = vpack.c.b16 %v1610, %v1608
      %v1729 = vpack.c.b16 %v1611, %v1609
      %v1730 = vpack.c.b16 %v1614, %v1612
      %v1731 = vpack.c.b16 %v1615, %v1613
      %v1732 = vpack.c.b16 %v1618, %v1616
      %v1733 = vpack.c.b16 %v1619, %v1617
      %v1734 = vpack.c.b16 %v1622, %v1620
      %v1735 = vpack.c.b16 %v1623, %v1621
      %v1736 = vpack.c.b16 %v1626, %v1624
      %v1737 = vpack.c.b16 %v1627, %v1625
      %v1738 = vpack.c.b16 %v1630, %v1628
      %v1739 = vpack.c.b16 %v1631, %v1629
      %v1740 = vpack.c.b16 %v1634, %v1632
      %v1741 = vpack.c.b16 %v1635, %v1633
      %v1742 = vpack.c.b16 %v1638, %v1636
      %v1743 = vpack.c.b16 %v1639, %v1637
      %v1744 = vpack.c.b16 %v1642, %v1640
      %v1745 = vpack.c.b16 %v1643, %v1641
      %v1746 = vpack.c.b16 %v1646, %v1644
      %v1747 = vpack.c.b16 %v1647, %v1645
      %v1748 = vpack.c.b16 %v1650, %v1648
      %v1749 = vpack.c.b16 %v1651, %v1649
      %v1750 = vpack.c.b16 %v1654, %v1652
      %v1751 = vpack.c.b16 %v1655, %v1653
      %v1752 = vpack.c.b16 %v1658, %v1656
      %v1753 = vpack.c.b16 %v1659, %v1657
      %v1754 = vpack.c.b16 %v1662, %v1660
      %v1755 = vpack.c.b16 %v1663, %v1661
      %v1756 = vpack.c.b16 %v1666, %v1664
      %v1757 = vpack.c.b16 %v1667, %v1665
      %v1758 = vpack.c.b16 %v1670, %v1668
      %v1759 = vpack.c.b16 %v1671, %v1669
      %v1760 = vpack.c.b16 %v1674, %v1672
      %v1761 = vpack.c.b16 %v1675, %v1673
      %v1762 = vpack.c.b16 %v1678, %v1676
      %v1763 = vpack.c.b16 %v1679, %v1677
      %v1764 = vpack.c.b16 %v1682, %v1680
      %v1765 = vpack.c.b16 %v1683, %v1681
      %v1766 = vpack.c.b16 %v1686, %v1684
      %v1767 = vpack.c.b16 %v1687, %v1685
      %v1768 = vpack.c.b16 %v1690, %v1688
      %v1769 = vpack.c.b16 %v1691, %v1689
      %v1770 = vpack.c.b16 %v1694, %v1692
      %v1771 = vpack.c.b16 %v1695, %v1693
      %v1772 = vpack.c.b16 %v1698, %v1696
      %v1773 = vpack.c.b16 %v1699, %v1697
      %v1774 = vpack.c.b16 %v1702, %v1700
      %v1775 = vpack.c.b16 %v1703, %v1701
      %v1776 = vpack.c.b16 %v1706, %v1704
      %v1777 = vpack.c.b16 %v1707, %v1705
      %v1778 = vpack.c.b16 %v1710, %v1708
      %v1779 = vpack.c.b16 %v1711, %v1709
      %v1780 = vpack.c.b16 %v1714, %v1712
      %v1781 = vpack.c.b16 %v1715, %v1713
      %v1782 = vpack.c.b16 %v1718, %v1716
      %v1783 = vpack.c.b16 %v1719, %v1717
      %1848 = vmatpush.bf16.msra.mxu0 %v1734
      %1849 = vmatpush.bf16.msra.mxu0 %v1732
      %1850 = vmatpush.bf16.msra.mxu0 %v1730
      %1851 = vmatpush.bf16.msra.mxu0 %v1728
      %1852 = vmatpush.bf16.msra.mxu0 %v1726
      %1853 = vmatpush.bf16.msra.mxu0 %v1724
      %1854 = vmatpush.bf16.msra.mxu0 %v1722
      %1855 = vmatpush.bf16.msra.mxu0 %v1720
      %1856 = vmatmul.bf16.gmra.mxu0 %v1454
      %v1857 = vpop.f32.mrf.mxu0
      %v1858 = vadd.f32 %v1524, %v1857
      %v1859 = vpop.f32.mrf.mxu0
      %v1860 = vadd.f32 %v1524, %v1859
      %1861 = vdwg.mxu0
      %1862 = vmatpush.bf16.msra.mxu0 %v1750
      %1863 = vmatpush.bf16.msra.mxu0 %v1748
      %1864 = vmatpush.bf16.msra.mxu0 %v1746
      %1865 = vmatpush.bf16.msra.mxu0 %v1744
      %1866 = vmatpush.bf16.msra.mxu0 %v1742
      %1867 = vmatpush.bf16.msra.mxu0 %v1740
      %1868 = vmatpush.bf16.msra.mxu0 %v1738
      %1869 = vmatpush.bf16.msra.mxu0 %v1736
      %1870 = vmatmul.bf16.gmra.mxu0 %v1455
      %v1871 = vpop.f32.mrf.mxu0
      %v1872 = vadd.f32 %v1858, %v1871
      %v1873 = vpop.f32.mrf.mxu0
      %v1874 = vadd.f32 %v1860, %v1873
      %1875 = vdwg.mxu0
      %1876 = vmatpush.bf16.msra.mxu0 %v1766
      %1877 = vmatpush.bf16.msra.mxu0 %v1764
      %1878 = vmatpush.bf16.msra.mxu0 %v1762
      %1879 = vmatpush.bf16.msra.mxu0 %v1760
      %1880 = vmatpush.bf16.msra.mxu0 %v1758
      %1881 = vmatpush.bf16.msra.mxu0 %v1756
      %1882 = vmatpush.bf16.msra.mxu0 %v1754
      %1883 = vmatpush.bf16.msra.mxu0 %v1752
      %1884 = vmatmul.bf16.gmra.mxu0 %v1456
      %v1885 = vpop.f32.mrf.mxu0
      %v1886 = vadd.f32 %v1872, %v1885
      %v1887 = vpop.f32.mrf.mxu0
      %v1888 = vadd.f32 %v1874, %v1887
      %1889 = vdwg.mxu0
      %1890 = vmatpush.bf16.msra.mxu0 %v1782
      %1891 = vmatpush.bf16.msra.mxu0 %v1780
      %1892 = vmatpush.bf16.msra.mxu0 %v1778
      %1893 = vmatpush.bf16.msra.mxu0 %v1776
      %1894 = vmatpush.bf16.msra.mxu0 %v1774
      %1895 = vmatpush.bf16.msra.mxu0 %v1772
      %1896 = vmatpush.bf16.msra.mxu0 %v1770
      %1897 = vmatpush.bf16.msra.mxu0 %v1768
      %1898 = vmatmul.bf16.gmra.mxu0 %v1457
      %v1899 = vpop.f32.mrf.mxu0
      %v1900 = vadd.f32 %v1886, %v1899
      %v1901 = vpop.f32.mrf.mxu0
      %v1902 = vadd.f32 %v1888, %v1901
      %1903 = vdwg.mxu0
      %1904 = vmatpush.bf16.msra.mxu0 %v1735
      %1905 = vmatpush.bf16.msra.mxu0 %v1733
      %1906 = vmatpush.bf16.msra.mxu0 %v1731
      %1907 = vmatpush.bf16.msra.mxu0 %v1729
      %1908 = vmatpush.bf16.msra.mxu0 %v1727
      %1909 = vmatpush.bf16.msra.mxu0 %v1725
      %1910 = vmatpush.bf16.msra.mxu0 %v1723
      %1911 = vmatpush.bf16.msra.mxu0 %v1721
      %1912 = vmatmul.bf16.gmra.mxu0 %v1454
      %v1913 = vpop.f32.mrf.mxu0
      %v1914 = vadd.f32 %v1525, %v1913
      %v1915 = vpop.f32.mrf.mxu0
      %v1916 = vadd.f32 %v1525, %v1915
      %1917 = vdwg.mxu0
      %1918 = vmatpush.bf16.msra.mxu0 %v1751
      %1919 = vmatpush.bf16.msra.mxu0 %v1749
      %1920 = vmatpush.bf16.msra.mxu0 %v1747
      %1921 = vmatpush.bf16.msra.mxu0 %v1745
      %1922 = vmatpush.bf16.msra.mxu0 %v1743
      %1923 = vmatpush.bf16.msra.mxu0 %v1741
      %1924 = vmatpush.bf16.msra.mxu0 %v1739
      %1925 = vmatpush.bf16.msra.mxu0 %v1737
      %1926 = vmatmul.bf16.gmra.mxu0 %v1455
      %v1927 = vpop.f32.mrf.mxu0
      %v1928 = vadd.f32 %v1914, %v1927
      %v1929 = vpop.f32.mrf.mxu0
      %v1930 = vadd.f32 %v1916, %v1929
      %1931 = vdwg.mxu0
      %1932 = vmatpush.bf16.msra.mxu0 %v1767
      %1933 = vmatpush.bf16.msra.mxu0 %v1765
      %1934 = vmatpush.bf16.msra.mxu0 %v1763
      %1935 = vmatpush.bf16.msra.mxu0 %v1761
      %1936 = vmatpush.bf16.msra.mxu0 %v1759
      %1937 = vmatpush.bf16.msra.mxu0 %v1757
      %1938 = vmatpush.bf16.msra.mxu0 %v1755
      %1939 = vmatpush.bf16.msra.mxu0 %v1753
      %1940 = vmatmul.bf16.gmra.mxu0 %v1456
      %v1941 = vpop.f32.mrf.mxu0
      %v1942 = vadd.f32 %v1928, %v1941
      %v1943 = vpop.f32.mrf.mxu0
      %v1944 = vadd.f32 %v1930, %v1943
      %1945 = vdwg.mxu0
      %1946 = vmatpush.bf16.msra.mxu0 %v1783
      %1947 = vmatpush.bf16.msra.mxu0 %v1781
      %1948 = vmatpush.bf16.msra.mxu0 %v1779
      %1949 = vmatpush.bf16.msra.mxu0 %v1777
      %1950 = vmatpush.bf16.msra.mxu0 %v1775
      %1951 = vmatpush.bf16.msra.mxu0 %v1773
      %1952 = vmatpush.bf16.msra.mxu0 %v1771
      %1953 = vmatpush.bf16.msra.mxu0 %v1769
      %1954 = vmatmul.bf16.gmra.mxu0 %v1457
      %v1955 = vpop.f32.mrf.mxu0
      %v1956 = vadd.f32 %v1942, %v1955
      %v1957 = vpop.f32.mrf.mxu0
      %v1958 = vadd.f32 %v1944, %v1957
      %1959 = vdwg.mxu0
      %v1960 = vmax.f32 %v1900, 0.0
      %v1961 = vmax.f32 %v1956, 0.0
      %v1962 = vmax.f32 %v1902, 0.0
      %v1963 = vmax.f32 %v1958, 0.0
      %1964 = vst [vmem:[#allocation3] sm:$0xff] 0.0
      %1965 = vst [vmem:[#allocation3 + $0x8] sm:$0xff] 0.0
      %1966 = vst [vmem:[#allocation3 + $0x10] sm:$0xff] 0.0
      %1967 = vst [vmem:[#allocation3 + $0x18] sm:$0xff] 0.0
      %1968 = vst [vmem:[#allocation3 + $0x20] sm:$0x7] 0.0
      %1969 = vst [vmem:[#allocation3 + $0x28] sm:$0x7] 0.0
      %1970 = vst [vmem:[#allocation3 + $0x30] sm:$0x7] 0.0
      %1971 = vst [vmem:[#allocation3 + $0x38] sm:$0x7] 0.0
      %vm1976 = vcmask 1041408
      %v1977 = vrot.slane %v1960, 6
      %v1978 = vrot.slane %v1961, 6
      %v1979 = vrot.slane %v1962, 6
      %v1980 = vsel %vm1976, %v1977, %v1979
      %v1981 = vrot.slane %v1963, 6
      %v1982 = vsel %vm1976, %v1978, %v1981
      %1987 = vst [vmem:[#allocation3] sm:$0xfc] %v1977
      %1988 = vst [vmem:[#allocation3 + $0x8] sm:$0xfc] %v1978
      %1989 = vst [vmem:[#allocation3 + $0x20] sm:$0x7] %v1980
      %1990 = vst [vmem:[#allocation3 + $0x28] sm:$0x7] %v1982
      %1991 = vst [vmem:[#allocation3 + $0x10] sm:$0xff] %v1960
      %1992 = vst [vmem:[#allocation3 + $0x18] sm:$0xff] %v1961
      %1993 = vst [vmem:[#allocation3 + $0x30] sm:$0x1] %v1962
      %1994 = vst [vmem:[#allocation3 + $0x38] sm:$0x1] %v1963
      %v1995 = vld [vmem:[#allocation3] sm:$0xff]
      %v1996 = vld [vmem:[#allocation3 + $0x8] sm:$0xff]
      %v1997 = vld [vmem:[#allocation3 + $0x10] sm:$0xff]
      %v1998 = vld [vmem:[#allocation3 + $0x18] sm:$0xff]
      %v1999 = vld [vmem:[#allocation3 + $0x20] sm:$0x7]
      %v2000 = vld [vmem:[#allocation3 + $0x28] sm:$0x7]
      %v2001 = vld [vmem:[#allocation3 + $0x30] sm:$0x7]
      %v2002 = vld [vmem:[#allocation3 + $0x38] sm:$0x7]
      %v2003 = vpack.c.bf16 %v1999, %v1995
      %v2004 = vpack.c.bf16 %v2000, %v1996
      %v2005 = vpack.c.bf16 %v2001, %v1997
      %v2006 = vpack.c.bf16 %v2002, %v1998
      %v2007 = vld [vmem:[%s9] sm:$0xff]
      %v2008 = vld [vmem:[%s9 + $0x8] sm:$0xff]
      %v2009 = vld [vmem:[%s9 + $0x10] sm:$0xff]
      %v2010 = vld [vmem:[%s9 + $0x18] sm:$0xff]
      %v2011 = vld [vmem:[%s9 + $0x20] sm:$0xff]
      %v2012 = vld [vmem:[%s9 + $0x28] sm:$0xff]
      %v2013 = vld [vmem:[%s9 + $0x30] sm:$0xff]
      %v2014 = vld [vmem:[%s9 + $0x38] sm:$0xff]
      %v2015 = vld [vmem:[%s9 + $0x40] sm:$0xff]
      %v2016 = vld [vmem:[%s9 + $0x48] sm:$0xff]
      %v2017 = vld [vmem:[%s9 + $0x50] sm:$0xff]
      %v2018 = vld [vmem:[%s9 + $0x58] sm:$0xff]
      %v2019 = vld [vmem:[%s9 + $0x60] sm:$0xff]
      %v2020 = vld [vmem:[%s9 + $0x68] sm:$0xff]
      %v2021 = vld [vmem:[%s9 + $0x70] sm:$0xff]
      %v2022 = vld [vmem:[%s9 + $0x78] sm:$0xff]
      %v2023 = vld [vmem:[%s9 + $0x80] sm:$0xff]
      %v2024 = vld [vmem:[%s9 + $0x88] sm:$0xff]
      %v2025 = vld [vmem:[%s9 + $0x90] sm:$0xff]
      %v2026 = vld [vmem:[%s9 + $0x98] sm:$0xff]
      %v2027 = vld [vmem:[%s9 + $0xa0] sm:$0xff]
      %v2028 = vld [vmem:[%s9 + $0xa8] sm:$0xff]
      %v2029 = vld [vmem:[%s9 + $0xb0] sm:$0xff]
      %v2030 = vld [vmem:[%s9 + $0xb8] sm:$0xff]
      %v2031 = vld [vmem:[%s9 + $0xc0] sm:$0xff]
      %v2032 = vld [vmem:[%s9 + $0xc8] sm:$0xff]
      %v2033 = vld [vmem:[%s9 + $0xd0] sm:$0xff]
      %v2034 = vld [vmem:[%s9 + $0xd8] sm:$0xff]
      %v2035 = vld [vmem:[%s9 + $0xe0] sm:$0xff]
      %v2036 = vld [vmem:[%s9 + $0xe8] sm:$0xff]
      %v2037 = vld [vmem:[%s9 + $0xf0] sm:$0xff]
      %v2038 = vld [vmem:[%s9 + $0xf8] sm:$0xff]
      %v2039 = vld [vmem:[%s9 + $0x100] sm:$0xff]
      %v2040 = vld [vmem:[%s9 + $0x108] sm:$0xff]
      %v2041 = vld [vmem:[%s9 + $0x110] sm:$0xff]
      %v2042 = vld [vmem:[%s9 + $0x118] sm:$0xff]
      %v2043 = vld [vmem:[%s9 + $0x120] sm:$0xff]
      %v2044 = vld [vmem:[%s9 + $0x128] sm:$0xff]
      %v2045 = vld [vmem:[%s9 + $0x130] sm:$0xff]
      %v2046 = vld [vmem:[%s9 + $0x138] sm:$0xff]
      %v2047 = vld [vmem:[%s9 + $0x140] sm:$0xff]
      %v2048 = vld [vmem:[%s9 + $0x148] sm:$0xff]
      %v2049 = vld [vmem:[%s9 + $0x150] sm:$0xff]
      %v2050 = vld [vmem:[%s9 + $0x158] sm:$0xff]
      %v2051 = vld [vmem:[%s9 + $0x160] sm:$0xff]
      %v2052 = vld [vmem:[%s9 + $0x168] sm:$0xff]
      %v2053 = vld [vmem:[%s9 + $0x170] sm:$0xff]
      %v2054 = vld [vmem:[%s9 + $0x178] sm:$0xff]
      %v2055 = vld [vmem:[%s9 + $0x180] sm:$0xff]
      %v2056 = vld [vmem:[%s9 + $0x188] sm:$0xff]
      %v2057 = vld [vmem:[%s9 + $0x190] sm:$0xff]
      %v2058 = vld [vmem:[%s9 + $0x198] sm:$0xff]
      %v2059 = vld [vmem:[%s9 + $0x1a0] sm:$0xff]
      %v2060 = vld [vmem:[%s9 + $0x1a8] sm:$0xff]
      %v2061 = vld [vmem:[%s9 + $0x1b0] sm:$0xff]
      %v2062 = vld [vmem:[%s9 + $0x1b8] sm:$0xff]
      %v2063 = vld [vmem:[%s9 + $0x1c0] sm:$0xff]
      %v2064 = vld [vmem:[%s9 + $0x1c8] sm:$0xff]
      %v2065 = vld [vmem:[%s9 + $0x1d0] sm:$0xff]
      %v2066 = vld [vmem:[%s9 + $0x1d8] sm:$0xff]
      %v2067 = vld [vmem:[%s9 + $0x1e0] sm:$0xff]
      %v2068 = vld [vmem:[%s9 + $0x1e8] sm:$0xff]
      %v2069 = vld [vmem:[%s9 + $0x1f0] sm:$0xff]
      %v2070 = vld [vmem:[%s9 + $0x1f8] sm:$0xff]
      %v2071 = vld [vmem:[%s9 + $0x200] sm:$0xff]
      %v2072 = vld [vmem:[%s9 + $0x208] sm:$0xff]
      %v2073 = vld [vmem:[%s9 + $0x210] sm:$0xff]
      %v2074 = vld [vmem:[%s9 + $0x218] sm:$0xff]
      %v2075 = vld [vmem:[%s9 + $0x220] sm:$0xff]
      %v2076 = vld [vmem:[%s9 + $0x228] sm:$0xff]
      %v2077 = vld [vmem:[%s9 + $0x230] sm:$0xff]
      %v2078 = vld [vmem:[%s9 + $0x238] sm:$0xff]
      %v2079 = vld [vmem:[%s9 + $0x240] sm:$0xff]
      %v2080 = vld [vmem:[%s9 + $0x248] sm:$0xff]
      %v2081 = vld [vmem:[%s9 + $0x250] sm:$0xff]
      %v2082 = vld [vmem:[%s9 + $0x258] sm:$0xff]
      %v2083 = vld [vmem:[%s9 + $0x260] sm:$0xff]
      %v2084 = vld [vmem:[%s9 + $0x268] sm:$0xff]
      %v2085 = vld [vmem:[%s9 + $0x270] sm:$0xff]
      %v2086 = vld [vmem:[%s9 + $0x278] sm:$0xff]
      %v2087 = vld [vmem:[%s9 + $0x280] sm:$0xff]
      %v2088 = vld [vmem:[%s9 + $0x288] sm:$0xff]
      %v2089 = vld [vmem:[%s9 + $0x290] sm:$0xff]
      %v2090 = vld [vmem:[%s9 + $0x298] sm:$0xff]
      %v2091 = vld [vmem:[%s9 + $0x2a0] sm:$0xff]
      %v2092 = vld [vmem:[%s9 + $0x2a8] sm:$0xff]
      %v2093 = vld [vmem:[%s9 + $0x2b0] sm:$0xff]
      %v2094 = vld [vmem:[%s9 + $0x2b8] sm:$0xff]
      %v2095 = vld [vmem:[%s9 + $0x2c0] sm:$0xff]
      %v2096 = vld [vmem:[%s9 + $0x2c8] sm:$0xff]
      %v2097 = vld [vmem:[%s9 + $0x2d0] sm:$0xff]
      %v2098 = vld [vmem:[%s9 + $0x2d8] sm:$0xff]
      %v2099 = vld [vmem:[%s9 + $0x2e0] sm:$0xff]
      %v2100 = vld [vmem:[%s9 + $0x2e8] sm:$0xff]
      %v2101 = vld [vmem:[%s9 + $0x2f0] sm:$0xff]
      %v2102 = vld [vmem:[%s9 + $0x2f8] sm:$0xff]
      %v2103 = vld [vmem:[%s9 + $0x300] sm:$0xff]
      %v2104 = vld [vmem:[%s9 + $0x308] sm:$0xff]
      %v2105 = vld [vmem:[%s9 + $0x310] sm:$0xff]
      %v2106 = vld [vmem:[%s9 + $0x318] sm:$0xff]
      %v2107 = vld [vmem:[%s9 + $0x320] sm:$0xff]
      %v2108 = vld [vmem:[%s9 + $0x328] sm:$0xff]
      %v2109 = vld [vmem:[%s9 + $0x330] sm:$0xff]
      %v2110 = vld [vmem:[%s9 + $0x338] sm:$0xff]
      %v2111 = vld [vmem:[%s9 + $0x340] sm:$0xff]
      %v2112 = vld [vmem:[%s9 + $0x348] sm:$0xff]
      %v2113 = vld [vmem:[%s9 + $0x350] sm:$0xff]
      %v2114 = vld [vmem:[%s9 + $0x358] sm:$0xff]
      %v2115 = vld [vmem:[%s9 + $0x360] sm:$0xff]
      %v2116 = vld [vmem:[%s9 + $0x368] sm:$0xff]
      %v2117 = vld [vmem:[%s9 + $0x370] sm:$0xff]
      %v2118 = vld [vmem:[%s9 + $0x378] sm:$0xff]
      %v2119 = vld [vmem:[%s9 + $0x380] sm:$0xff]
      %v2120 = vld [vmem:[%s9 + $0x388] sm:$0xff]
      %v2121 = vld [vmem:[%s9 + $0x390] sm:$0xff]
      %v2122 = vld [vmem:[%s9 + $0x398] sm:$0xff]
      %v2123 = vld [vmem:[%s9 + $0x3a0] sm:$0xff]
      %v2124 = vld [vmem:[%s9 + $0x3a8] sm:$0xff]
      %v2125 = vld [vmem:[%s9 + $0x3b0] sm:$0xff]
      %v2126 = vld [vmem:[%s9 + $0x3b8] sm:$0xff]
      %v2127 = vld [vmem:[%s9 + $0x3c0] sm:$0xff]
      %v2128 = vld [vmem:[%s9 + $0x3c8] sm:$0xff]
      %v2129 = vld [vmem:[%s9 + $0x3d0] sm:$0xff]
      %v2130 = vld [vmem:[%s9 + $0x3d8] sm:$0xff]
      %v2131 = vld [vmem:[%s9 + $0x3e0] sm:$0xff]
      %v2132 = vld [vmem:[%s9 + $0x3e8] sm:$0xff]
      %v2133 = vld [vmem:[%s9 + $0x3f0] sm:$0xff]
      %v2134 = vld [vmem:[%s9 + $0x3f8] sm:$0xff]
      %v2135 = vld [vmem:[%s10] sm:$0xf]
      %v2137 = vperm.slane %v2135, 0
      %v2138 = vperm.slane %v2135, 1
      %v2139 = vperm.slane %v2135, 2
      %v2140 = vperm.slane %v2135, 3
      %v2273 = vunpack.c.l.b16 %v2007
      %v2274 = vunpack.c.h.b16 %v2007
      %v2275 = vunpack.c.l.b16 %v2008
      %v2276 = vunpack.c.h.b16 %v2008
      %v2277 = vunpack.c.l.b16 %v2009
      %v2278 = vunpack.c.h.b16 %v2009
      %v2279 = vunpack.c.l.b16 %v2010
      %v2280 = vunpack.c.h.b16 %v2010
      %v2281 = vunpack.c.l.b16 %v2011
      %v2282 = vunpack.c.h.b16 %v2011
      %v2283 = vunpack.c.l.b16 %v2012
      %v2284 = vunpack.c.h.b16 %v2012
      %v2285 = vunpack.c.l.b16 %v2013
      %v2286 = vunpack.c.h.b16 %v2013
      %v2287 = vunpack.c.l.b16 %v2014
      %v2288 = vunpack.c.h.b16 %v2014
      %v2289 = vunpack.c.l.b16 %v2015
      %v2290 = vunpack.c.h.b16 %v2015
      %v2291 = vunpack.c.l.b16 %v2016
      %v2292 = vunpack.c.h.b16 %v2016
      %v2293 = vunpack.c.l.b16 %v2017
      %v2294 = vunpack.c.h.b16 %v2017
      %v2295 = vunpack.c.l.b16 %v2018
      %v2296 = vunpack.c.h.b16 %v2018
      %v2297 = vunpack.c.l.b16 %v2019
      %v2298 = vunpack.c.h.b16 %v2019
      %v2299 = vunpack.c.l.b16 %v2020
      %v2300 = vunpack.c.h.b16 %v2020
      %v2301 = vunpack.c.l.b16 %v2021
      %v2302 = vunpack.c.h.b16 %v2021
      %v2303 = vunpack.c.l.b16 %v2022
      %v2304 = vunpack.c.h.b16 %v2022
      %v2305 = vunpack.c.l.b16 %v2023
      %v2306 = vunpack.c.h.b16 %v2023
      %v2307 = vunpack.c.l.b16 %v2024
      %v2308 = vunpack.c.h.b16 %v2024
      %v2309 = vunpack.c.l.b16 %v2025
      %v2310 = vunpack.c.h.b16 %v2025
      %v2311 = vunpack.c.l.b16 %v2026
      %v2312 = vunpack.c.h.b16 %v2026
      %v2313 = vunpack.c.l.b16 %v2027
      %v2314 = vunpack.c.h.b16 %v2027
      %v2315 = vunpack.c.l.b16 %v2028
      %v2316 = vunpack.c.h.b16 %v2028
      %v2317 = vunpack.c.l.b16 %v2029
      %v2318 = vunpack.c.h.b16 %v2029
      %v2319 = vunpack.c.l.b16 %v2030
      %v2320 = vunpack.c.h.b16 %v2030
      %v2321 = vunpack.c.l.b16 %v2031
      %v2322 = vunpack.c.h.b16 %v2031
      %v2323 = vunpack.c.l.b16 %v2032
      %v2324 = vunpack.c.h.b16 %v2032
      %v2325 = vunpack.c.l.b16 %v2033
      %v2326 = vunpack.c.h.b16 %v2033
      %v2327 = vunpack.c.l.b16 %v2034
      %v2328 = vunpack.c.h.b16 %v2034
      %v2329 = vunpack.c.l.b16 %v2035
      %v2330 = vunpack.c.h.b16 %v2035
      %v2331 = vunpack.c.l.b16 %v2036
      %v2332 = vunpack.c.h.b16 %v2036
      %v2333 = vunpack.c.l.b16 %v2037
      %v2334 = vunpack.c.h.b16 %v2037
      %v2335 = vunpack.c.l.b16 %v2038
      %v2336 = vunpack.c.h.b16 %v2038
      %v2337 = vunpack.c.l.b16 %v2039
      %v2338 = vunpack.c.h.b16 %v2039
      %v2339 = vunpack.c.l.b16 %v2040
      %v2340 = vunpack.c.h.b16 %v2040
      %v2341 = vunpack.c.l.b16 %v2041
      %v2342 = vunpack.c.h.b16 %v2041
      %v2343 = vunpack.c.l.b16 %v2042
      %v2344 = vunpack.c.h.b16 %v2042
      %v2345 = vunpack.c.l.b16 %v2043
      %v2346 = vunpack.c.h.b16 %v2043
      %v2347 = vunpack.c.l.b16 %v2044
      %v2348 = vunpack.c.h.b16 %v2044
      %v2349 = vunpack.c.l.b16 %v2045
      %v2350 = vunpack.c.h.b16 %v2045
      %v2351 = vunpack.c.l.b16 %v2046
      %v2352 = vunpack.c.h.b16 %v2046
      %v2353 = vunpack.c.l.b16 %v2047
      %v2354 = vunpack.c.h.b16 %v2047
      %v2355 = vunpack.c.l.b16 %v2048
      %v2356 = vunpack.c.h.b16 %v2048
      %v2357 = vunpack.c.l.b16 %v2049
      %v2358 = vunpack.c.h.b16 %v2049
      %v2359 = vunpack.c.l.b16 %v2050
      %v2360 = vunpack.c.h.b16 %v2050
      %v2361 = vunpack.c.l.b16 %v2051
      %v2362 = vunpack.c.h.b16 %v2051
      %v2363 = vunpack.c.l.b16 %v2052
      %v2364 = vunpack.c.h.b16 %v2052
      %v2365 = vunpack.c.l.b16 %v2053
      %v2366 = vunpack.c.h.b16 %v2053
      %v2367 = vunpack.c.l.b16 %v2054
      %v2368 = vunpack.c.h.b16 %v2054
      %v2369 = vunpack.c.l.b16 %v2055
      %v2370 = vunpack.c.h.b16 %v2055
      %v2371 = vunpack.c.l.b16 %v2056
      %v2372 = vunpack.c.h.b16 %v2056
      %v2373 = vunpack.c.l.b16 %v2057
      %v2374 = vunpack.c.h.b16 %v2057
      %v2375 = vunpack.c.l.b16 %v2058
      %v2376 = vunpack.c.h.b16 %v2058
      %v2377 = vunpack.c.l.b16 %v2059
      %v2378 = vunpack.c.h.b16 %v2059
      %v2379 = vunpack.c.l.b16 %v2060
      %v2380 = vunpack.c.h.b16 %v2060
      %v2381 = vunpack.c.l.b16 %v2061
      %v2382 = vunpack.c.h.b16 %v2061
      %v2383 = vunpack.c.l.b16 %v2062
      %v2384 = vunpack.c.h.b16 %v2062
      %v2385 = vunpack.c.l.b16 %v2063
      %v2386 = vunpack.c.h.b16 %v2063
      %v2387 = vunpack.c.l.b16 %v2064
      %v2388 = vunpack.c.h.b16 %v2064
      %v2389 = vunpack.c.l.b16 %v2065
      %v2390 = vunpack.c.h.b16 %v2065
      %v2391 = vunpack.c.l.b16 %v2066
      %v2392 = vunpack.c.h.b16 %v2066
      %v2393 = vunpack.c.l.b16 %v2067
      %v2394 = vunpack.c.h.b16 %v2067
      %v2395 = vunpack.c.l.b16 %v2068
      %v2396 = vunpack.c.h.b16 %v2068
      %v2397 = vunpack.c.l.b16 %v2069
      %v2398 = vunpack.c.h.b16 %v2069
      %v2399 = vunpack.c.l.b16 %v2070
      %v2400 = vunpack.c.h.b16 %v2070
      %v2401 = vunpack.c.l.b16 %v2071
      %v2402 = vunpack.c.h.b16 %v2071
      %v2403 = vunpack.c.l.b16 %v2072
      %v2404 = vunpack.c.h.b16 %v2072
      %v2405 = vunpack.c.l.b16 %v2073
      %v2406 = vunpack.c.h.b16 %v2073
      %v2407 = vunpack.c.l.b16 %v2074
      %v2408 = vunpack.c.h.b16 %v2074
      %v2409 = vunpack.c.l.b16 %v2075
      %v2410 = vunpack.c.h.b16 %v2075
      %v2411 = vunpack.c.l.b16 %v2076
      %v2412 = vunpack.c.h.b16 %v2076
      %v2413 = vunpack.c.l.b16 %v2077
      %v2414 = vunpack.c.h.b16 %v2077
      %v2415 = vunpack.c.l.b16 %v2078
      %v2416 = vunpack.c.h.b16 %v2078
      %v2417 = vunpack.c.l.b16 %v2079
      %v2418 = vunpack.c.h.b16 %v2079
      %v2419 = vunpack.c.l.b16 %v2080
      %v2420 = vunpack.c.h.b16 %v2080
      %v2421 = vunpack.c.l.b16 %v2081
      %v2422 = vunpack.c.h.b16 %v2081
      %v2423 = vunpack.c.l.b16 %v2082
      %v2424 = vunpack.c.h.b16 %v2082
      %v2425 = vunpack.c.l.b16 %v2083
      %v2426 = vunpack.c.h.b16 %v2083
      %v2427 = vunpack.c.l.b16 %v2084
      %v2428 = vunpack.c.h.b16 %v2084
      %v2429 = vunpack.c.l.b16 %v2085
      %v2430 = vunpack.c.h.b16 %v2085
      %v2431 = vunpack.c.l.b16 %v2086
      %v2432 = vunpack.c.h.b16 %v2086
      %v2433 = vunpack.c.l.b16 %v2087
      %v2434 = vunpack.c.h.b16 %v2087
      %v2435 = vunpack.c.l.b16 %v2088
      %v2436 = vunpack.c.h.b16 %v2088
      %v2437 = vunpack.c.l.b16 %v2089
      %v2438 = vunpack.c.h.b16 %v2089
      %v2439 = vunpack.c.l.b16 %v2090
      %v2440 = vunpack.c.h.b16 %v2090
      %v2441 = vunpack.c.l.b16 %v2091
      %v2442 = vunpack.c.h.b16 %v2091
      %v2443 = vunpack.c.l.b16 %v2092
      %v2444 = vunpack.c.h.b16 %v2092
      %v2445 = vunpack.c.l.b16 %v2093
      %v2446 = vunpack.c.h.b16 %v2093
      %v2447 = vunpack.c.l.b16 %v2094
      %v2448 = vunpack.c.h.b16 %v2094
      %v2449 = vunpack.c.l.b16 %v2095
      %v2450 = vunpack.c.h.b16 %v2095
      %v2451 = vunpack.c.l.b16 %v2096
      %v2452 = vunpack.c.h.b16 %v2096
      %v2453 = vunpack.c.l.b16 %v2097
      %v2454 = vunpack.c.h.b16 %v2097
      %v2455 = vunpack.c.l.b16 %v2098
      %v2456 = vunpack.c.h.b16 %v2098
      %v2457 = vunpack.c.l.b16 %v2099
      %v2458 = vunpack.c.h.b16 %v2099
      %v2459 = vunpack.c.l.b16 %v2100
      %v2460 = vunpack.c.h.b16 %v2100
      %v2461 = vunpack.c.l.b16 %v2101
      %v2462 = vunpack.c.h.b16 %v2101
      %v2463 = vunpack.c.l.b16 %v2102
      %v2464 = vunpack.c.h.b16 %v2102
      %v2465 = vunpack.c.l.b16 %v2103
      %v2466 = vunpack.c.h.b16 %v2103
      %v2467 = vunpack.c.l.b16 %v2104
      %v2468 = vunpack.c.h.b16 %v2104
      %v2469 = vunpack.c.l.b16 %v2105
      %v2470 = vunpack.c.h.b16 %v2105
      %v2471 = vunpack.c.l.b16 %v2106
      %v2472 = vunpack.c.h.b16 %v2106
      %v2473 = vunpack.c.l.b16 %v2107
      %v2474 = vunpack.c.h.b16 %v2107
      %v2475 = vunpack.c.l.b16 %v2108
      %v2476 = vunpack.c.h.b16 %v2108
      %v2477 = vunpack.c.l.b16 %v2109
      %v2478 = vunpack.c.h.b16 %v2109
      %v2479 = vunpack.c.l.b16 %v2110
      %v2480 = vunpack.c.h.b16 %v2110
      %v2481 = vunpack.c.l.b16 %v2111
      %v2482 = vunpack.c.h.b16 %v2111
      %v2483 = vunpack.c.l.b16 %v2112
      %v2484 = vunpack.c.h.b16 %v2112
      %v2485 = vunpack.c.l.b16 %v2113
      %v2486 = vunpack.c.h.b16 %v2113
      %v2487 = vunpack.c.l.b16 %v2114
      %v2488 = vunpack.c.h.b16 %v2114
      %v2489 = vunpack.c.l.b16 %v2115
      %v2490 = vunpack.c.h.b16 %v2115
      %v2491 = vunpack.c.l.b16 %v2116
      %v2492 = vunpack.c.h.b16 %v2116
      %v2493 = vunpack.c.l.b16 %v2117
      %v2494 = vunpack.c.h.b16 %v2117
      %v2495 = vunpack.c.l.b16 %v2118
      %v2496 = vunpack.c.h.b16 %v2118
      %v2497 = vunpack.c.l.b16 %v2119
      %v2498 = vunpack.c.h.b16 %v2119
      %v2499 = vunpack.c.l.b16 %v2120
      %v2500 = vunpack.c.h.b16 %v2120
      %v2501 = vunpack.c.l.b16 %v2121
      %v2502 = vunpack.c.h.b16 %v2121
      %v2503 = vunpack.c.l.b16 %v2122
      %v2504 = vunpack.c.h.b16 %v2122
      %v2505 = vunpack.c.l.b16 %v2123
      %v2506 = vunpack.c.h.b16 %v2123
      %v2507 = vunpack.c.l.b16 %v2124
      %v2508 = vunpack.c.h.b16 %v2124
      %v2509 = vunpack.c.l.b16 %v2125
      %v2510 = vunpack.c.h.b16 %v2125
      %v2511 = vunpack.c.l.b16 %v2126
      %v2512 = vunpack.c.h.b16 %v2126
      %v2513 = vunpack.c.l.b16 %v2127
      %v2514 = vunpack.c.h.b16 %v2127
      %v2515 = vunpack.c.l.b16 %v2128
      %v2516 = vunpack.c.h.b16 %v2128
      %v2517 = vunpack.c.l.b16 %v2129
      %v2518 = vunpack.c.h.b16 %v2129
      %v2519 = vunpack.c.l.b16 %v2130
      %v2520 = vunpack.c.h.b16 %v2130
      %v2521 = vunpack.c.l.b16 %v2131
      %v2522 = vunpack.c.h.b16 %v2131
      %v2523 = vunpack.c.l.b16 %v2132
      %v2524 = vunpack.c.h.b16 %v2132
      %v2525 = vunpack.c.l.b16 %v2133
      %v2526 = vunpack.c.h.b16 %v2133
      %v2527 = vunpack.c.l.b16 %v2134
      %v2528 = vunpack.c.h.b16 %v2134
      %v2529 = vpack.c.b16 %v2277, %v2273
      %v2530 = vpack.c.b16 %v2278, %v2274
      %v2531 = vpack.c.b16 %v2279, %v2275
      %v2532 = vpack.c.b16 %v2280, %v2276
      %v2533 = vpack.c.b16 %v2285, %v2281
      %v2534 = vpack.c.b16 %v2286, %v2282
      %v2535 = vpack.c.b16 %v2287, %v2283
      %v2536 = vpack.c.b16 %v2288, %v2284
      %v2537 = vpack.c.b16 %v2293, %v2289
      %v2538 = vpack.c.b16 %v2294, %v2290
      %v2539 = vpack.c.b16 %v2295, %v2291
      %v2540 = vpack.c.b16 %v2296, %v2292
      %v2541 = vpack.c.b16 %v2301, %v2297
      %v2542 = vpack.c.b16 %v2302, %v2298
      %v2543 = vpack.c.b16 %v2303, %v2299
      %v2544 = vpack.c.b16 %v2304, %v2300
      %v2545 = vpack.c.b16 %v2309, %v2305
      %v2546 = vpack.c.b16 %v2310, %v2306
      %v2547 = vpack.c.b16 %v2311, %v2307
      %v2548 = vpack.c.b16 %v2312, %v2308
      %v2549 = vpack.c.b16 %v2317, %v2313
      %v2550 = vpack.c.b16 %v2318, %v2314
      %v2551 = vpack.c.b16 %v2319, %v2315
      %v2552 = vpack.c.b16 %v2320, %v2316
      %v2553 = vpack.c.b16 %v2325, %v2321
      %v2554 = vpack.c.b16 %v2326, %v2322
      %v2555 = vpack.c.b16 %v2327, %v2323
      %v2556 = vpack.c.b16 %v2328, %v2324
      %v2557 = vpack.c.b16 %v2333, %v2329
      %v2558 = vpack.c.b16 %v2334, %v2330
      %v2559 = vpack.c.b16 %v2335, %v2331
      %v2560 = vpack.c.b16 %v2336, %v2332
      %v2561 = vpack.c.b16 %v2341, %v2337
      %v2562 = vpack.c.b16 %v2342, %v2338
      %v2563 = vpack.c.b16 %v2343, %v2339
      %v2564 = vpack.c.b16 %v2344, %v2340
      %v2565 = vpack.c.b16 %v2349, %v2345
      %v2566 = vpack.c.b16 %v2350, %v2346
      %v2567 = vpack.c.b16 %v2351, %v2347
      %v2568 = vpack.c.b16 %v2352, %v2348
      %v2569 = vpack.c.b16 %v2357, %v2353
      %v2570 = vpack.c.b16 %v2358, %v2354
      %v2571 = vpack.c.b16 %v2359, %v2355
      %v2572 = vpack.c.b16 %v2360, %v2356
      %v2573 = vpack.c.b16 %v2365, %v2361
      %v2574 = vpack.c.b16 %v2366, %v2362
      %v2575 = vpack.c.b16 %v2367, %v2363
      %v2576 = vpack.c.b16 %v2368, %v2364
      %v2577 = vpack.c.b16 %v2373, %v2369
      %v2578 = vpack.c.b16 %v2374, %v2370
      %v2579 = vpack.c.b16 %v2375, %v2371
      %v2580 = vpack.c.b16 %v2376, %v2372
      %v2581 = vpack.c.b16 %v2381, %v2377
      %v2582 = vpack.c.b16 %v2382, %v2378
      %v2583 = vpack.c.b16 %v2383, %v2379
      %v2584 = vpack.c.b16 %v2384, %v2380
      %v2585 = vpack.c.b16 %v2389, %v2385
      %v2586 = vpack.c.b16 %v2390, %v2386
      %v2587 = vpack.c.b16 %v2391, %v2387
      %v2588 = vpack.c.b16 %v2392, %v2388
      %v2589 = vpack.c.b16 %v2397, %v2393
      %v2590 = vpack.c.b16 %v2398, %v2394
      %v2591 = vpack.c.b16 %v2399, %v2395
      %v2592 = vpack.c.b16 %v2400, %v2396
      %v2593 = vpack.c.b16 %v2405, %v2401
      %v2594 = vpack.c.b16 %v2406, %v2402
      %v2595 = vpack.c.b16 %v2407, %v2403
      %v2596 = vpack.c.b16 %v2408, %v2404
      %v2597 = vpack.c.b16 %v2413, %v2409
      %v2598 = vpack.c.b16 %v2414, %v2410
      %v2599 = vpack.c.b16 %v2415, %v2411
      %v2600 = vpack.c.b16 %v2416, %v2412
      %v2601 = vpack.c.b16 %v2421, %v2417
      %v2602 = vpack.c.b16 %v2422, %v2418
      %v2603 = vpack.c.b16 %v2423, %v2419
      %v2604 = vpack.c.b16 %v2424, %v2420
      %v2605 = vpack.c.b16 %v2429, %v2425
      %v2606 = vpack.c.b16 %v2430, %v2426
      %v2607 = vpack.c.b16 %v2431, %v2427
      %v2608 = vpack.c.b16 %v2432, %v2428
      %v2609 = vpack.c.b16 %v2437, %v2433
      %v2610 = vpack.c.b16 %v2438, %v2434
      %v2611 = vpack.c.b16 %v2439, %v2435
      %v2612 = vpack.c.b16 %v2440, %v2436
      %v2613 = vpack.c.b16 %v2445, %v2441
      %v2614 = vpack.c.b16 %v2446, %v2442
      %v2615 = vpack.c.b16 %v2447, %v2443
      %v2616 = vpack.c.b16 %v2448, %v2444
      %v2617 = vpack.c.b16 %v2453, %v2449
      %v2618 = vpack.c.b16 %v2454, %v2450
      %v2619 = vpack.c.b16 %v2455, %v2451
      %v2620 = vpack.c.b16 %v2456, %v2452
      %v2621 = vpack.c.b16 %v2461, %v2457
      %v2622 = vpack.c.b16 %v2462, %v2458
      %v2623 = vpack.c.b16 %v2463, %v2459
      %v2624 = vpack.c.b16 %v2464, %v2460
      %v2625 = vpack.c.b16 %v2469, %v2465
      %v2626 = vpack.c.b16 %v2470, %v2466
      %v2627 = vpack.c.b16 %v2471, %v2467
      %v2628 = vpack.c.b16 %v2472, %v2468
      %v2629 = vpack.c.b16 %v2477, %v2473
      %v2630 = vpack.c.b16 %v2478, %v2474
      %v2631 = vpack.c.b16 %v2479, %v2475
      %v2632 = vpack.c.b16 %v2480, %v2476
      %v2633 = vpack.c.b16 %v2485, %v2481
      %v2634 = vpack.c.b16 %v2486, %v2482
      %v2635 = vpack.c.b16 %v2487, %v2483
      %v2636 = vpack.c.b16 %v2488, %v2484
      %v2637 = vpack.c.b16 %v2493, %v2489
      %v2638 = vpack.c.b16 %v2494, %v2490
      %v2639 = vpack.c.b16 %v2495, %v2491
      %v2640 = vpack.c.b16 %v2496, %v2492
      %v2641 = vpack.c.b16 %v2501, %v2497
      %v2642 = vpack.c.b16 %v2502, %v2498
      %v2643 = vpack.c.b16 %v2503, %v2499
      %v2644 = vpack.c.b16 %v2504, %v2500
      %v2645 = vpack.c.b16 %v2509, %v2505
      %v2646 = vpack.c.b16 %v2510, %v2506
      %v2647 = vpack.c.b16 %v2511, %v2507
      %v2648 = vpack.c.b16 %v2512, %v2508
      %v2649 = vpack.c.b16 %v2517, %v2513
      %v2650 = vpack.c.b16 %v2518, %v2514
      %v2651 = vpack.c.b16 %v2519, %v2515
      %v2652 = vpack.c.b16 %v2520, %v2516
      %v2653 = vpack.c.b16 %v2525, %v2521
      %v2654 = vpack.c.b16 %v2526, %v2522
      %v2655 = vpack.c.b16 %v2527, %v2523
      %v2656 = vpack.c.b16 %v2528, %v2524
      %2785 = vmatpush.bf16.msra.mxu0 %v2557
      %2786 = vmatpush.bf16.msra.mxu0 %v2553
      %2787 = vmatpush.bf16.msra.mxu0 %v2549
      %2788 = vmatpush.bf16.msra.mxu0 %v2545
      %2789 = vmatpush.bf16.msra.mxu0 %v2541
      %2790 = vmatpush.bf16.msra.mxu0 %v2537
      %2791 = vmatpush.bf16.msra.mxu0 %v2533
      %2792 = vmatpush.bf16.msra.mxu0 %v2529
      %2793 = vmatmul.bf16.gmra.mxu0 %v2003
      %v2794 = vpop.f32.mrf.mxu0
      %v2795 = vadd.f32 %v2137, %v2794
      %v2796 = vpop.f32.mrf.mxu0
      %v2797 = vadd.f32 %v2137, %v2796
      %2798 = vdwg.mxu0
      %2799 = vmatpush.bf16.msra.mxu0 %v2589
      %2800 = vmatpush.bf16.msra.mxu0 %v2585
      %2801 = vmatpush.bf16.msra.mxu0 %v2581
      %2802 = vmatpush.bf16.msra.mxu0 %v2577
      %2803 = vmatpush.bf16.msra.mxu0 %v2573
      %2804 = vmatpush.bf16.msra.mxu0 %v2569
      %2805 = vmatpush.bf16.msra.mxu0 %v2565
      %2806 = vmatpush.bf16.msra.mxu0 %v2561
      %2807 = vmatmul.bf16.gmra.mxu0 %v2004
      %v2808 = vpop.f32.mrf.mxu0
      %v2809 = vadd.f32 %v2795, %v2808
      %v2810 = vpop.f32.mrf.mxu0
      %v2811 = vadd.f32 %v2797, %v2810
      %2812 = vdwg.mxu0
      %2813 = vmatpush.bf16.msra.mxu0 %v2621
      %2814 = vmatpush.bf16.msra.mxu0 %v2617
      %2815 = vmatpush.bf16.msra.mxu0 %v2613
      %2816 = vmatpush.bf16.msra.mxu0 %v2609
      %2817 = vmatpush.bf16.msra.mxu0 %v2605
      %2818 = vmatpush.bf16.msra.mxu0 %v2601
      %2819 = vmatpush.bf16.msra.mxu0 %v2597
      %2820 = vmatpush.bf16.msra.mxu0 %v2593
      %2821 = vmatmul.bf16.gmra.mxu0 %v2005
      %v2822 = vpop.f32.mrf.mxu0
      %v2823 = vadd.f32 %v2809, %v2822
      %v2824 = vpop.f32.mrf.mxu0
      %v2825 = vadd.f32 %v2811, %v2824
      %2826 = vdwg.mxu0
      %2827 = vmatpush.bf16.msra.mxu0 %v2653
      %2828 = vmatpush.bf16.msra.mxu0 %v2649
      %2829 = vmatpush.bf16.msra.mxu0 %v2645
      %2830 = vmatpush.bf16.msra.mxu0 %v2641
      %2831 = vmatpush.bf16.msra.mxu0 %v2637
      %2832 = vmatpush.bf16.msra.mxu0 %v2633
      %2833 = vmatpush.bf16.msra.mxu0 %v2629
      %2834 = vmatpush.bf16.msra.mxu0 %v2625
      %2835 = vmatmul.bf16.gmra.mxu0 %v2006
      %v2836 = vpop.f32.mrf.mxu0
      %v2837 = vadd.f32 %v2823, %v2836
      %v2838 = vpop.f32.mrf.mxu0
      %v2839 = vadd.f32 %v2825, %v2838
      %2840 = vdwg.mxu0
      %2841 = vmatpush.bf16.msra.mxu0 %v2558
      %2842 = vmatpush.bf16.msra.mxu0 %v2554
      %2843 = vmatpush.bf16.msra.mxu0 %v2550
      %2844 = vmatpush.bf16.msra.mxu0 %v2546
      %2845 = vmatpush.bf16.msra.mxu0 %v2542
      %2846 = vmatpush.bf16.msra.mxu0 %v2538
      %2847 = vmatpush.bf16.msra.mxu0 %v2534
      %2848 = vmatpush.bf16.msra.mxu0 %v2530
      %2849 = vmatmul.bf16.gmra.mxu0 %v2003
      %v2850 = vpop.f32.mrf.mxu0
      %v2851 = vadd.f32 %v2138, %v2850
      %v2852 = vpop.f32.mrf.mxu0
      %v2853 = vadd.f32 %v2138, %v2852
      %2854 = vdwg.mxu0
      %2855 = vmatpush.bf16.msra.mxu0 %v2590
      %2856 = vmatpush.bf16.msra.mxu0 %v2586
      %2857 = vmatpush.bf16.msra.mxu0 %v2582
      %2858 = vmatpush.bf16.msra.mxu0 %v2578
      %2859 = vmatpush.bf16.msra.mxu0 %v2574
      %2860 = vmatpush.bf16.msra.mxu0 %v2570
      %2861 = vmatpush.bf16.msra.mxu0 %v2566
      %2862 = vmatpush.bf16.msra.mxu0 %v2562
      %2863 = vmatmul.bf16.gmra.mxu0 %v2004
      %v2864 = vpop.f32.mrf.mxu0
      %v2865 = vadd.f32 %v2851, %v2864
      %v2866 = vpop.f32.mrf.mxu0
      %v2867 = vadd.f32 %v2853, %v2866
      %2868 = vdwg.mxu0
      %2869 = vmatpush.bf16.msra.mxu0 %v2622
      %2870 = vmatpush.bf16.msra.mxu0 %v2618
      %2871 = vmatpush.bf16.msra.mxu0 %v2614
      %2872 = vmatpush.bf16.msra.mxu0 %v2610
      %2873 = vmatpush.bf16.msra.mxu0 %v2606
      %2874 = vmatpush.bf16.msra.mxu0 %v2602
      %2875 = vmatpush.bf16.msra.mxu0 %v2598
      %2876 = vmatpush.bf16.msra.mxu0 %v2594
      %2877 = vmatmul.bf16.gmra.mxu0 %v2005
      %v2878 = vpop.f32.mrf.mxu0
      %v2879 = vadd.f32 %v2865, %v2878
      %v2880 = vpop.f32.mrf.mxu0
      %v2881 = vadd.f32 %v2867, %v2880
      %2882 = vdwg.mxu0
      %2883 = vmatpush.bf16.msra.mxu0 %v2654
      %2884 = vmatpush.bf16.msra.mxu0 %v2650
      %2885 = vmatpush.bf16.msra.mxu0 %v2646
      %2886 = vmatpush.bf16.msra.mxu0 %v2642
      %2887 = vmatpush.bf16.msra.mxu0 %v2638
      %2888 = vmatpush.bf16.msra.mxu0 %v2634
      %2889 = vmatpush.bf16.msra.mxu0 %v2630
      %2890 = vmatpush.bf16.msra.mxu0 %v2626
      %2891 = vmatmul.bf16.gmra.mxu0 %v2006
      %v2892 = vpop.f32.mrf.mxu0
      %v2893 = vadd.f32 %v2879, %v2892
      %v2894 = vpop.f32.mrf.mxu0
      %v2895 = vadd.f32 %v2881, %v2894
      %2896 = vdwg.mxu0
      %2897 = vmatpush.bf16.msra.mxu0 %v2559
      %2898 = vmatpush.bf16.msra.mxu0 %v2555
      %2899 = vmatpush.bf16.msra.mxu0 %v2551
      %2900 = vmatpush.bf16.msra.mxu0 %v2547
      %2901 = vmatpush.bf16.msra.mxu0 %v2543
      %2902 = vmatpush.bf16.msra.mxu0 %v2539
      %2903 = vmatpush.bf16.msra.mxu0 %v2535
      %2904 = vmatpush.bf16.msra.mxu0 %v2531
      %2905 = vmatmul.bf16.gmra.mxu0 %v2003
      %v2906 = vpop.f32.mrf.mxu0
      %v2907 = vadd.f32 %v2139, %v2906
      %v2908 = vpop.f32.mrf.mxu0
      %v2909 = vadd.f32 %v2139, %v2908
      %2910 = vdwg.mxu0
      %2911 = vmatpush.bf16.msra.mxu0 %v2591
      %2912 = vmatpush.bf16.msra.mxu0 %v2587
      %2913 = vmatpush.bf16.msra.mxu0 %v2583
      %2914 = vmatpush.bf16.msra.mxu0 %v2579
      %2915 = vmatpush.bf16.msra.mxu0 %v2575
      %2916 = vmatpush.bf16.msra.mxu0 %v2571
      %2917 = vmatpush.bf16.msra.mxu0 %v2567
      %2918 = vmatpush.bf16.msra.mxu0 %v2563
      %2919 = vmatmul.bf16.gmra.mxu0 %v2004
      %v2920 = vpop.f32.mrf.mxu0
      %v2921 = vadd.f32 %v2907, %v2920
      %v2922 = vpop.f32.mrf.mxu0
      %v2923 = vadd.f32 %v2909, %v2922
      %2924 = vdwg.mxu0
      %2925 = vmatpush.bf16.msra.mxu0 %v2623
      %2926 = vmatpush.bf16.msra.mxu0 %v2619
      %2927 = vmatpush.bf16.msra.mxu0 %v2615
      %2928 = vmatpush.bf16.msra.mxu0 %v2611
      %2929 = vmatpush.bf16.msra.mxu0 %v2607
      %2930 = vmatpush.bf16.msra.mxu0 %v2603
      %2931 = vmatpush.bf16.msra.mxu0 %v2599
      %2932 = vmatpush.bf16.msra.mxu0 %v2595
      %2933 = vmatmul.bf16.gmra.mxu0 %v2005
      %v2934 = vpop.f32.mrf.mxu0
      %v2935 = vadd.f32 %v2921, %v2934
      %v2936 = vpop.f32.mrf.mxu0
      %v2937 = vadd.f32 %v2923, %v2936
      %2938 = vdwg.mxu0
      %2939 = vmatpush.bf16.msra.mxu0 %v2655
      %2940 = vmatpush.bf16.msra.mxu0 %v2651
      %2941 = vmatpush.bf16.msra.mxu0 %v2647
      %2942 = vmatpush.bf16.msra.mxu0 %v2643
      %2943 = vmatpush.bf16.msra.mxu0 %v2639
      %2944 = vmatpush.bf16.msra.mxu0 %v2635
      %2945 = vmatpush.bf16.msra.mxu0 %v2631
      %2946 = vmatpush.bf16.msra.mxu0 %v2627
      %2947 = vmatmul.bf16.gmra.mxu0 %v2006
      %v2948 = vpop.f32.mrf.mxu0
      %v2949 = vadd.f32 %v2935, %v2948
      %v2950 = vpop.f32.mrf.mxu0
      %v2951 = vadd.f32 %v2937, %v2950
      %2952 = vdwg.mxu0
      %2953 = vmatpush.bf16.msra.mxu0 %v2560
      %2954 = vmatpush.bf16.msra.mxu0 %v2556
      %2955 = vmatpush.bf16.msra.mxu0 %v2552
      %2956 = vmatpush.bf16.msra.mxu0 %v2548
      %2957 = vmatpush.bf16.msra.mxu0 %v2544
      %2958 = vmatpush.bf16.msra.mxu0 %v2540
      %2959 = vmatpush.bf16.msra.mxu0 %v2536
      %2960 = vmatpush.bf16.msra.mxu0 %v2532
      %2961 = vmatmul.bf16.gmra.mxu0 %v2003
      %v2962 = vpop.f32.mrf.mxu0
      %v2963 = vadd.f32 %v2140, %v2962
      %v2964 = vpop.f32.mrf.mxu0
      %v2965 = vadd.f32 %v2140, %v2964
      %2966 = vdwg.mxu0
      %2967 = vmatpush.bf16.msra.mxu0 %v2592
      %2968 = vmatpush.bf16.msra.mxu0 %v2588
      %2969 = vmatpush.bf16.msra.mxu0 %v2584
      %2970 = vmatpush.bf16.msra.mxu0 %v2580
      %2971 = vmatpush.bf16.msra.mxu0 %v2576
      %2972 = vmatpush.bf16.msra.mxu0 %v2572
      %2973 = vmatpush.bf16.msra.mxu0 %v2568
      %2974 = vmatpush.bf16.msra.mxu0 %v2564
      %2975 = vmatmul.bf16.gmra.mxu0 %v2004
      %v2976 = vpop.f32.mrf.mxu0
      %v2977 = vadd.f32 %v2963, %v2976
      %v2978 = vpop.f32.mrf.mxu0
      %v2979 = vadd.f32 %v2965, %v2978
      %2980 = vdwg.mxu0
      %2981 = vmatpush.bf16.msra.mxu0 %v2624
      %2982 = vmatpush.bf16.msra.mxu0 %v2620
      %2983 = vmatpush.bf16.msra.mxu0 %v2616
      %2984 = vmatpush.bf16.msra.mxu0 %v2612
      %2985 = vmatpush.bf16.msra.mxu0 %v2608
      %2986 = vmatpush.bf16.msra.mxu0 %v2604
      %2987 = vmatpush.bf16.msra.mxu0 %v2600
      %2988 = vmatpush.bf16.msra.mxu0 %v2596
      %2989 = vmatmul.bf16.gmra.mxu0 %v2005
      %v2990 = vpop.f32.mrf.mxu0
      %v2991 = vadd.f32 %v2977, %v2990
      %v2992 = vpop.f32.mrf.mxu0
      %v2993 = vadd.f32 %v2979, %v2992
      %2994 = vdwg.mxu0
      %2995 = vmatpush.bf16.msra.mxu0 %v2656
      %2996 = vmatpush.bf16.msra.mxu0 %v2652
      %2997 = vmatpush.bf16.msra.mxu0 %v2648
      %2998 = vmatpush.bf16.msra.mxu0 %v2644
      %2999 = vmatpush.bf16.msra.mxu0 %v2640
      %3000 = vmatpush.bf16.msra.mxu0 %v2636
      %3001 = vmatpush.bf16.msra.mxu0 %v2632
      %3002 = vmatpush.bf16.msra.mxu0 %v2628
      %3003 = vmatmul.bf16.gmra.mxu0 %v2006
      %v3004 = vpop.f32.mrf.mxu0
      %v3005 = vadd.f32 %v2991, %v3004
      %v3006 = vpop.f32.mrf.mxu0
      %v3007 = vadd.f32 %v2993, %v3006
      %3008 = vdwg.mxu0
      %v3009 = vmax.f32 %v2837, 0.0
      %v3010 = vmax.f32 %v2893, 0.0
      %v3011 = vmax.f32 %v2949, 0.0
      %v3012 = vmax.f32 %v3005, 0.0
      %v3013 = vmax.f32 %v2839, 0.0
      %v3014 = vmax.f32 %v2895, 0.0
      %v3015 = vmax.f32 %v2951, 0.0
      %v3016 = vmax.f32 %v3007, 0.0
      %vm3017 = vcmask 1042432
      %v3018 = vsel %vm3017, %v3013, 0.0
      %v3019 = vadd.f32 %v3009, %v3018
      %v3020 = vrot.slane %v3019, 4
      %v3021 = vadd.f32 %v3019, %v3020
      %v3022 = vrot.slane %v3021, 2
      %v3023 = vadd.f32 %v3021, %v3022
      %v3024 = vrot.slane %v3023, 1
      %v3025 = vadd.f32 %v3023, %v3024
      %v3026 = vsel %vm3017, %v3014, 0.0
      %v3027 = vadd.f32 %v3010, %v3026
      %v3028 = vrot.slane %v3027, 4
      %v3029 = vadd.f32 %v3027, %v3028
      %v3030 = vrot.slane %v3029, 2
      %v3031 = vadd.f32 %v3029, %v3030
      %v3032 = vrot.slane %v3031, 1
      %v3033 = vadd.f32 %v3031, %v3032
      %v3034 = vsel %vm3017, %v3015, 0.0
      %v3035 = vadd.f32 %v3011, %v3034
      %v3036 = vrot.slane %v3035, 4
      %v3037 = vadd.f32 %v3035, %v3036
      %v3038 = vrot.slane %v3037, 2
      %v3039 = vadd.f32 %v3037, %v3038
      %v3040 = vrot.slane %v3039, 1
      %v3041 = vadd.f32 %v3039, %v3040
      %v3042 = vsel %vm3017, %v3016, 0.0
      %v3043 = vadd.f32 %v3012, %v3042
      %v3044 = vrot.slane %v3043, 4
      %v3045 = vadd.f32 %v3043, %v3044
      %v3046 = vrot.slane %v3045, 2
      %v3047 = vadd.f32 %v3045, %v3046
      %v3048 = vrot.slane %v3047, 1
      %v3049 = vadd.f32 %v3047, %v3048
      %v3050 = vrcp.pop 11.0
      %v3051 = vmul.f32 11.0, %v3050
      %v3052 = vsub.f32 1.0, %v3051
      %v3053 = vmul.f32 %v3050, %v3052
      %v3054 = vadd.f32 %v3050, %v3053
      %vm3055 = vweird.f32 %v3050
      %v3056 = vsel %vm3055, %v3050, %v3054
      %v3057 = vmul.f32 %v3025, %v3056
      %v3058 = vmul.f32 %v3033, %v3056
      %v3059 = vmul.f32 %v3041, %v3056
      %v3060 = vmul.f32 %v3049, %v3056
      %v3061 = vpack.c.bf16 %v3057, %v3057
      %v3062 = vpack.c.bf16 %v3058, %v3058
      %v3063 = vpack.c.bf16 %v3059, %v3059
      %v3064 = vpack.c.bf16 %v3060, %v3060
      %v3065 = vld [vmem:[%s11] sm:$0xff]
      %v3066 = vld [vmem:[%s11 + $0x8] sm:$0xff]
      %v3067 = vld [vmem:[%s11 + $0x10] sm:$0xff]
      %v3068 = vld [vmem:[%s11 + $0x18] sm:$0xff]
      %v3069 = vld [vmem:[%s11 + $0x20] sm:$0xff]
      %v3070 = vld [vmem:[%s11 + $0x28] sm:$0xff]
      %v3071 = vld [vmem:[%s11 + $0x30] sm:$0xff]
      %v3072 = vld [vmem:[%s11 + $0x38] sm:$0xff]
      %v3073 = vld [vmem:[%s11 + $0x40] sm:$0xff]
      %v3074 = vld [vmem:[%s11 + $0x48] sm:$0xff]
      %v3075 = vld [vmem:[%s11 + $0x50] sm:$0xff]
      %v3076 = vld [vmem:[%s11 + $0x58] sm:$0xff]
      %v3077 = vld [vmem:[%s11 + $0x60] sm:$0xff]
      %v3078 = vld [vmem:[%s11 + $0x68] sm:$0xff]
      %v3079 = vld [vmem:[%s11 + $0x70] sm:$0xff]
      %v3080 = vld [vmem:[%s11 + $0x78] sm:$0xff]
      %v3081 = vld [vmem:[%s11 + $0x80] sm:$0xff]
      %v3082 = vld [vmem:[%s11 + $0x88] sm:$0xff]
      %v3083 = vld [vmem:[%s11 + $0x90] sm:$0xff]
      %v3084 = vld [vmem:[%s11 + $0x98] sm:$0xff]
      %v3085 = vld [vmem:[%s11 + $0xa0] sm:$0xff]
      %v3086 = vld [vmem:[%s11 + $0xa8] sm:$0xff]
      %v3087 = vld [vmem:[%s11 + $0xb0] sm:$0xff]
      %v3088 = vld [vmem:[%s11 + $0xb8] sm:$0xff]
      %v3089 = vld [vmem:[%s11 + $0xc0] sm:$0xff]
      %v3090 = vld [vmem:[%s11 + $0xc8] sm:$0xff]
      %v3091 = vld [vmem:[%s11 + $0xd0] sm:$0xff]
      %v3092 = vld [vmem:[%s11 + $0xd8] sm:$0xff]
      %v3093 = vld [vmem:[%s11 + $0xe0] sm:$0xff]
      %v3094 = vld [vmem:[%s11 + $0xe8] sm:$0xff]
      %v3095 = vld [vmem:[%s11 + $0xf0] sm:$0xff]
      %v3096 = vld [vmem:[%s11 + $0xf8] sm:$0xff]
      %v3097 = vld [vmem:[%s11 + $0x100] sm:$0xff]
      %v3098 = vld [vmem:[%s11 + $0x108] sm:$0xff]
      %v3099 = vld [vmem:[%s11 + $0x110] sm:$0xff]
      %v3100 = vld [vmem:[%s11 + $0x118] sm:$0xff]
      %v3101 = vld [vmem:[%s11 + $0x120] sm:$0xff]
      %v3102 = vld [vmem:[%s11 + $0x128] sm:$0xff]
      %v3103 = vld [vmem:[%s11 + $0x130] sm:$0xff]
      %v3104 = vld [vmem:[%s11 + $0x138] sm:$0xff]
      %v3105 = vld [vmem:[%s11 + $0x140] sm:$0xff]
      %v3106 = vld [vmem:[%s11 + $0x148] sm:$0xff]
      %v3107 = vld [vmem:[%s11 + $0x150] sm:$0xff]
      %v3108 = vld [vmem:[%s11 + $0x158] sm:$0xff]
      %v3109 = vld [vmem:[%s11 + $0x160] sm:$0xff]
      %v3110 = vld [vmem:[%s11 + $0x168] sm:$0xff]
      %v3111 = vld [vmem:[%s11 + $0x170] sm:$0xff]
      %v3112 = vld [vmem:[%s11 + $0x178] sm:$0xff]
      %v3113 = vld [vmem:[%s11 + $0x180] sm:$0xff]
      %v3114 = vld [vmem:[%s11 + $0x188] sm:$0xff]
      %v3115 = vld [vmem:[%s11 + $0x190] sm:$0xff]
      %v3116 = vld [vmem:[%s11 + $0x198] sm:$0xff]
      %v3117 = vld [vmem:[%s11 + $0x1a0] sm:$0xff]
      %v3118 = vld [vmem:[%s11 + $0x1a8] sm:$0xff]
      %v3119 = vld [vmem:[%s11 + $0x1b0] sm:$0xff]
      %v3120 = vld [vmem:[%s11 + $0x1b8] sm:$0xff]
      %v3121 = vld [vmem:[%s11 + $0x1c0] sm:$0xff]
      %v3122 = vld [vmem:[%s11 + $0x1c8] sm:$0xff]
      %v3123 = vld [vmem:[%s11 + $0x1d0] sm:$0xff]
      %v3124 = vld [vmem:[%s11 + $0x1d8] sm:$0xff]
      %v3125 = vld [vmem:[%s11 + $0x1e0] sm:$0xff]
      %v3126 = vld [vmem:[%s11 + $0x1e8] sm:$0xff]
      %v3127 = vld [vmem:[%s11 + $0x1f0] sm:$0xff]
      %v3128 = vld [vmem:[%s11 + $0x1f8] sm:$0xff]
      %v3129 = vld [vmem:[%s12] sm:$0x3]
      %v3194 = vunpack.c.l.b16 %v3065
      %v3195 = vunpack.c.h.b16 %v3065
      %v3196 = vunpack.c.l.b16 %v3066
      %v3197 = vunpack.c.h.b16 %v3066
      %v3198 = vunpack.c.l.b16 %v3067
      %v3199 = vunpack.c.h.b16 %v3067
      %v3200 = vunpack.c.l.b16 %v3068
      %v3201 = vunpack.c.h.b16 %v3068
      %v3202 = vunpack.c.l.b16 %v3069
      %v3203 = vunpack.c.h.b16 %v3069
      %v3204 = vunpack.c.l.b16 %v3070
      %v3205 = vunpack.c.h.b16 %v3070
      %v3206 = vunpack.c.l.b16 %v3071
      %v3207 = vunpack.c.h.b16 %v3071
      %v3208 = vunpack.c.l.b16 %v3072
      %v3209 = vunpack.c.h.b16 %v3072
      %v3210 = vunpack.c.l.b16 %v3073
      %v3211 = vunpack.c.h.b16 %v3073
      %v3212 = vunpack.c.l.b16 %v3074
      %v3213 = vunpack.c.h.b16 %v3074
      %v3214 = vunpack.c.l.b16 %v3075
      %v3215 = vunpack.c.h.b16 %v3075
      %v3216 = vunpack.c.l.b16 %v3076
      %v3217 = vunpack.c.h.b16 %v3076
      %v3218 = vunpack.c.l.b16 %v3077
      %v3219 = vunpack.c.h.b16 %v3077
      %v3220 = vunpack.c.l.b16 %v3078
      %v3221 = vunpack.c.h.b16 %v3078
      %v3222 = vunpack.c.l.b16 %v3079
      %v3223 = vunpack.c.h.b16 %v3079
      %v3224 = vunpack.c.l.b16 %v3080
      %v3225 = vunpack.c.h.b16 %v3080
      %v3226 = vunpack.c.l.b16 %v3081
      %v3227 = vunpack.c.h.b16 %v3081
      %v3228 = vunpack.c.l.b16 %v3082
      %v3229 = vunpack.c.h.b16 %v3082
      %v3230 = vunpack.c.l.b16 %v3083
      %v3231 = vunpack.c.h.b16 %v3083
      %v3232 = vunpack.c.l.b16 %v3084
      %v3233 = vunpack.c.h.b16 %v3084
      %v3234 = vunpack.c.l.b16 %v3085
      %v3235 = vunpack.c.h.b16 %v3085
      %v3236 = vunpack.c.l.b16 %v3086
      %v3237 = vunpack.c.h.b16 %v3086
      %v3238 = vunpack.c.l.b16 %v3087
      %v3239 = vunpack.c.h.b16 %v3087
      %v3240 = vunpack.c.l.b16 %v3088
      %v3241 = vunpack.c.h.b16 %v3088
      %v3242 = vunpack.c.l.b16 %v3089
      %v3243 = vunpack.c.h.b16 %v3089
      %v3244 = vunpack.c.l.b16 %v3090
      %v3245 = vunpack.c.h.b16 %v3090
      %v3246 = vunpack.c.l.b16 %v3091
      %v3247 = vunpack.c.h.b16 %v3091
      %v3248 = vunpack.c.l.b16 %v3092
      %v3249 = vunpack.c.h.b16 %v3092
      %v3250 = vunpack.c.l.b16 %v3093
      %v3251 = vunpack.c.h.b16 %v3093
      %v3252 = vunpack.c.l.b16 %v3094
      %v3253 = vunpack.c.h.b16 %v3094
      %v3254 = vunpack.c.l.b16 %v3095
      %v3255 = vunpack.c.h.b16 %v3095
      %v3256 = vunpack.c.l.b16 %v3096
      %v3257 = vunpack.c.h.b16 %v3096
      %v3258 = vunpack.c.l.b16 %v3097
      %v3259 = vunpack.c.h.b16 %v3097
      %v3260 = vunpack.c.l.b16 %v3098
      %v3261 = vunpack.c.h.b16 %v3098
      %v3262 = vunpack.c.l.b16 %v3099
      %v3263 = vunpack.c.h.b16 %v3099
      %v3264 = vunpack.c.l.b16 %v3100
      %v3265 = vunpack.c.h.b16 %v3100
      %v3266 = vunpack.c.l.b16 %v3101
      %v3267 = vunpack.c.h.b16 %v3101
      %v3268 = vunpack.c.l.b16 %v3102
      %v3269 = vunpack.c.h.b16 %v3102
      %v3270 = vunpack.c.l.b16 %v3103
      %v3271 = vunpack.c.h.b16 %v3103
      %v3272 = vunpack.c.l.b16 %v3104
      %v3273 = vunpack.c.h.b16 %v3104
      %v3274 = vunpack.c.l.b16 %v3105
      %v3275 = vunpack.c.h.b16 %v3105
      %v3276 = vunpack.c.l.b16 %v3106
      %v3277 = vunpack.c.h.b16 %v3106
      %v3278 = vunpack.c.l.b16 %v3107
      %v3279 = vunpack.c.h.b16 %v3107
      %v3280 = vunpack.c.l.b16 %v3108
      %v3281 = vunpack.c.h.b16 %v3108
      %v3282 = vunpack.c.l.b16 %v3109
      %v3283 = vunpack.c.h.b16 %v3109
      %v3284 = vunpack.c.l.b16 %v3110
      %v3285 = vunpack.c.h.b16 %v3110
      %v3286 = vunpack.c.l.b16 %v3111
      %v3287 = vunpack.c.h.b16 %v3111
      %v3288 = vunpack.c.l.b16 %v3112
      %v3289 = vunpack.c.h.b16 %v3112
      %v3290 = vunpack.c.l.b16 %v3113
      %v3291 = vunpack.c.h.b16 %v3113
      %v3292 = vunpack.c.l.b16 %v3114
      %v3293 = vunpack.c.h.b16 %v3114
      %v3294 = vunpack.c.l.b16 %v3115
      %v3295 = vunpack.c.h.b16 %v3115
      %v3296 = vunpack.c.l.b16 %v3116
      %v3297 = vunpack.c.h.b16 %v3116
      %v3298 = vunpack.c.l.b16 %v3117
      %v3299 = vunpack.c.h.b16 %v3117
      %v3300 = vunpack.c.l.b16 %v3118
      %v3301 = vunpack.c.h.b16 %v3118
      %v3302 = vunpack.c.l.b16 %v3119
      %v3303 = vunpack.c.h.b16 %v3119
      %v3304 = vunpack.c.l.b16 %v3120
      %v3305 = vunpack.c.h.b16 %v3120
      %v3306 = vunpack.c.l.b16 %v3121
      %v3307 = vunpack.c.h.b16 %v3121
      %v3308 = vunpack.c.l.b16 %v3122
      %v3309 = vunpack.c.h.b16 %v3122
      %v3310 = vunpack.c.l.b16 %v3123
      %v3311 = vunpack.c.h.b16 %v3123
      %v3312 = vunpack.c.l.b16 %v3124
      %v3313 = vunpack.c.h.b16 %v3124
      %v3314 = vunpack.c.l.b16 %v3125
      %v3315 = vunpack.c.h.b16 %v3125
      %v3316 = vunpack.c.l.b16 %v3126
      %v3317 = vunpack.c.h.b16 %v3126
      %v3318 = vunpack.c.l.b16 %v3127
      %v3319 = vunpack.c.h.b16 %v3127
      %v3320 = vunpack.c.l.b16 %v3128
      %v3321 = vunpack.c.h.b16 %v3128
      %v3322 = vpack.c.b16 %v3196, %v3194
      %v3323 = vpack.c.b16 %v3197, %v3195
      %v3324 = vpack.c.b16 %v3200, %v3198
      %v3325 = vpack.c.b16 %v3201, %v3199
      %v3326 = vpack.c.b16 %v3204, %v3202
      %v3327 = vpack.c.b16 %v3205, %v3203
      %v3328 = vpack.c.b16 %v3208, %v3206
      %v3329 = vpack.c.b16 %v3209, %v3207
      %v3330 = vpack.c.b16 %v3212, %v3210
      %v3331 = vpack.c.b16 %v3213, %v3211
      %v3332 = vpack.c.b16 %v3216, %v3214
      %v3333 = vpack.c.b16 %v3217, %v3215
      %v3334 = vpack.c.b16 %v3220, %v3218
      %v3335 = vpack.c.b16 %v3221, %v3219
      %v3336 = vpack.c.b16 %v3224, %v3222
      %v3337 = vpack.c.b16 %v3225, %v3223
      %v3338 = vpack.c.b16 %v3228, %v3226
      %v3339 = vpack.c.b16 %v3229, %v3227
      %v3340 = vpack.c.b16 %v3232, %v3230
      %v3341 = vpack.c.b16 %v3233, %v3231
      %v3342 = vpack.c.b16 %v3236, %v3234
      %v3343 = vpack.c.b16 %v3237, %v3235
      %v3344 = vpack.c.b16 %v3240, %v3238
      %v3345 = vpack.c.b16 %v3241, %v3239
      %v3346 = vpack.c.b16 %v3244, %v3242
      %v3347 = vpack.c.b16 %v3245, %v3243
      %v3348 = vpack.c.b16 %v3248, %v3246
      %v3349 = vpack.c.b16 %v3249, %v3247
      %v3350 = vpack.c.b16 %v3252, %v3250
      %v3351 = vpack.c.b16 %v3253, %v3251
      %v3352 = vpack.c.b16 %v3256, %v3254
      %v3353 = vpack.c.b16 %v3257, %v3255
      %v3354 = vpack.c.b16 %v3260, %v3258
      %v3355 = vpack.c.b16 %v3261, %v3259
      %v3356 = vpack.c.b16 %v3264, %v3262
      %v3357 = vpack.c.b16 %v3265, %v3263
      %v3358 = vpack.c.b16 %v3268, %v3266
      %v3359 = vpack.c.b16 %v3269, %v3267
      %v3360 = vpack.c.b16 %v3272, %v3270
      %v3361 = vpack.c.b16 %v3273, %v3271
      %v3362 = vpack.c.b16 %v3276, %v3274
      %v3363 = vpack.c.b16 %v3277, %v3275
      %v3364 = vpack.c.b16 %v3280, %v3278
      %v3365 = vpack.c.b16 %v3281, %v3279
      %v3366 = vpack.c.b16 %v3284, %v3282
      %v3367 = vpack.c.b16 %v3285, %v3283
      %v3368 = vpack.c.b16 %v3288, %v3286
      %v3369 = vpack.c.b16 %v3289, %v3287
      %v3370 = vpack.c.b16 %v3292, %v3290
      %v3371 = vpack.c.b16 %v3293, %v3291
      %v3372 = vpack.c.b16 %v3296, %v3294
      %v3373 = vpack.c.b16 %v3297, %v3295
      %v3374 = vpack.c.b16 %v3300, %v3298
      %v3375 = vpack.c.b16 %v3301, %v3299
      %v3376 = vpack.c.b16 %v3304, %v3302
      %v3377 = vpack.c.b16 %v3305, %v3303
      %v3378 = vpack.c.b16 %v3308, %v3306
      %v3379 = vpack.c.b16 %v3309, %v3307
      %v3380 = vpack.c.b16 %v3312, %v3310
      %v3381 = vpack.c.b16 %v3313, %v3311
      %v3382 = vpack.c.b16 %v3316, %v3314
      %v3383 = vpack.c.b16 %v3317, %v3315
      %v3384 = vpack.c.b16 %v3320, %v3318
      %v3385 = vpack.c.b16 %v3321, %v3319
      %v3451 = vperm.slane %v3129, 0
      %v3452 = vperm.slane %v3129, 1
      %3455 = vmatpush.bf16.msra.mxu0 %v3336
      %3456 = vmatpush.bf16.msra.mxu0 %v3334
      %3457 = vmatpush.bf16.msra.mxu0 %v3332
      %3458 = vmatpush.bf16.msra.mxu0 %v3330
      %3459 = vmatpush.bf16.msra.mxu0 %v3328
      %3460 = vmatpush.bf16.msra.mxu0 %v3326
      %3461 = vmatpush.bf16.msra.mxu0 %v3324
      %3462 = vmatpush.bf16.msra.mxu0 %v3322
      %3463 = vmatmul.bf16.gmra.mxu0 %v3061
      %v3464 = vpop.f32.mrf.mxu0
      %v3465 = vadd.f32 %v3451, %v3464
      %v3466 = vpop.f32.mrf.mxu0
      %3467 = vdwg.mxu0
      %3468 = vmatpush.bf16.msra.mxu0 %v3352
      %3469 = vmatpush.bf16.msra.mxu0 %v3350
      %3470 = vmatpush.bf16.msra.mxu0 %v3348
      %3471 = vmatpush.bf16.msra.mxu0 %v3346
      %3472 = vmatpush.bf16.msra.mxu0 %v3344
      %3473 = vmatpush.bf16.msra.mxu0 %v3342
      %3474 = vmatpush.bf16.msra.mxu0 %v3340
      %3475 = vmatpush.bf16.msra.mxu0 %v3338
      %3476 = vmatmul.bf16.gmra.mxu0 %v3062
      %v3477 = vpop.f32.mrf.mxu0
      %v3478 = vadd.f32 %v3465, %v3477
      %v3479 = vpop.f32.mrf.mxu0
      %3480 = vdwg.mxu0
      %3481 = vmatpush.bf16.msra.mxu0 %v3368
      %3482 = vmatpush.bf16.msra.mxu0 %v3366
      %3483 = vmatpush.bf16.msra.mxu0 %v3364
      %3484 = vmatpush.bf16.msra.mxu0 %v3362
      %3485 = vmatpush.bf16.msra.mxu0 %v3360
      %3486 = vmatpush.bf16.msra.mxu0 %v3358
      %3487 = vmatpush.bf16.msra.mxu0 %v3356
      %3488 = vmatpush.bf16.msra.mxu0 %v3354
      %3489 = vmatmul.bf16.gmra.mxu0 %v3063
      %v3490 = vpop.f32.mrf.mxu0
      %v3491 = vadd.f32 %v3478, %v3490
      %v3492 = vpop.f32.mrf.mxu0
      %3493 = vdwg.mxu0
      %3494 = vmatpush.bf16.msra.mxu0 %v3384
      %3495 = vmatpush.bf16.msra.mxu0 %v3382
      %3496 = vmatpush.bf16.msra.mxu0 %v3380
      %3497 = vmatpush.bf16.msra.mxu0 %v3378
      %3498 = vmatpush.bf16.msra.mxu0 %v3376
      %3499 = vmatpush.bf16.msra.mxu0 %v3374
      %3500 = vmatpush.bf16.msra.mxu0 %v3372
      %3501 = vmatpush.bf16.msra.mxu0 %v3370
      %3502 = vmatmul.bf16.gmra.mxu0 %v3064
      %v3503 = vpop.f32.mrf.mxu0
      %v3504 = vadd.f32 %v3491, %v3503
      %v3505 = vpop.f32.mrf.mxu0
      %3506 = vdwg.mxu0
      %3507 = vmatpush.bf16.msra.mxu0 %v3337
      %3508 = vmatpush.bf16.msra.mxu0 %v3335
      %3509 = vmatpush.bf16.msra.mxu0 %v3333
      %3510 = vmatpush.bf16.msra.mxu0 %v3331
      %3511 = vmatpush.bf16.msra.mxu0 %v3329
      %3512 = vmatpush.bf16.msra.mxu0 %v3327
      %3513 = vmatpush.bf16.msra.mxu0 %v3325
      %3514 = vmatpush.bf16.msra.mxu0 %v3323
      %3515 = vmatmul.bf16.gmra.mxu0 %v3061
      %v3516 = vpop.f32.mrf.mxu0
      %v3517 = vadd.f32 %v3452, %v3516
      %v3518 = vpop.f32.mrf.mxu0
      %3519 = vdwg.mxu0
      %3520 = vmatpush.bf16.msra.mxu0 %v3353
      %3521 = vmatpush.bf16.msra.mxu0 %v3351
      %3522 = vmatpush.bf16.msra.mxu0 %v3349
      %3523 = vmatpush.bf16.msra.mxu0 %v3347
      %3524 = vmatpush.bf16.msra.mxu0 %v3345
      %3525 = vmatpush.bf16.msra.mxu0 %v3343
      %3526 = vmatpush.bf16.msra.mxu0 %v3341
      %3527 = vmatpush.bf16.msra.mxu0 %v3339
      %3528 = vmatmul.bf16.gmra.mxu0 %v3062
      %v3529 = vpop.f32.mrf.mxu0
      %v3530 = vadd.f32 %v3517, %v3529
      %v3531 = vpop.f32.mrf.mxu0
      %3532 = vdwg.mxu0
      %3533 = vmatpush.bf16.msra.mxu0 %v3369
      %3534 = vmatpush.bf16.msra.mxu0 %v3367
      %3535 = vmatpush.bf16.msra.mxu0 %v3365
      %3536 = vmatpush.bf16.msra.mxu0 %v3363
      %3537 = vmatpush.bf16.msra.mxu0 %v3361
      %3538 = vmatpush.bf16.msra.mxu0 %v3359
      %3539 = vmatpush.bf16.msra.mxu0 %v3357
      %3540 = vmatpush.bf16.msra.mxu0 %v3355
      %3541 = vmatmul.bf16.gmra.mxu0 %v3063
      %v3542 = vpop.f32.mrf.mxu0
      %v3543 = vadd.f32 %v3530, %v3542
      %v3544 = vpop.f32.mrf.mxu0
      %3545 = vdwg.mxu0
      %3546 = vmatpush.bf16.msra.mxu0 %v3385
      %3547 = vmatpush.bf16.msra.mxu0 %v3383
      %3548 = vmatpush.bf16.msra.mxu0 %v3381
      %3549 = vmatpush.bf16.msra.mxu0 %v3379
      %3550 = vmatpush.bf16.msra.mxu0 %v3377
      %3551 = vmatpush.bf16.msra.mxu0 %v3375
      %3552 = vmatpush.bf16.msra.mxu0 %v3373
      %3553 = vmatpush.bf16.msra.mxu0 %v3371
      %3554 = vmatmul.bf16.gmra.mxu0 %v3064
      %v3555 = vpop.f32.mrf.mxu0
      %v3556 = vadd.f32 %v3543, %v3555
      %v3557 = vpop.f32.mrf.mxu0
      %3558 = vdwg.mxu0
      %v3561 = vrot.slane %v3556, 7
      %vm3562 = vcmask 1040384
      %v3563 = vsel %vm3562, %v3504, %v3561
      %v3565 = vlaneseq
      %vm3566 = vcmp.ge.s32.totalorder %v3565, 0
      %vm3567 = vcmp.lt.s32.totalorder %v3565, 256
      %vm3568 = vmand %vm3566, %vm3567
      %3569 = vst.msk [vmem:[%s438] sm:$0x3] %vm3568, %v3563
      %p3570 = scmp.lt.s32.totalorder %s24, 1
      %s3571 = scalar_select %p3570, %s24, 1
      %s3572 = smul.addr %s3571, 2
      %s3573 = scalar_lea.vmem %s13, %s3572
      // Predicated region
      $region73: #{face_stgcn_forward.1} parent=71 // pred_check
        %p3574 = pneg %p320
      $region74: #{face_stgcn_forward.1} parent=71 // pred_check_branch
        %3576 = sbr.rel (%p3574) target = $region76
      $region75: #{face_stgcn_forward.1} parent=71 // pred_region
        _
      $region76: #{face_stgcn_forward.1} parent=71 // pred_fallthru
        _
    $region72: #{face_stgcn_forward.1} parent=5 // pred_fallthru
      _
    %p3577 = scmp.le.s32.totalorder 2, %s19
    // Predicated region
    $region77: #{face_stgcn_forward.1} parent=5 // pred_check
      %p3578 = pneg %p3577
    $region78: #{face_stgcn_forward.1} parent=5 // pred_check_branch
      %3580 = sbr.rel (%p3578) target = $region80
    $region79: #{face_stgcn_forward.1} parent=5 // pred_region
      %s3581 = ssub.s32 %s19, 2
      // Predicated region
      $region81: #{face_stgcn_forward.1} parent=79 // pred_check
        %p3582 = pneg %p326
      $region82: #{face_stgcn_forward.1} parent=79 // pred_check_branch
        %3584 = sbr.rel (%p3582) target = $region84
      $region83: #{face_stgcn_forward.1} parent=79 // pred_region
        %p3585 = scmp.lt.s32.totalorder %s25, 1
        %s3586 = scalar_select %p3585, %s25, 1
        %s3587 = smul.addr %s3586, 2
        %s3588 = scalar_lea.vmem %s13, %s3587
      $region84: #{face_stgcn_forward.1} parent=79 // pred_fallthru
        _
    $region80: #{face_stgcn_forward.1} parent=5 // pred_fallthru
      _
  $region6: #{face_stgcn_forward.1} parent=0 // loop_footer
    %s23 = sadd.s32 1, %s19
  $region7: #{face_stgcn_forward.1} parent=0 // loop_footer_branch
    %18 = sbr.rel target = $region3
  $region8: #{face_stgcn_forward.1} parent=0 // loop_exit
    _

</llo_original>
